<compile_context>
chip_gen: v7x
topology: tpu7x:2x2x1
jax: 0.10.0
libtpu: 0.0.40
codegen_flags: <defaults>
</compile_context>

<pallas_src>
import numpy as np
import jax
import jax.numpy as jnp
from jax.experimental import pallas as pl
from jax.experimental.pallas import tpu as pltpu


# ------------------------------ host-side helpers ------------------------------

def _bilinear_matrix(out_size, in_size):
    # PyTorch F.interpolate(mode='bilinear', align_corners=False) 1-D weights.
    A = np.zeros((out_size, in_size), np.float32)
    scale = in_size / out_size
    for i in range(out_size):
        src = max((i + 0.5) * scale - 0.5, 0.0)
        i0 = min(int(np.floor(src)), in_size - 1)
        i1 = min(i0 + 1, in_size - 1)
        lam = src - i0
        A[i, i0] += 1.0 - lam
        A[i, i1] += lam
    return A


# ------------------------------ in-kernel helpers ------------------------------

def _sum11(v):
    # (R, C) -> (1, 1) keepdims reduction (stays rank-2).
    return jnp.sum(jnp.sum(v, axis=1, keepdims=True), axis=0, keepdims=True)


def _bce_from_sigmoid(x, p, t):
    # binary_cross_entropy_with_logits reusing the already computed sigmoid p:
    #   log(1 + exp(-|x|)) == -log(p)      for x >= 0
    #                      == -log(1 - p)  for x <  0
    # (the selected quantity is always >= 0.5, so the log is well conditioned).
    sat = jnp.where(x >= 0.0, p, 1.0 - p)
    return jnp.maximum(x, 0.0) - x * t - jnp.log(sat)


# ------------------------------ fused criterion kernel ------------------------------

def _make_criterion_kernel(K, U, B, Q, H, W, Hm, Wm, num_instances):
    UH = U * H
    Wp = max(((W + 127) // 128) * 128, 128)        # lane-pad erosion working set to 128
    inv_ninst = float(1.0 / num_instances)
    inv_kl = float(1.0 / (K * Hm * Wm))
    inv_bq = float(1.0 / (B * Q))
    BIG = 1.0e4                                    # kornia geodesic border value

    def kernel(fs_ref, mt_ref, *refs):             # fs/mt: scalar prefetch (SMEM)
        pm_refs = refs[0:U]                        # U gathered (1, Hm, Wm) pred masks
        pe_refs = refs[U:2 * U]                    # U gathered (1, Hm, Wm) pred edges
        tm_refs = refs[2 * U:3 * U]                # U gathered (1, H, W) target masks
        ah_ref, awt_ref, obj_ref, tobj_ref = refs[3 * U:3 * U + 4]   # grid-resident
        out_ref = refs[3 * U + 4]                  # (8, 128) lane-dense output
        (dice_m_ref, dice_e_ref, obj_acc_ref,
         bce_m_ref, bce_e_ref) = refs[3 * U + 5:]  # VMEM scratch accumulators

        k = pl.program_id(0)
        last = pl.num_programs(0) - 1

        @pl.when(k == 0)
        def _init():
            dice_m_ref[...] = jnp.zeros_like(dice_m_ref)
            dice_e_ref[...] = jnp.zeros_like(dice_e_ref)
            bce_m_ref[...] = jnp.zeros_like(bce_m_ref)
            bce_e_ref[...] = jnp.zeros_like(bce_e_ref)
            out_ref[...] = jnp.zeros_like(out_ref)
            # loss_obj once, up front, so it overlaps the pipeline rather than
            # serializing after the last grid step.
            x = obj_ref[...].astype(jnp.float32)
            t = tobj_ref[...].astype(jnp.float32)
            p = jax.nn.sigmoid(x)
            obj_acc_ref[...] = _sum11(_bce_from_sigmoid(x, p, t)) * inv_bq

        # ---- batched target edge: separable 5x5 geodesic erosion via roll + masks ----
        tgt_b = jnp.concatenate([r[0] for r in tm_refs], axis=0)      # (U*H, W) bf16
        t32 = tgt_b.astype(jnp.float32)
        if Wp > W:
            work = jnp.concatenate(
                [t32, jnp.full((UH, Wp - W), BIG, jnp.float32)], axis=1)   # (U*H, Wp)
        else:
            work = t32
        row = jax.lax.broadcasted_iota(jnp.int32, (UH, Wp), 0) % H     # per-instance row
        col = jax.lax.broadcasted_iota(jnp.int32, (UH, Wp), 1)

        rmin = work
        for d in (-2, -1, 1, 2):                   # sublane pass (instance-local rows)
            sh = pltpu.roll(work, (-d) % UH, axis=0)       # sh[i] = work[i + d]
            ok = (row + d >= 0) & (row + d < H)
            rmin = jnp.minimum(rmin, jnp.where(ok, sh, BIG))
        ero = rmin
        for d in (-2, -1, 1, 2):                   # lane pass on the 128-wide axis
            sh = pltpu.roll(rmin, (-d) % Wp, axis=1)       # sh[:, j] = rmin[:, j + d]
            ok = (col + d >= 0) & (col + d < W)
            ero = jnp.minimum(ero, jnp.where(ok, sh, BIG))
        edge32 = t32 - ero[:, :W]                  # (U*H, W), exact {0, 1}

        # ---- fused bilinear resize: batched column matmul + per-instance row matmul ----
        awt = awt_ref[...]                         # (W, Wm) bf16, resident
        ah = ah_ref[...]                           # (Hm, H) bf16, resident
        t_c = jnp.dot(tgt_b, awt, preferred_element_type=jnp.float32)            # (U*H, Wm)
        e_c = jnp.dot(edge32.astype(jnp.bfloat16), awt,
                      preferred_element_type=jnp.float32)                        # (U*H, Wm)
        t_c16 = t_c.astype(jnp.bfloat16)
        e_c16 = e_c.astype(jnp.bfloat16)

        for u in range(U):                         # static unrolled: U instances / step
            tgt_rs = jnp.dot(ah, t_c16[u * H:(u + 1) * H, :],
                             preferred_element_type=jnp.float32)                 # (Hm, Wm)
            edge_rs = jnp.dot(ah, e_c16[u * H:(u + 1) * H, :],
                              preferred_element_type=jnp.float32)                # (Hm, Wm)
            vf = ((k * U + u) < K).astype(jnp.float32)     # masks the padded tail slots

            xm = pm_refs[u][0].astype(jnp.float32)
            xe = pe_refs[u][0].astype(jnp.float32)
            pm_s = jax.nn.sigmoid(xm)
            pe_s = jax.nn.sigmoid(xe)

            # dice: per-instance ratio (reference: smoothing in denominator only),
            # summed over instances into VMEM scratch, /num_instances at finalize.
            num_m = 2.0 * _sum11(pm_s * tgt_rs)
            den_m = _sum11(pm_s * pm_s + tgt_rs * tgt_rs)
            num_e = 2.0 * _sum11(pe_s * edge_rs)
            den_e = _sum11(pe_s * pe_s + edge_rs * edge_rs)
            dice_m_ref[...] += vf * (1.0 - num_m / (den_m + 1e-4))
            dice_e_ref[...] += vf * (1.0 - num_e / (den_e + 1e-4))

            # BCE: elementwise partial sums only (VPU); cross-lane reduce at finalize.
            bce_m_ref[...] += vf * _bce_from_sigmoid(xm, pm_s, tgt_rs)
            bce_e_ref[...] += vf * _bce_from_sigmoid(xe, pe_s, edge_rs)

        @pl.when(k == last)
        def _finalize():
            md = dice_m_ref[0, 0] * inv_ninst
            ed = dice_e_ref[0, 0] * inv_ninst
            mb = _sum11(bce_m_ref[...])[0, 0] * inv_kl
            eb = _sum11(bce_e_ref[...])[0, 0] * inv_kl
            ob = obj_acc_ref[0, 0]
            r_i = jax.lax.broadcasted_iota(jnp.int32, (8, 128), 0)
            c_i = jax.lax.broadcasted_iota(jnp.int32, (8, 128), 1)
            row0 = r_i == 0
            out_ref[...] = (jnp.where(row0 & (c_i == 0), md, 0.0)
                            + jnp.where(row0 & (c_i == 1), mb, 0.0)
                            + jnp.where(row0 & (c_i == 2), ed, 0.0)
                            + jnp.where(row0 & (c_i == 3), eb, 0.0)
                            + jnp.where(row0 & (c_i == 4), ob, 0.0))

    return kernel


def criterion_losses(pred_masks, pred_edges, pred_obj, target_masks,
                     flat_src_np, mix_tgt_np, num_instances, U=4):
    B, Q, Hm, Wm = map(int, pred_masks.shape)
    N, H, W = map(int, target_masks.shape)
    K = int(flat_src_np.shape[0])

    obj2d = pred_obj.reshape(B, Q).astype(jnp.float32)

    if K == 0:
        # Reference semantics: zero masks/edges losses, obj BCE against all-zero target.
        ob = jnp.mean(jnp.maximum(obj2d, 0.0) + jnp.log1p(jnp.exp(-jnp.abs(obj2d))))
        z = jnp.float32(0.0)
        return z, z, z, z, ob

    assert (U * H) % 8 == 0, "U*H must be a multiple of 8 for the sublane-stacked erosion"

    K_pad = ((K + U - 1) // U) * U
    steps = K_pad // U

    fs = np.zeros((K_pad,), np.int32)
    fs[:K] = flat_src_np.astype(np.int32)
    mt = np.zeros((K_pad,), np.int32)
    mt[:K] = mix_tgt_np.astype(np.int32)

    # loss_obj target built host-side (trivial scatter), consumed under pl.when(k==0).
    tgt_obj = np.zeros((B * Q,), np.float32)
    tgt_obj[flat_src_np.astype(np.int64)] = 1.0
    tgt_obj = tgt_obj.reshape(B, Q)

    # bf16 inputs: halves HBM->VMEM DMA; masks are {0,1} so the cast is exact.
    pm = pred_masks.reshape(B * Q, Hm, Wm).astype(jnp.bfloat16)
    pe = pred_edges.reshape(B * Q, Hm, Wm).astype(jnp.bfloat16)
    tm = target_masks.astype(jnp.bfloat16)

    ah = jnp.asarray(_bilinear_matrix(Hm, H), dtype=jnp.bfloat16)     # (Hm, H)
    awt = jnp.asarray(_bilinear_matrix(Wm, W).T, dtype=jnp.bfloat16)  # (W, Wm)

    kernel = _make_criterion_kernel(K, U, B, Q, H, W, Hm, Wm, num_instances)

    def _src_map(u):
        return lambda k, fs_r, mt_r: (fs_r[k * U + u], 0, 0)

    def _tgt_map(u):
        return lambda k, fs_r, mt_r: (mt_r[k * U + u], 0, 0)

    def _const2(k, fs_r, mt_r):
        return (0, 0)

    in_specs = (
        [pl.BlockSpec((1, Hm, Wm), _src_map(u)) for u in range(U)]     # pred_masks[src]
        + [pl.BlockSpec((1, Hm, Wm), _src_map(u)) for u in range(U)]   # pred_edges[src]
        + [pl.BlockSpec((1, H, W), _tgt_map(u)) for u in range(U)]     # targets[mix_tgt]
        + [pl.BlockSpec((Hm, H), _const2),                             # A_h (resident)
           pl.BlockSpec((W, Wm), _const2),                             # A_w^T (resident)
           pl.BlockSpec((B, Q), _const2),                              # pred_obj
           pl.BlockSpec((B, Q), _const2)]                              # tgt_obj
    )

    grid_spec = pltpu.PrefetchScalarGridSpec(
        num_scalar_prefetch=2,
        grid=(steps,),
        in_specs=in_specs,
        out_specs=pl.BlockSpec((8, 128), _const2),
        scratch_shapes=[pltpu.VMEM((1, 1), jnp.float32),      # dice (masks)
                        pltpu.VMEM((1, 1), jnp.float32),      # dice (edges)
                        pltpu.VMEM((1, 1), jnp.float32),      # obj
                        pltpu.VMEM((Hm, Wm), jnp.float32),    # bce (masks) partials
                        pltpu.VMEM((Hm, Wm), jnp.float32)],   # bce (edges) partials
    )

    args = ([jnp.asarray(fs), jnp.asarray(mt)]
            + [pm] * U + [pe] * U + [tm] * U
            + [ah, awt, obj2d, jnp.asarray(tgt_obj)])

    out = pl.pallas_call(
        kernel,
        out_shape=jax.ShapeDtypeStruct((8, 128), jnp.float32),
        grid_spec=grid_spec,
        compiler_params=pltpu.CompilerParams(
            dimension_semantics=("arbitrary",),     # single grid axis is a reduction
            vmem_limit_bytes=32 * 1024 * 1024),
    )(*args)

    return out[0, 0], out[0, 1], out[0, 2], out[0, 3], out[0, 4]


# --------------------------------- Criterion ---------------------------------

class Criterion:
    def __init__(self):
        # cfg.MODEL.CRITERION.ITEMS stand-in.
        # TODO(synk): 'eprs' loss omitted -- external eprs_detector / pos_embed modules.
        self.losses = ['masks', 'edges', 'obj']
        # cfg.MODEL.CRITERION.*_WEIGHT stand-ins.
        self.weight_dict = {
            'loss_masks_dice': 2.0, 'loss_masks_bce': 2.0,
            'loss_edges_dice': 2.0, 'loss_edges_bce': 2.0,
            'loss_obj': 1.0, 'loss_eprs': 1.0,
        }

    @staticmethod
    def get_src_tgt_idx(indices, num_masks):
        if len(indices) == 0 or sum(len(src) for src, _ in indices) == 0:
            z = np.zeros((0,), np.int32)
            return (z, z), (z, z), z
        batch_idx = np.concatenate([np.full(len(src), i, dtype=np.int32)
                                    for i, (src, _) in enumerate(indices)])
        src_cat = np.concatenate([np.asarray(src, np.int32) for src, _ in indices])
        tgt_cat = np.concatenate([np.asarray(tgt, np.int32) for _, tgt in indices])
        mix_tgt = np.zeros_like(tgt_cat)
        cum = 0
        for nm in num_masks:
            mix_tgt[cum:cum + nm] = cum
            cum += nm
        mix_tgt = mix_tgt + tgt_cat
        return (batch_idx, src_cat), (batch_idx, tgt_cat), mix_tgt

    def forward(self, outputs, targets, indices):
        # TODO(synk): matcher is external; `indices` supplied as a deterministic input.
        num_masks = [int(t['masks'].shape[0]) for t in targets]
        # TODO(synk): distributed all_reduce / world-size division skipped (single host).
        num_instances = float(max(sum(len(t['labels']) for t in targets), 1))
        (batch_idx, src_cat), _, mix_tgt = self.get_src_tgt_idx(indices, num_masks)

        Q = outputs['pred_masks'].shape[1]
        flat_src = (batch_idx * Q + src_cat).astype(np.int32)

        # nested_masks_from_list(...).decompose() stand-in: all masks share input_shape,
        # so decomposition is a plain concat along the instance axis.
        target_masks = jnp.concatenate(
            [t['masks'] for t in targets], axis=0).astype(jnp.float32)

        md, mb, ed, eb, ob = criterion_losses(
            outputs['pred_masks'], outputs['pred_edges'], outputs['pred_obj'],
            target_masks, flat_src, mix_tgt.astype(np.int32), num_instances)

        losses = {'loss_masks_dice': md, 'loss_masks_bce': mb,
                  'loss_edges_dice': ed, 'loss_edges_bce': eb,
                  'loss_obj': ob}
        for k in list(losses.keys()):
            if k in self.weight_dict:
                losses[k] = losses[k] * self.weight_dict[k]
        return losses


# ------------------------------------ main -----------------------------------

if __name__ == "__main__":
    B, Q, Hm, Wm = 2, 8, 16, 16     # batch, queries, predicted mask resolution
    H, W = 32, 32                   # input_shape (ground-truth mask resolution)

    key = jax.random.PRNGKey(0)
    k1, k2, k3 = jax.random.split(key, 3)
    outputs = {
        'pred_masks': jax.random.normal(k1, (B, Q, Hm, Wm), jnp.float32),
        'pred_edges': jax.random.normal(k2, (B, Q, Hm, Wm), jnp.float32),
        'pred_obj':   jax.random.normal(k3, (B, Q, 1), jnp.float32),
    }

    def rect_mask(r0, r1, c0, c1):
        m = np.zeros((H, W), np.float32)
        m[r0:r1, c0:c1] = 1.0
        return m

    targets = [
        {'masks': jnp.asarray(np.stack([rect_mask(4, 20, 4, 18),
                                        rect_mask(10, 28, 12, 30)])),
         'labels': [1, 2]},
        {'masks': jnp.asarray(np.stack([rect_mask(2, 14, 2, 14),
                                        rect_mask(8, 30, 6, 22),
                                        rect_mask(16, 28, 16, 28)])),
         'labels': [3, 1, 2]},
    ]
    # Deterministic matcher output: (src query indices, tgt instance indices) per image.
    indices = [([3, 5], [0, 1]), ([1, 4, 6], [0, 2, 1])]

    crit = Criterion()
    losses = crit.forward(outputs, targets, indices)
    jax.block_until_ready(losses)
    print("KERNEL_OK")
</pallas_src>

<mosaic_0001>
module attributes {stable_mosaic.version = 11 : i64} {
  func.func @kernel(%arg0: i32, %arg1: memref<8xi32, #tpu.memory_space<smem>>, %arg2: memref<8xi32, #tpu.memory_space<smem>>, %arg3: memref<1x16x16xbf16, #tpu.memory_space<vmem>>, %arg4: memref<1x16x16xbf16, #tpu.memory_space<vmem>>, %arg5: memref<1x16x16xbf16, #tpu.memory_space<vmem>>, %arg6: memref<1x16x16xbf16, #tpu.memory_space<vmem>>, %arg7: memref<1x16x16xbf16, #tpu.memory_space<vmem>>, %arg8: memref<1x16x16xbf16, #tpu.memory_space<vmem>>, %arg9: memref<1x16x16xbf16, #tpu.memory_space<vmem>>, %arg10: memref<1x16x16xbf16, #tpu.memory_space<vmem>>, %arg11: memref<1x32x32xbf16, #tpu.memory_space<vmem>>, %arg12: memref<1x32x32xbf16, #tpu.memory_space<vmem>>, %arg13: memref<1x32x32xbf16, #tpu.memory_space<vmem>>, %arg14: memref<1x32x32xbf16, #tpu.memory_space<vmem>>, %arg15: memref<16x32xbf16, #tpu.memory_space<vmem>>, %arg16: memref<32x16xbf16, #tpu.memory_space<vmem>>, %arg17: memref<2x8xf32, #tpu.memory_space<vmem>>, %arg18: memref<2x8xf32, #tpu.memory_space<vmem>>, %arg19: memref<8x128xf32, #tpu.memory_space<vmem>>, %arg20: memref<1x1xf32, #tpu.memory_space<vmem>>, %arg21: memref<1x1xf32, #tpu.memory_space<vmem>>, %arg22: memref<1x1xf32, #tpu.memory_space<vmem>>, %arg23: memref<16x16xf32, #tpu.memory_space<vmem>>, %arg24: memref<16x16xf32, #tpu.memory_space<vmem>>) attributes {dimension_semantics = [#tpu.dimension_semantics<arbitrary>], iteration_bounds = array<i64: 2>, scalar_prefetch = 2 : i64, scratch_operands = 5 : i64, tpu.core_type = #tpu.core_type<tc>, window_params = [{transform_indices = @transform_0, window_bounds = array<i64: 1, 16, 16>}, {transform_indices = @transform_1, window_bounds = array<i64: 1, 16, 16>}, {transform_indices = @transform_2, window_bounds = array<i64: 1, 16, 16>}, {transform_indices = @transform_3, window_bounds = array<i64: 1, 16, 16>}, {transform_indices = @transform_4, window_bounds = array<i64: 1, 16, 16>}, {transform_indices = @transform_5, window_bounds = array<i64: 1, 16, 16>}, {transform_indices = @transform_6, window_bounds = array<i64: 1, 16, 16>}, {transform_indices = @transform_7, window_bounds = array<i64: 1, 16, 16>}, {transform_indices = @transform_8, window_bounds = array<i64: 1, 32, 32>}, {transform_indices = @transform_9, window_bounds = array<i64: 1, 32, 32>}, {transform_indices = @transform_10, window_bounds = array<i64: 1, 32, 32>}, {transform_indices = @transform_11, window_bounds = array<i64: 1, 32, 32>}, {pipeline_mode = #tpu.pipeline_mode<synchronous>, transform_indices = @transform_12, window_bounds = array<i64: 16, 32>}, {pipeline_mode = #tpu.pipeline_mode<synchronous>, transform_indices = @transform_13, window_bounds = array<i64: 32, 16>}, {pipeline_mode = #tpu.pipeline_mode<synchronous>, transform_indices = @transform_14, window_bounds = array<i64: 2, 8>}, {pipeline_mode = #tpu.pipeline_mode<synchronous>, transform_indices = @transform_15, window_bounds = array<i64: 2, 8>}, {pipeline_mode = #tpu.pipeline_mode<synchronous>, transform_indices = @transform_16, window_bounds = array<i64: 8, 128>}]} {
    %c0_i32 = arith.constant 0 : i32
    %0 = arith.cmpi eq, %arg0, %c0_i32 : i32
    %1 = arith.extui %0 : i1 to i32
    %c0_i32_0 = arith.constant 0 : i32
    %2 = arith.cmpi ne, %1, %c0_i32_0 : i32
    scf.if %2 {
      %cst_260 = arith.constant 0.000000e+00 : f32
      %569 = vector.broadcast %cst_260 : f32 to vector<1x1xf32>
      %c0_261 = arith.constant 0 : index
      %c0_262 = arith.constant 0 : index
      %570 = vector.load %arg20[%c0_261, %c0_262] : memref<1x1xf32, #tpu.memory_space<vmem>>, vector<1x1xf32>
      tpu.vector_store %arg20[%c0_261, %c0_262], %569 {strides = array<i32>} : memref<1x1xf32, #tpu.memory_space<vmem>>, vector<1x1xf32>,
      %cst_263 = arith.constant 0.000000e+00 : f32
      %571 = vector.broadcast %cst_263 : f32 to vector<1x1xf32>
      %c0_264 = arith.constant 0 : index
      %c0_265 = arith.constant 0 : index
      %572 = vector.load %arg21[%c0_264, %c0_265] : memref<1x1xf32, #tpu.memory_space<vmem>>, vector<1x1xf32>
      tpu.vector_store %arg21[%c0_264, %c0_265], %571 {strides = array<i32>} : memref<1x1xf32, #tpu.memory_space<vmem>>, vector<1x1xf32>,
      %cst_266 = arith.constant 0.000000e+00 : f32
      %573 = vector.broadcast %cst_266 : f32 to vector<16x16xf32>
      %c0_267 = arith.constant 0 : index
      %c0_268 = arith.constant 0 : index
      %574 = vector.load %arg23[%c0_267, %c0_268] : memref<16x16xf32, #tpu.memory_space<vmem>>, vector<16x16xf32>
      tpu.vector_store %arg23[%c0_267, %c0_268], %573 {strides = array<i32>} : memref<16x16xf32, #tpu.memory_space<vmem>>, vector<16x16xf32>,
      %cst_269 = arith.constant 0.000000e+00 : f32
      %575 = vector.broadcast %cst_269 : f32 to vector<16x16xf32>
      %c0_270 = arith.constant 0 : index
      %c0_271 = arith.constant 0 : index
      %576 = vector.load %arg24[%c0_270, %c0_271] : memref<16x16xf32, #tpu.memory_space<vmem>>, vector<16x16xf32>
      tpu.vector_store %arg24[%c0_270, %c0_271], %575 {strides = array<i32>} : memref<16x16xf32, #tpu.memory_space<vmem>>, vector<16x16xf32>,
      %cst_272 = arith.constant 0.000000e+00 : f32
      %577 = vector.broadcast %cst_272 : f32 to vector<8x128xf32>
      %c0_273 = arith.constant 0 : index
      %c0_274 = arith.constant 0 : index
      %578 = vector.load %arg19[%c0_273, %c0_274] : memref<8x128xf32, #tpu.memory_space<vmem>>, vector<8x128xf32>
      tpu.vector_store %arg19[%c0_273, %c0_274], %577 {strides = array<i32>} : memref<8x128xf32, #tpu.memory_space<vmem>>, vector<8x128xf32>,
      %c0_275 = arith.constant 0 : index
      %c0_276 = arith.constant 0 : index
      %579 = vector.load %arg17[%c0_275, %c0_276] : memref<2x8xf32, #tpu.memory_space<vmem>>, vector<2x8xf32>
      %c0_277 = arith.constant 0 : index
      %c0_278 = arith.constant 0 : index
      %580 = vector.load %arg18[%c0_277, %c0_278] : memref<2x8xf32, #tpu.memory_space<vmem>>, vector<2x8xf32>
      %581 = arith.negf %579 : vector<2x8xf32>
      %582 = math.exp %581 : vector<2x8xf32>
      %cst_279 = arith.constant 1.000000e+00 : f32
      %583 = vector.broadcast %cst_279 : f32 to vector<2x8xf32>
      %584 = arith.addf %583, %582 : vector<2x8xf32>
      %585 = arith.divf %583, %584 : vector<2x8xf32>
      %cst_280 = arith.constant 0.000000e+00 : f32
      %586 = vector.broadcast %cst_280 : f32 to vector<2x8xf32>
      %587 = arith.cmpf oge, %579, %586 : vector<2x8xf32>
      %cst_281 = arith.constant 1.000000e+00 : f32
      %588 = vector.broadcast %cst_281 : f32 to vector<2x8xf32>
      %589 = arith.subf %588, %585 : vector<2x8xf32>
      %590 = arith.select %587, %585, %589 : vector<2x8xi1>, vector<2x8xf32>
      %cst_282 = arith.constant 0.000000e+00 : f32
      %591 = vector.broadcast %cst_282 : f32 to vector<2x8xf32>
      %592 = arith.maximumf %579, %591 : vector<2x8xf32>
      %593 = arith.mulf %579, %580 : vector<2x8xf32>
      %594 = arith.subf %592, %593 : vector<2x8xf32>
      %595 = math.log %590 : vector<2x8xf32>
      %596 = arith.subf %594, %595 : vector<2x8xf32>
      %cst_283 = arith.constant dense<0.000000e+00> : vector<2xf32>
      %597 = vector.multi_reduction <add>, %596, %cst_283 [1] : vector<2x8xf32> to vector<2xf32>
      %598 = vector.shape_cast %597 : vector<2xf32> to vector<2x1xf32>
      %cst_284 = arith.constant dense<0.000000e+00> : vector<1xf32>
      %599 = vector.multi_reduction <add>, %598, %cst_284 [0] : vector<2x1xf32> to vector<1xf32>
      %600 = vector.shape_cast %599 : vector<1xf32> to vector<1x1xf32>
      %cst_285 = arith.constant 6.250000e-02 : f32
      %601 = vector.broadcast %cst_285 : f32 to vector<1x1xf32>
      %602 = arith.mulf %600, %601 : vector<1x1xf32>
      %c0_286 = arith.constant 0 : index
      %c0_287 = arith.constant 0 : index
      %603 = vector.load %arg22[%c0_286, %c0_287] : memref<1x1xf32, #tpu.memory_space<vmem>>, vector<1x1xf32>
      tpu.vector_store %arg22[%c0_286, %c0_287], %602 {strides = array<i32>} : memref<1x1xf32, #tpu.memory_space<vmem>>, vector<1x1xf32>,
    } else {
    }
    %c0 = arith.constant 0 : index
    %c0_1 = arith.constant 0 : index
    %c0_2 = arith.constant 0 : index
    %3 = vector.load %arg11[%c0, %c0_1, %c0_2] : memref<1x32x32xbf16, #tpu.memory_space<vmem>>, vector<1x32x32xbf16>
    %4 = vector.shape_cast %3 : vector<1x32x32xbf16> to vector<32x32xbf16>
    %c0_3 = arith.constant 0 : index
    %c0_4 = arith.constant 0 : index
    %c0_5 = arith.constant 0 : index
    %5 = vector.load %arg12[%c0_3, %c0_4, %c0_5] : memref<1x32x32xbf16, #tpu.memory_space<vmem>>, vector<1x32x32xbf16>
    %6 = vector.shape_cast %5 : vector<1x32x32xbf16> to vector<32x32xbf16>
    %c0_6 = arith.constant 0 : index
    %c0_7 = arith.constant 0 : index
    %c0_8 = arith.constant 0 : index
    %7 = vector.load %arg13[%c0_6, %c0_7, %c0_8] : memref<1x32x32xbf16, #tpu.memory_space<vmem>>, vector<1x32x32xbf16>
    %8 = vector.shape_cast %7 : vector<1x32x32xbf16> to vector<32x32xbf16>
    %c0_9 = arith.constant 0 : index
    %c0_10 = arith.constant 0 : index
    %c0_11 = arith.constant 0 : index
    %9 = vector.load %arg14[%c0_9, %c0_10, %c0_11] : memref<1x32x32xbf16, #tpu.memory_space<vmem>>, vector<1x32x32xbf16>
    %10 = vector.shape_cast %9 : vector<1x32x32xbf16> to vector<32x32xbf16>
    %11 = tpu.concatenate %4, %6, %8, %10 in 0 : vector<32x32xbf16>, vector<32x32xbf16>, vector<32x32xbf16>, vector<32x32xbf16> -> vector<128x32xbf16>
    %12 = arith.extf %11 : vector<128x32xbf16> to vector<128x32xf32>
    %cst = arith.constant 1.000000e+04 : f32
    %13 = vector.broadcast %cst : f32 to vector<128x96xf32>
    %14 = tpu.concatenate %12, %13 in 1 : vector<128x32xf32>, vector<128x96xf32> -> vector<128x128xf32>
    %15 = tpu.iota {dimensions = array<i32: 0>} : vector<128x128xi32>
    %c32_i32 = arith.constant 32 : i32
    %c0_i32_12 = arith.constant 0 : i32
    %16 = arith.cmpi eq, %c32_i32, %c0_i32_12 : i32
    %c1_i32 = arith.constant 1 : i32
    %17 = arith.select %16, %c1_i32, %c32_i32 : i32
    %18 = vector.broadcast %17 : i32 to vector<128x128xi32>
    %19 = arith.remsi %15, %18 : vector<128x128xi32>
    %c0_i32_13 = arith.constant 0 : i32
    %20 = vector.broadcast %c0_i32_13 : i32 to vector<128x128xi32>
    %21 = arith.cmpi ne, %19, %20 : vector<128x128xi32>
    %c0_i32_14 = arith.constant 0 : i32
    %22 = vector.broadcast %c0_i32_14 : i32 to vector<128x128xi32>
    %23 = arith.cmpi slt, %19, %22 : vector<128x128xi32>
    %c0_i32_15 = arith.constant 0 : i32
    %24 = arith.cmpi slt, %17, %c0_i32_15 : i32
    %25 = vector.broadcast %24 : i1 to vector<128x128xi1>
    %26 = vector.broadcast %25 : vector<128x128xi1> to vector<128x128xi1>
    %27 = arith.xori %23, %26 : vector<128x128xi1>
    %28 = arith.andi %27, %21 : vector<128x128xi1>
    %29 = vector.broadcast %17 : i32 to vector<128x128xi32>
    %30 = arith.addi %19, %29 : vector<128x128xi32>
    %31 = arith.select %28, %30, %19 : vector<128x128xi1>, vector<128x128xi32>
    %32 = tpu.iota {dimensions = array<i32: 1>} : vector<128x128xi32>
    %c2_i32 = arith.constant 2 : i32
    %33 = tpu.dynamic_rotate %14 by %c2_i32 dim 0 : vector<128x128xf32>, i32 -> vector<128x128xf32>
    %c-2_i32 = arith.constant -2 : i32
    %34 = vector.broadcast %c-2_i32 : i32 to vector<128x128xi32>
    %35 = arith.addi %31, %34 : vector<128x128xi32>
    %c0_i32_16 = arith.constant 0 : i32
    %36 = vector.broadcast %c0_i32_16 : i32 to vector<128x128xi32>
    %37 = arith.cmpi sge, %35, %36 : vector<128x128xi32>
    %c-2_i32_17 = arith.constant -2 : i32
    %38 = vector.broadcast %c-2_i32_17 : i32 to vector<128x128xi32>
    %39 = arith.addi %31, %38 : vector<128x128xi32>
    %c32_i32_18 = arith.constant 32 : i32
    %40 = vector.broadcast %c32_i32_18 : i32 to vector<128x128xi32>
    %41 = arith.cmpi slt, %39, %40 : vector<128x128xi32>
    %42 = arith.andi %37, %41 : vector<128x128xi1>
    %cst_19 = arith.constant 1.000000e+04 : f32
    %43 = vector.broadcast %cst_19 : f32 to vector<128x128xf32>
    %44 = arith.select %42, %33, %43 : vector<128x128xi1>, vector<128x128xf32>
    %45 = arith.minimumf %14, %44 : vector<128x128xf32>
    %c1_i32_20 = arith.constant 1 : i32
    %46 = tpu.dynamic_rotate %14 by %c1_i32_20 dim 0 : vector<128x128xf32>, i32 -> vector<128x128xf32>
    %c-1_i32 = arith.constant -1 : i32
    %47 = vector.broadcast %c-1_i32 : i32 to vector<128x128xi32>
    %48 = arith.addi %31, %47 : vector<128x128xi32>
    %c0_i32_21 = arith.constant 0 : i32
    %49 = vector.broadcast %c0_i32_21 : i32 to vector<128x128xi32>
    %50 = arith.cmpi sge, %48, %49 : vector<128x128xi32>
    %c-1_i32_22 = arith.constant -1 : i32
    %51 = vector.broadcast %c-1_i32_22 : i32 to vector<128x128xi32>
    %52 = arith.addi %31, %51 : vector<128x128xi32>
    %c32_i32_23 = arith.constant 32 : i32
    %53 = vector.broadcast %c32_i32_23 : i32 to vector<128x128xi32>
    %54 = arith.cmpi slt, %52, %53 : vector<128x128xi32>
    %55 = arith.andi %50, %54 : vector<128x128xi1>
    %cst_24 = arith.constant 1.000000e+04 : f32
    %56 = vector.broadcast %cst_24 : f32 to vector<128x128xf32>
    %57 = arith.select %55, %46, %56 : vector<128x128xi1>, vector<128x128xf32>
    %58 = arith.minimumf %45, %57 : vector<128x128xf32>
    %c127_i32 = arith.constant 127 : i32
    %59 = tpu.dynamic_rotate %14 by %c127_i32 dim 0 : vector<128x128xf32>, i32 -> vector<128x128xf32>
    %c1_i32_25 = arith.constant 1 : i32
    %60 = vector.broadcast %c1_i32_25 : i32 to vector<128x128xi32>
    %61 = arith.addi %31, %60 : vector<128x128xi32>
    %c0_i32_26 = arith.constant 0 : i32
    %62 = vector.broadcast %c0_i32_26 : i32 to vector<128x128xi32>
    %63 = arith.cmpi sge, %61, %62 : vector<128x128xi32>
    %c1_i32_27 = arith.constant 1 : i32
    %64 = vector.broadcast %c1_i32_27 : i32 to vector<128x128xi32>
    %65 = arith.addi %31, %64 : vector<128x128xi32>
    %c32_i32_28 = arith.constant 32 : i32
    %66 = vector.broadcast %c32_i32_28 : i32 to vector<128x128xi32>
    %67 = arith.cmpi slt, %65, %66 : vector<128x128xi32>
    %68 = arith.andi %63, %67 : vector<128x128xi1>
    %cst_29 = arith.constant 1.000000e+04 : f32
    %69 = vector.broadcast %cst_29 : f32 to vector<128x128xf32>
    %70 = arith.select %68, %59, %69 : vector<128x128xi1>, vector<128x128xf32>
    %71 = arith.minimumf %58, %70 : vector<128x128xf32>
    %c126_i32 = arith.constant 126 : i32
    %72 = tpu.dynamic_rotate %14 by %c126_i32 dim 0 : vector<128x128xf32>, i32 -> vector<128x128xf32>
    %c2_i32_30 = arith.constant 2 : i32
    %73 = vector.broadcast %c2_i32_30 : i32 to vector<128x128xi32>
    %74 = arith.addi %31, %73 : vector<128x128xi32>
    %c0_i32_31 = arith.constant 0 : i32
    %75 = vector.broadcast %c0_i32_31 : i32 to vector<128x128xi32>
    %76 = arith.cmpi sge, %74, %75 : vector<128x128xi32>
    %c2_i32_32 = arith.constant 2 : i32
    %77 = vector.broadcast %c2_i32_32 : i32 to vector<128x128xi32>
    %78 = arith.addi %31, %77 : vector<128x128xi32>
    %c32_i32_33 = arith.constant 32 : i32
    %79 = vector.broadcast %c32_i32_33 : i32 to vector<128x128xi32>
    %80 = arith.cmpi slt, %78, %79 : vector<128x128xi32>
    %81 = arith.andi %76, %80 : vector<128x128xi1>
    %cst_34 = arith.constant 1.000000e+04 : f32
    %82 = vector.broadcast %cst_34 : f32 to vector<128x128xf32>
    %83 = arith.select %81, %72, %82 : vector<128x128xi1>, vector<128x128xf32>
    %84 = arith.minimumf %71, %83 : vector<128x128xf32>
    %c2_i32_35 = arith.constant 2 : i32
    %85 = tpu.dynamic_rotate %84 by %c2_i32_35 dim 1 : vector<128x128xf32>, i32 -> vector<128x128xf32>
    %c-2_i32_36 = arith.constant -2 : i32
    %86 = vector.broadcast %c-2_i32_36 : i32 to vector<128x128xi32>
    %87 = arith.addi %32, %86 : vector<128x128xi32>
    %c0_i32_37 = arith.constant 0 : i32
    %88 = vector.broadcast %c0_i32_37 : i32 to vector<128x128xi32>
    %89 = arith.cmpi sge, %87, %88 : vector<128x128xi32>
    %c-2_i32_38 = arith.constant -2 : i32
    %90 = vector.broadcast %c-2_i32_38 : i32 to vector<128x128xi32>
    %91 = arith.addi %32, %90 : vector<128x128xi32>
    %c32_i32_39 = arith.constant 32 : i32
    %92 = vector.broadcast %c32_i32_39 : i32 to vector<128x128xi32>
    %93 = arith.cmpi slt, %91, %92 : vector<128x128xi32>
    %94 = arith.andi %89, %93 : vector<128x128xi1>
    %cst_40 = arith.constant 1.000000e+04 : f32
    %95 = vector.broadcast %cst_40 : f32 to vector<128x128xf32>
    %96 = arith.select %94, %85, %95 : vector<128x128xi1>, vector<128x128xf32>
    %97 = arith.minimumf %84, %96 : vector<128x128xf32>
    %c1_i32_41 = arith.constant 1 : i32
    %98 = tpu.dynamic_rotate %84 by %c1_i32_41 dim 1 : vector<128x128xf32>, i32 -> vector<128x128xf32>
    %c-1_i32_42 = arith.constant -1 : i32
    %99 = vector.broadcast %c-1_i32_42 : i32 to vector<128x128xi32>
    %100 = arith.addi %32, %99 : vector<128x128xi32>
    %c0_i32_43 = arith.constant 0 : i32
    %101 = vector.broadcast %c0_i32_43 : i32 to vector<128x128xi32>
    %102 = arith.cmpi sge, %100, %101 : vector<128x128xi32>
    %c-1_i32_44 = arith.constant -1 : i32
    %103 = vector.broadcast %c-1_i32_44 : i32 to vector<128x128xi32>
    %104 = arith.addi %32, %103 : vector<128x128xi32>
    %c32_i32_45 = arith.constant 32 : i32
    %105 = vector.broadcast %c32_i32_45 : i32 to vector<128x128xi32>
    %106 = arith.cmpi slt, %104, %105 : vector<128x128xi32>
    %107 = arith.andi %102, %106 : vector<128x128xi1>
    %cst_46 = arith.constant 1.000000e+04 : f32
    %108 = vector.broadcast %cst_46 : f32 to vector<128x128xf32>
    %109 = arith.select %107, %98, %108 : vector<128x128xi1>, vector<128x128xf32>
    %110 = arith.minimumf %97, %109 : vector<128x128xf32>
    %c127_i32_47 = arith.constant 127 : i32
    %111 = tpu.dynamic_rotate %84 by %c127_i32_47 dim 1 : vector<128x128xf32>, i32 -> vector<128x128xf32>
    %c1_i32_48 = arith.constant 1 : i32
    %112 = vector.broadcast %c1_i32_48 : i32 to vector<128x128xi32>
    %113 = arith.addi %32, %112 : vector<128x128xi32>
    %c0_i32_49 = arith.constant 0 : i32
    %114 = vector.broadcast %c0_i32_49 : i32 to vector<128x128xi32>
    %115 = arith.cmpi sge, %113, %114 : vector<128x128xi32>
    %c1_i32_50 = arith.constant 1 : i32
    %116 = vector.broadcast %c1_i32_50 : i32 to vector<128x128xi32>
    %117 = arith.addi %32, %116 : vector<128x128xi32>
    %c32_i32_51 = arith.constant 32 : i32
    %118 = vector.broadcast %c32_i32_51 : i32 to vector<128x128xi32>
    %119 = arith.cmpi slt, %117, %118 : vector<128x128xi32>
    %120 = arith.andi %115, %119 : vector<128x128xi1>
    %cst_52 = arith.constant 1.000000e+04 : f32
    %121 = vector.broadcast %cst_52 : f32 to vector<128x128xf32>
    %122 = arith.select %120, %111, %121 : vector<128x128xi1>, vector<128x128xf32>
    %123 = arith.minimumf %110, %122 : vector<128x128xf32>
    %c126_i32_53 = arith.constant 126 : i32
    %124 = tpu.dynamic_rotate %84 by %c126_i32_53 dim 1 : vector<128x128xf32>, i32 -> vector<128x128xf32>
    %c2_i32_54 = arith.constant 2 : i32
    %125 = vector.broadcast %c2_i32_54 : i32 to vector<128x128xi32>
    %126 = arith.addi %32, %125 : vector<128x128xi32>
    %c0_i32_55 = arith.constant 0 : i32
    %127 = vector.broadcast %c0_i32_55 : i32 to vector<128x128xi32>
    %128 = arith.cmpi sge, %126, %127 : vector<128x128xi32>
    %c2_i32_56 = arith.constant 2 : i32
    %129 = vector.broadcast %c2_i32_56 : i32 to vector<128x128xi32>
    %130 = arith.addi %32, %129 : vector<128x128xi32>
    %c32_i32_57 = arith.constant 32 : i32
    %131 = vector.broadcast %c32_i32_57 : i32 to vector<128x128xi32>
    %132 = arith.cmpi slt, %130, %131 : vector<128x128xi32>
    %133 = arith.andi %128, %132 : vector<128x128xi1>
    %cst_58 = arith.constant 1.000000e+04 : f32
    %134 = vector.broadcast %cst_58 : f32 to vector<128x128xf32>
    %135 = arith.select %133, %124, %134 : vector<128x128xi1>, vector<128x128xf32>
    %136 = arith.minimumf %123, %135 : vector<128x128xf32>
    %137 = vector.extract_strided_slice %136 {offsets = [0, 0], sizes = [128, 32], strides = [1, 1]} : vector<128x128xf32> to vector<128x32xf32>
    %138 = arith.subf %12, %137 : vector<128x32xf32>
    %c0_59 = arith.constant 0 : index
    %c0_60 = arith.constant 0 : index
    %139 = vector.load %arg16[%c0_59, %c0_60] : memref<32x16xbf16, #tpu.memory_space<vmem>>, vector<32x16xbf16>
    %c0_61 = arith.constant 0 : index
    %c0_62 = arith.constant 0 : index
    %140 = vector.load %arg15[%c0_61, %c0_62] : memref<16x32xbf16, #tpu.memory_space<vmem>>, vector<16x32xbf16>
    %cst_63 = arith.constant dense<0.000000e+00> : vector<128x16xf32>
    %141 = tpu.matmul %11, %139, %cst_63 {dimension_numbers = #tpu.dot_dimension_numbers<[1], [0], [0], [1], [0, 0, 1, 1], [], []>} : vector<128x32xbf16>, vector<32x16xbf16>, vector<128x16xf32> -> vector<128x16xf32>
    %142 = arith.truncf %138 : vector<128x32xf32> to vector<128x32xbf16>
    %cst_64 = arith.constant dense<0.000000e+00> : vector<128x16xf32>
    %143 = tpu.matmul %142, %139, %cst_64 {dimension_numbers = #tpu.dot_dimension_numbers<[1], [0], [0], [1], [0, 0, 1, 1], [], []>} : vector<128x32xbf16>, vector<32x16xbf16>, vector<128x16xf32> -> vector<128x16xf32>
    %144 = arith.truncf %141 : vector<128x16xf32> to vector<128x16xbf16>
    %145 = arith.truncf %143 : vector<128x16xf32> to vector<128x16xbf16>
    %146 = vector.extract_strided_slice %144 {offsets = [0, 0], sizes = [32, 16], strides = [1, 1]} : vector<128x16xbf16> to vector<32x16xbf16>
    %cst_65 = arith.constant dense<0.000000e+00> : vector<16x16xf32>
    %147 = tpu.matmul %140, %146, %cst_65 {dimension_numbers = #tpu.dot_dimension_numbers<[1], [0], [0], [1], [0, 0, 1, 1], [], []>} : vector<16x32xbf16>, vector<32x16xbf16>, vector<16x16xf32> -> vector<16x16xf32>
    %148 = vector.extract_strided_slice %145 {offsets = [0, 0], sizes = [32, 16], strides = [1, 1]} : vector<128x16xbf16> to vector<32x16xbf16>
    %cst_66 = arith.constant dense<0.000000e+00> : vector<16x16xf32>
    %149 = tpu.matmul %140, %148, %cst_66 {dimension_numbers = #tpu.dot_dimension_numbers<[1], [0], [0], [1], [0, 0, 1, 1], [], []>} : vector<16x32xbf16>, vector<32x16xbf16>, vector<16x16xf32> -> vector<16x16xf32>
    %c4_i32 = arith.constant 4 : i32
    %150 = arith.muli %arg0, %c4_i32 : i32
    %c0_i32_67 = arith.constant 0 : i32
    %151 = arith.addi %150, %c0_i32_67 : i32
    %c5_i32 = arith.constant 5 : i32
    %152 = arith.cmpi slt, %151, %c5_i32 : i32
    %153 = arith.extui %152 : i1 to i32
    %154 = arith.sitofp %153 : i32 to f32
    %c0_68 = arith.constant 0 : index
    %c0_69 = arith.constant 0 : index
    %c0_70 = arith.constant 0 : index
    %155 = vector.load %arg3[%c0_68, %c0_69, %c0_70] : memref<1x16x16xbf16, #tpu.memory_space<vmem>>, vector<1x16x16xbf16>
    %156 = vector.shape_cast %155 : vector<1x16x16xbf16> to vector<16x16xbf16>
    %157 = arith.extf %156 : vector<16x16xbf16> to vector<16x16xf32>
    %c0_71 = arith.constant 0 : index
    %c0_72 = arith.constant 0 : index
    %c0_73 = arith.constant 0 : index
    %158 = vector.load %arg7[%c0_71, %c0_72, %c0_73] : memref<1x16x16xbf16, #tpu.memory_space<vmem>>, vector<1x16x16xbf16>
    %159 = vector.shape_cast %158 : vector<1x16x16xbf16> to vector<16x16xbf16>
    %160 = arith.extf %159 : vector<16x16xbf16> to vector<16x16xf32>
    %161 = arith.negf %157 : vector<16x16xf32>
    %162 = math.exp %161 : vector<16x16xf32>
    %cst_74 = arith.constant 1.000000e+00 : f32
    %163 = vector.broadcast %cst_74 : f32 to vector<16x16xf32>
    %164 = arith.addf %163, %162 : vector<16x16xf32>
    %165 = arith.divf %163, %164 : vector<16x16xf32>
    %166 = arith.negf %160 : vector<16x16xf32>
    %167 = math.exp %166 : vector<16x16xf32>
    %cst_75 = arith.constant 1.000000e+00 : f32
    %168 = vector.broadcast %cst_75 : f32 to vector<16x16xf32>
    %169 = arith.addf %168, %167 : vector<16x16xf32>
    %170 = arith.divf %168, %169 : vector<16x16xf32>
    %171 = arith.mulf %165, %147 : vector<16x16xf32>
    %cst_76 = arith.constant dense<0.000000e+00> : vector<16xf32>
    %172 = vector.multi_reduction <add>, %171, %cst_76 [1] : vector<16x16xf32> to vector<16xf32>
    %173 = vector.shape_cast %172 : vector<16xf32> to vector<16x1xf32>
    %cst_77 = arith.constant dense<0.000000e+00> : vector<1xf32>
    %174 = vector.multi_reduction <add>, %173, %cst_77 [0] : vector<16x1xf32> to vector<1xf32>
    %175 = vector.shape_cast %174 : vector<1xf32> to vector<1x1xf32>
    %cst_78 = arith.constant 2.000000e+00 : f32
    %176 = vector.broadcast %cst_78 : f32 to vector<1x1xf32>
    %177 = arith.mulf %176, %175 : vector<1x1xf32>
    %178 = arith.mulf %165, %165 : vector<16x16xf32>
    %179 = arith.mulf %147, %147 : vector<16x16xf32>
    %180 = arith.addf %178, %179 : vector<16x16xf32>
    %cst_79 = arith.constant dense<0.000000e+00> : vector<16xf32>
    %181 = vector.multi_reduction <add>, %180, %cst_79 [1] : vector<16x16xf32> to vector<16xf32>
    %182 = vector.shape_cast %181 : vector<16xf32> to vector<16x1xf32>
    %cst_80 = arith.constant dense<0.000000e+00> : vector<1xf32>
    %183 = vector.multi_reduction <add>, %182, %cst_80 [0] : vector<16x1xf32> to vector<1xf32>
    %184 = vector.shape_cast %183 : vector<1xf32> to vector<1x1xf32>
    %185 = arith.mulf %170, %149 : vector<16x16xf32>
    %cst_81 = arith.constant dense<0.000000e+00> : vector<16xf32>
    %186 = vector.multi_reduction <add>, %185, %cst_81 [1] : vector<16x16xf32> to vector<16xf32>
    %187 = vector.shape_cast %186 : vector<16xf32> to vector<16x1xf32>
    %cst_82 = arith.constant dense<0.000000e+00> : vector<1xf32>
    %188 = vector.multi_reduction <add>, %187, %cst_82 [0] : vector<16x1xf32> to vector<1xf32>
    %189 = vector.shape_cast %188 : vector<1xf32> to vector<1x1xf32>
    %cst_83 = arith.constant 2.000000e+00 : f32
    %190 = vector.broadcast %cst_83 : f32 to vector<1x1xf32>
    %191 = arith.mulf %190, %189 : vector<1x1xf32>
    %192 = arith.mulf %170, %170 : vector<16x16xf32>
    %193 = arith.mulf %149, %149 : vector<16x16xf32>
    %194 = arith.addf %192, %193 : vector<16x16xf32>
    %cst_84 = arith.constant dense<0.000000e+00> : vector<16xf32>
    %195 = vector.multi_reduction <add>, %194, %cst_84 [1] : vector<16x16xf32> to vector<16xf32>
    %196 = vector.shape_cast %195 : vector<16xf32> to vector<16x1xf32>
    %cst_85 = arith.constant dense<0.000000e+00> : vector<1xf32>
    %197 = vector.multi_reduction <add>, %196, %cst_85 [0] : vector<16x1xf32> to vector<1xf32>
    %198 = vector.shape_cast %197 : vector<1xf32> to vector<1x1xf32>
    %c0_86 = arith.constant 0 : index
    %c0_87 = arith.constant 0 : index
    %199 = vector.load %arg20[%c0_86, %c0_87] : memref<1x1xf32, #tpu.memory_space<vmem>>, vector<1x1xf32>
    %cst_88 = arith.constant 9.99999974E-5 : f32
    %200 = vector.broadcast %cst_88 : f32 to vector<1x1xf32>
    %201 = arith.addf %184, %200 : vector<1x1xf32>
    %202 = arith.divf %177, %201 : vector<1x1xf32>
    %cst_89 = arith.constant 1.000000e+00 : f32
    %203 = vector.broadcast %cst_89 : f32 to vector<1x1xf32>
    %204 = arith.subf %203, %202 : vector<1x1xf32>
    %205 = vector.broadcast %154 : f32 to vector<1x1xf32>
    %206 = arith.mulf %205, %204 : vector<1x1xf32>
    %207 = arith.addf %199, %206 : vector<1x1xf32>
    %c0_90 = arith.constant 0 : index
    %c0_91 = arith.constant 0 : index
    %208 = vector.load %arg20[%c0_90, %c0_91] : memref<1x1xf32, #tpu.memory_space<vmem>>, vector<1x1xf32>
    tpu.vector_store %arg20[%c0_90, %c0_91], %207 {strides = array<i32>} : memref<1x1xf32, #tpu.memory_space<vmem>>, vector<1x1xf32>,
    %c0_92 = arith.constant 0 : index
    %c0_93 = arith.constant 0 : index
    %209 = vector.load %arg21[%c0_92, %c0_93] : memref<1x1xf32, #tpu.memory_space<vmem>>, vector<1x1xf32>
    %cst_94 = arith.constant 9.99999974E-5 : f32
    %210 = vector.broadcast %cst_94 : f32 to vector<1x1xf32>
    %211 = arith.addf %198, %210 : vector<1x1xf32>
    %212 = arith.divf %191, %211 : vector<1x1xf32>
    %cst_95 = arith.constant 1.000000e+00 : f32
    %213 = vector.broadcast %cst_95 : f32 to vector<1x1xf32>
    %214 = arith.subf %213, %212 : vector<1x1xf32>
    %215 = vector.broadcast %154 : f32 to vector<1x1xf32>
    %216 = arith.mulf %215, %214 : vector<1x1xf32>
    %217 = arith.addf %209, %216 : vector<1x1xf32>
    %c0_96 = arith.constant 0 : index
    %c0_97 = arith.constant 0 : index
    %218 = vector.load %arg21[%c0_96, %c0_97] : memref<1x1xf32, #tpu.memory_space<vmem>>, vector<1x1xf32>
    tpu.vector_store %arg21[%c0_96, %c0_97], %217 {strides = array<i32>} : memref<1x1xf32, #tpu.memory_space<vmem>>, vector<1x1xf32>,
    %c0_98 = arith.constant 0 : index
    %c0_99 = arith.constant 0 : index
    %219 = vector.load %arg23[%c0_98, %c0_99] : memref<16x16xf32, #tpu.memory_space<vmem>>, vector<16x16xf32>
    %cst_100 = arith.constant 0.000000e+00 : f32
    %220 = vector.broadcast %cst_100 : f32 to vector<16x16xf32>
    %221 = arith.cmpf oge, %157, %220 : vector<16x16xf32>
    %cst_101 = arith.constant 1.000000e+00 : f32
    %222 = vector.broadcast %cst_101 : f32 to vector<16x16xf32>
    %223 = arith.subf %222, %165 : vector<16x16xf32>
    %224 = arith.select %221, %165, %223 : vector<16x16xi1>, vector<16x16xf32>
    %cst_102 = arith.constant 0.000000e+00 : f32
    %225 = vector.broadcast %cst_102 : f32 to vector<16x16xf32>
    %226 = arith.maximumf %157, %225 : vector<16x16xf32>
    %227 = arith.mulf %157, %147 : vector<16x16xf32>
    %228 = arith.subf %226, %227 : vector<16x16xf32>
    %229 = math.log %224 : vector<16x16xf32>
    %230 = arith.subf %228, %229 : vector<16x16xf32>
    %231 = vector.broadcast %154 : f32 to vector<16x16xf32>
    %232 = arith.mulf %231, %230 : vector<16x16xf32>
    %233 = arith.addf %219, %232 : vector<16x16xf32>
    %c0_103 = arith.constant 0 : index
    %c0_104 = arith.constant 0 : index
    %234 = vector.load %arg23[%c0_103, %c0_104] : memref<16x16xf32, #tpu.memory_space<vmem>>, vector<16x16xf32>
    tpu.vector_store %arg23[%c0_103, %c0_104], %233 {strides = array<i32>} : memref<16x16xf32, #tpu.memory_space<vmem>>, vector<16x16xf32>,
    %c0_105 = arith.constant 0 : index
    %c0_106 = arith.constant 0 : index
    %235 = vector.load %arg24[%c0_105, %c0_106] : memref<16x16xf32, #tpu.memory_space<vmem>>, vector<16x16xf32>
    %cst_107 = arith.constant 0.000000e+00 : f32
    %236 = vector.broadcast %cst_107 : f32 to vector<16x16xf32>
    %237 = arith.cmpf oge, %160, %236 : vector<16x16xf32>
    %cst_108 = arith.constant 1.000000e+00 : f32
    %238 = vector.broadcast %cst_108 : f32 to vector<16x16xf32>
    %239 = arith.subf %238, %170 : vector<16x16xf32>
    %240 = arith.select %237, %170, %239 : vector<16x16xi1>, vector<16x16xf32>
    %cst_109 = arith.constant 0.000000e+00 : f32
    %241 = vector.broadcast %cst_109 : f32 to vector<16x16xf32>
    %242 = arith.maximumf %160, %241 : vector<16x16xf32>
    %243 = arith.mulf %160, %149 : vector<16x16xf32>
    %244 = arith.subf %242, %243 : vector<16x16xf32>
    %245 = math.log %240 : vector<16x16xf32>
    %246 = arith.subf %244, %245 : vector<16x16xf32>
    %247 = vector.broadcast %154 : f32 to vector<16x16xf32>
    %248 = arith.mulf %247, %246 : vector<16x16xf32>
    %249 = arith.addf %235, %248 : vector<16x16xf32>
    %c0_110 = arith.constant 0 : index
    %c0_111 = arith.constant 0 : index
    %250 = vector.load %arg24[%c0_110, %c0_111] : memref<16x16xf32, #tpu.memory_space<vmem>>, vector<16x16xf32>
    tpu.vector_store %arg24[%c0_110, %c0_111], %249 {strides = array<i32>} : memref<16x16xf32, #tpu.memory_space<vmem>>, vector<16x16xf32>,
    %251 = vector.extract_strided_slice %144 {offsets = [32, 0], sizes = [32, 16], strides = [1, 1]} : vector<128x16xbf16> to vector<32x16xbf16>
    %cst_112 = arith.constant dense<0.000000e+00> : vector<16x16xf32>
    %252 = tpu.matmul %140, %251, %cst_112 {dimension_numbers = #tpu.dot_dimension_numbers<[1], [0], [0], [1], [0, 0, 1, 1], [], []>} : vector<16x32xbf16>, vector<32x16xbf16>, vector<16x16xf32> -> vector<16x16xf32>
    %253 = vector.extract_strided_slice %145 {offsets = [32, 0], sizes = [32, 16], strides = [1, 1]} : vector<128x16xbf16> to vector<32x16xbf16>
    %cst_113 = arith.constant dense<0.000000e+00> : vector<16x16xf32>
    %254 = tpu.matmul %140, %253, %cst_113 {dimension_numbers = #tpu.dot_dimension_numbers<[1], [0], [0], [1], [0, 0, 1, 1], [], []>} : vector<16x32xbf16>, vector<32x16xbf16>, vector<16x16xf32> -> vector<16x16xf32>
    %c4_i32_114 = arith.constant 4 : i32
    %255 = arith.muli %arg0, %c4_i32_114 : i32
    %c1_i32_115 = arith.constant 1 : i32
    %256 = arith.addi %255, %c1_i32_115 : i32
    %c5_i32_116 = arith.constant 5 : i32
    %257 = arith.cmpi slt, %256, %c5_i32_116 : i32
    %258 = arith.extui %257 : i1 to i32
    %259 = arith.sitofp %258 : i32 to f32
    %c0_117 = arith.constant 0 : index
    %c0_118 = arith.constant 0 : index
    %c0_119 = arith.constant 0 : index
    %260 = vector.load %arg4[%c0_117, %c0_118, %c0_119] : memref<1x16x16xbf16, #tpu.memory_space<vmem>>, vector<1x16x16xbf16>
    %261 = vector.shape_cast %260 : vector<1x16x16xbf16> to vector<16x16xbf16>
    %262 = arith.extf %261 : vector<16x16xbf16> to vector<16x16xf32>
    %c0_120 = arith.constant 0 : index
    %c0_121 = arith.constant 0 : index
    %c0_122 = arith.constant 0 : index
    %263 = vector.load %arg8[%c0_120, %c0_121, %c0_122] : memref<1x16x16xbf16, #tpu.memory_space<vmem>>, vector<1x16x16xbf16>
    %264 = vector.shape_cast %263 : vector<1x16x16xbf16> to vector<16x16xbf16>
    %265 = arith.extf %264 : vector<16x16xbf16> to vector<16x16xf32>
    %266 = arith.negf %262 : vector<16x16xf32>
    %267 = math.exp %266 : vector<16x16xf32>
    %cst_123 = arith.constant 1.000000e+00 : f32
    %268 = vector.broadcast %cst_123 : f32 to vector<16x16xf32>
    %269 = arith.addf %268, %267 : vector<16x16xf32>
    %270 = arith.divf %268, %269 : vector<16x16xf32>
    %271 = arith.negf %265 : vector<16x16xf32>
    %272 = math.exp %271 : vector<16x16xf32>
    %cst_124 = arith.constant 1.000000e+00 : f32
    %273 = vector.broadcast %cst_124 : f32 to vector<16x16xf32>
    %274 = arith.addf %273, %272 : vector<16x16xf32>
    %275 = arith.divf %273, %274 : vector<16x16xf32>
    %276 = arith.mulf %270, %252 : vector<16x16xf32>
    %cst_125 = arith.constant dense<0.000000e+00> : vector<16xf32>
    %277 = vector.multi_reduction <add>, %276, %cst_125 [1] : vector<16x16xf32> to vector<16xf32>
    %278 = vector.shape_cast %277 : vector<16xf32> to vector<16x1xf32>
    %cst_126 = arith.constant dense<0.000000e+00> : vector<1xf32>
    %279 = vector.multi_reduction <add>, %278, %cst_126 [0] : vector<16x1xf32> to vector<1xf32>
    %280 = vector.shape_cast %279 : vector<1xf32> to vector<1x1xf32>
    %cst_127 = arith.constant 2.000000e+00 : f32
    %281 = vector.broadcast %cst_127 : f32 to vector<1x1xf32>
    %282 = arith.mulf %281, %280 : vector<1x1xf32>
    %283 = arith.mulf %270, %270 : vector<16x16xf32>
    %284 = arith.mulf %252, %252 : vector<16x16xf32>
    %285 = arith.addf %283, %284 : vector<16x16xf32>
    %cst_128 = arith.constant dense<0.000000e+00> : vector<16xf32>
    %286 = vector.multi_reduction <add>, %285, %cst_128 [1] : vector<16x16xf32> to vector<16xf32>
    %287 = vector.shape_cast %286 : vector<16xf32> to vector<16x1xf32>
    %cst_129 = arith.constant dense<0.000000e+00> : vector<1xf32>
    %288 = vector.multi_reduction <add>, %287, %cst_129 [0] : vector<16x1xf32> to vector<1xf32>
    %289 = vector.shape_cast %288 : vector<1xf32> to vector<1x1xf32>
    %290 = arith.mulf %275, %254 : vector<16x16xf32>
    %cst_130 = arith.constant dense<0.000000e+00> : vector<16xf32>
    %291 = vector.multi_reduction <add>, %290, %cst_130 [1] : vector<16x16xf32> to vector<16xf32>
    %292 = vector.shape_cast %291 : vector<16xf32> to vector<16x1xf32>
    %cst_131 = arith.constant dense<0.000000e+00> : vector<1xf32>
    %293 = vector.multi_reduction <add>, %292, %cst_131 [0] : vector<16x1xf32> to vector<1xf32>
    %294 = vector.shape_cast %293 : vector<1xf32> to vector<1x1xf32>
    %cst_132 = arith.constant 2.000000e+00 : f32
    %295 = vector.broadcast %cst_132 : f32 to vector<1x1xf32>
    %296 = arith.mulf %295, %294 : vector<1x1xf32>
    %297 = arith.mulf %275, %275 : vector<16x16xf32>
    %298 = arith.mulf %254, %254 : vector<16x16xf32>
    %299 = arith.addf %297, %298 : vector<16x16xf32>
    %cst_133 = arith.constant dense<0.000000e+00> : vector<16xf32>
    %300 = vector.multi_reduction <add>, %299, %cst_133 [1] : vector<16x16xf32> to vector<16xf32>
    %301 = vector.shape_cast %300 : vector<16xf32> to vector<16x1xf32>
    %cst_134 = arith.constant dense<0.000000e+00> : vector<1xf32>
    %302 = vector.multi_reduction <add>, %301, %cst_134 [0] : vector<16x1xf32> to vector<1xf32>
    %303 = vector.shape_cast %302 : vector<1xf32> to vector<1x1xf32>
    %c0_135 = arith.constant 0 : index
    %c0_136 = arith.constant 0 : index
    %304 = vector.load %arg20[%c0_135, %c0_136] : memref<1x1xf32, #tpu.memory_space<vmem>>, vector<1x1xf32>
    %cst_137 = arith.constant 9.99999974E-5 : f32
    %305 = vector.broadcast %cst_137 : f32 to vector<1x1xf32>
    %306 = arith.addf %289, %305 : vector<1x1xf32>
    %307 = arith.divf %282, %306 : vector<1x1xf32>
    %cst_138 = arith.constant 1.000000e+00 : f32
    %308 = vector.broadcast %cst_138 : f32 to vector<1x1xf32>
    %309 = arith.subf %308, %307 : vector<1x1xf32>
    %310 = vector.broadcast %259 : f32 to vector<1x1xf32>
    %311 = arith.mulf %310, %309 : vector<1x1xf32>
    %312 = arith.addf %304, %311 : vector<1x1xf32>
    %c0_139 = arith.constant 0 : index
    %c0_140 = arith.constant 0 : index
    %313 = vector.load %arg20[%c0_139, %c0_140] : memref<1x1xf32, #tpu.memory_space<vmem>>, vector<1x1xf32>
    tpu.vector_store %arg20[%c0_139, %c0_140], %312 {strides = array<i32>} : memref<1x1xf32, #tpu.memory_space<vmem>>, vector<1x1xf32>,
    %c0_141 = arith.constant 0 : index
    %c0_142 = arith.constant 0 : index
    %314 = vector.load %arg21[%c0_141, %c0_142] : memref<1x1xf32, #tpu.memory_space<vmem>>, vector<1x1xf32>
    %cst_143 = arith.constant 9.99999974E-5 : f32
    %315 = vector.broadcast %cst_143 : f32 to vector<1x1xf32>
    %316 = arith.addf %303, %315 : vector<1x1xf32>
    %317 = arith.divf %296, %316 : vector<1x1xf32>
    %cst_144 = arith.constant 1.000000e+00 : f32
    %318 = vector.broadcast %cst_144 : f32 to vector<1x1xf32>
    %319 = arith.subf %318, %317 : vector<1x1xf32>
    %320 = vector.broadcast %259 : f32 to vector<1x1xf32>
    %321 = arith.mulf %320, %319 : vector<1x1xf32>
    %322 = arith.addf %314, %321 : vector<1x1xf32>
    %c0_145 = arith.constant 0 : index
    %c0_146 = arith.constant 0 : index
    %323 = vector.load %arg21[%c0_145, %c0_146] : memref<1x1xf32, #tpu.memory_space<vmem>>, vector<1x1xf32>
    tpu.vector_store %arg21[%c0_145, %c0_146], %322 {strides = array<i32>} : memref<1x1xf32, #tpu.memory_space<vmem>>, vector<1x1xf32>,
    %c0_147 = arith.constant 0 : index
    %c0_148 = arith.constant 0 : index
    %324 = vector.load %arg23[%c0_147, %c0_148] : memref<16x16xf32, #tpu.memory_space<vmem>>, vector<16x16xf32>
    %cst_149 = arith.constant 0.000000e+00 : f32
    %325 = vector.broadcast %cst_149 : f32 to vector<16x16xf32>
    %326 = arith.cmpf oge, %262, %325 : vector<16x16xf32>
    %cst_150 = arith.constant 1.000000e+00 : f32
    %327 = vector.broadcast %cst_150 : f32 to vector<16x16xf32>
    %328 = arith.subf %327, %270 : vector<16x16xf32>
    %329 = arith.select %326, %270, %328 : vector<16x16xi1>, vector<16x16xf32>
    %cst_151 = arith.constant 0.000000e+00 : f32
    %330 = vector.broadcast %cst_151 : f32 to vector<16x16xf32>
    %331 = arith.maximumf %262, %330 : vector<16x16xf32>
    %332 = arith.mulf %262, %252 : vector<16x16xf32>
    %333 = arith.subf %331, %332 : vector<16x16xf32>
    %334 = math.log %329 : vector<16x16xf32>
    %335 = arith.subf %333, %334 : vector<16x16xf32>
    %336 = vector.broadcast %259 : f32 to vector<16x16xf32>
    %337 = arith.mulf %336, %335 : vector<16x16xf32>
    %338 = arith.addf %324, %337 : vector<16x16xf32>
    %c0_152 = arith.constant 0 : index
    %c0_153 = arith.constant 0 : index
    %339 = vector.load %arg23[%c0_152, %c0_153] : memref<16x16xf32, #tpu.memory_space<vmem>>, vector<16x16xf32>
    tpu.vector_store %arg23[%c0_152, %c0_153], %338 {strides = array<i32>} : memref<16x16xf32, #tpu.memory_space<vmem>>, vector<16x16xf32>,
    %c0_154 = arith.constant 0 : index
    %c0_155 = arith.constant 0 : index
    %340 = vector.load %arg24[%c0_154, %c0_155] : memref<16x16xf32, #tpu.memory_space<vmem>>, vector<16x16xf32>
    %cst_156 = arith.constant 0.000000e+00 : f32
    %341 = vector.broadcast %cst_156 : f32 to vector<16x16xf32>
    %342 = arith.cmpf oge, %265, %341 : vector<16x16xf32>
    %cst_157 = arith.constant 1.000000e+00 : f32
    %343 = vector.broadcast %cst_157 : f32 to vector<16x16xf32>
    %344 = arith.subf %343, %275 : vector<16x16xf32>
    %345 = arith.select %342, %275, %344 : vector<16x16xi1>, vector<16x16xf32>
    %cst_158 = arith.constant 0.000000e+00 : f32
    %346 = vector.broadcast %cst_158 : f32 to vector<16x16xf32>
    %347 = arith.maximumf %265, %346 : vector<16x16xf32>
    %348 = arith.mulf %265, %254 : vector<16x16xf32>
    %349 = arith.subf %347, %348 : vector<16x16xf32>
    %350 = math.log %345 : vector<16x16xf32>
    %351 = arith.subf %349, %350 : vector<16x16xf32>
    %352 = vector.broadcast %259 : f32 to vector<16x16xf32>
    %353 = arith.mulf %352, %351 : vector<16x16xf32>
    %354 = arith.addf %340, %353 : vector<16x16xf32>
    %c0_159 = arith.constant 0 : index
    %c0_160 = arith.constant 0 : index
    %355 = vector.load %arg24[%c0_159, %c0_160] : memref<16x16xf32, #tpu.memory_space<vmem>>, vector<16x16xf32>
    tpu.vector_store %arg24[%c0_159, %c0_160], %354 {strides = array<i32>} : memref<16x16xf32, #tpu.memory_space<vmem>>, vector<16x16xf32>,
    %356 = vector.extract_strided_slice %144 {offsets = [64, 0], sizes = [32, 16], strides = [1, 1]} : vector<128x16xbf16> to vector<32x16xbf16>
    %cst_161 = arith.constant dense<0.000000e+00> : vector<16x16xf32>
    %357 = tpu.matmul %140, %356, %cst_161 {dimension_numbers = #tpu.dot_dimension_numbers<[1], [0], [0], [1], [0, 0, 1, 1], [], []>} : vector<16x32xbf16>, vector<32x16xbf16>, vector<16x16xf32> -> vector<16x16xf32>
    %358 = vector.extract_strided_slice %145 {offsets = [64, 0], sizes = [32, 16], strides = [1, 1]} : vector<128x16xbf16> to vector<32x16xbf16>
    %cst_162 = arith.constant dense<0.000000e+00> : vector<16x16xf32>
    %359 = tpu.matmul %140, %358, %cst_162 {dimension_numbers = #tpu.dot_dimension_numbers<[1], [0], [0], [1], [0, 0, 1, 1], [], []>} : vector<16x32xbf16>, vector<32x16xbf16>, vector<16x16xf32> -> vector<16x16xf32>
    %c4_i32_163 = arith.constant 4 : i32
    %360 = arith.muli %arg0, %c4_i32_163 : i32
    %c2_i32_164 = arith.constant 2 : i32
    %361 = arith.addi %360, %c2_i32_164 : i32
    %c5_i32_165 = arith.constant 5 : i32
    %362 = arith.cmpi slt, %361, %c5_i32_165 : i32
    %363 = arith.extui %362 : i1 to i32
    %364 = arith.sitofp %363 : i32 to f32
    %c0_166 = arith.constant 0 : index
    %c0_167 = arith.constant 0 : index
    %c0_168 = arith.constant 0 : index
    %365 = vector.load %arg5[%c0_166, %c0_167, %c0_168] : memref<1x16x16xbf16, #tpu.memory_space<vmem>>, vector<1x16x16xbf16>
    %366 = vector.shape_cast %365 : vector<1x16x16xbf16> to vector<16x16xbf16>
    %367 = arith.extf %366 : vector<16x16xbf16> to vector<16x16xf32>
    %c0_169 = arith.constant 0 : index
    %c0_170 = arith.constant 0 : index
    %c0_171 = arith.constant 0 : index
    %368 = vector.load %arg9[%c0_169, %c0_170, %c0_171] : memref<1x16x16xbf16, #tpu.memory_space<vmem>>, vector<1x16x16xbf16>
    %369 = vector.shape_cast %368 : vector<1x16x16xbf16> to vector<16x16xbf16>
    %370 = arith.extf %369 : vector<16x16xbf16> to vector<16x16xf32>
    %371 = arith.negf %367 : vector<16x16xf32>
    %372 = math.exp %371 : vector<16x16xf32>
    %cst_172 = arith.constant 1.000000e+00 : f32
    %373 = vector.broadcast %cst_172 : f32 to vector<16x16xf32>
    %374 = arith.addf %373, %372 : vector<16x16xf32>
    %375 = arith.divf %373, %374 : vector<16x16xf32>
    %376 = arith.negf %370 : vector<16x16xf32>
    %377 = math.exp %376 : vector<16x16xf32>
    %cst_173 = arith.constant 1.000000e+00 : f32
    %378 = vector.broadcast %cst_173 : f32 to vector<16x16xf32>
    %379 = arith.addf %378, %377 : vector<16x16xf32>
    %380 = arith.divf %378, %379 : vector<16x16xf32>
    %381 = arith.mulf %375, %357 : vector<16x16xf32>
    %cst_174 = arith.constant dense<0.000000e+00> : vector<16xf32>
    %382 = vector.multi_reduction <add>, %381, %cst_174 [1] : vector<16x16xf32> to vector<16xf32>
    %383 = vector.shape_cast %382 : vector<16xf32> to vector<16x1xf32>
    %cst_175 = arith.constant dense<0.000000e+00> : vector<1xf32>
    %384 = vector.multi_reduction <add>, %383, %cst_175 [0] : vector<16x1xf32> to vector<1xf32>
    %385 = vector.shape_cast %384 : vector<1xf32> to vector<1x1xf32>
    %cst_176 = arith.constant 2.000000e+00 : f32
    %386 = vector.broadcast %cst_176 : f32 to vector<1x1xf32>
    %387 = arith.mulf %386, %385 : vector<1x1xf32>
    %388 = arith.mulf %375, %375 : vector<16x16xf32>
    %389 = arith.mulf %357, %357 : vector<16x16xf32>
    %390 = arith.addf %388, %389 : vector<16x16xf32>
    %cst_177 = arith.constant dense<0.000000e+00> : vector<16xf32>
    %391 = vector.multi_reduction <add>, %390, %cst_177 [1] : vector<16x16xf32> to vector<16xf32>
    %392 = vector.shape_cast %391 : vector<16xf32> to vector<16x1xf32>
    %cst_178 = arith.constant dense<0.000000e+00> : vector<1xf32>
    %393 = vector.multi_reduction <add>, %392, %cst_178 [0] : vector<16x1xf32> to vector<1xf32>
    %394 = vector.shape_cast %393 : vector<1xf32> to vector<1x1xf32>
    %395 = arith.mulf %380, %359 : vector<16x16xf32>
    %cst_179 = arith.constant dense<0.000000e+00> : vector<16xf32>
    %396 = vector.multi_reduction <add>, %395, %cst_179 [1] : vector<16x16xf32> to vector<16xf32>
    %397 = vector.shape_cast %396 : vector<16xf32> to vector<16x1xf32>
    %cst_180 = arith.constant dense<0.000000e+00> : vector<1xf32>
    %398 = vector.multi_reduction <add>, %397, %cst_180 [0] : vector<16x1xf32> to vector<1xf32>
    %399 = vector.shape_cast %398 : vector<1xf32> to vector<1x1xf32>
    %cst_181 = arith.constant 2.000000e+00 : f32
    %400 = vector.broadcast %cst_181 : f32 to vector<1x1xf32>
    %401 = arith.mulf %400, %399 : vector<1x1xf32>
    %402 = arith.mulf %380, %380 : vector<16x16xf32>
    %403 = arith.mulf %359, %359 : vector<16x16xf32>
    %404 = arith.addf %402, %403 : vector<16x16xf32>
    %cst_182 = arith.constant dense<0.000000e+00> : vector<16xf32>
    %405 = vector.multi_reduction <add>, %404, %cst_182 [1] : vector<16x16xf32> to vector<16xf32>
    %406 = vector.shape_cast %405 : vector<16xf32> to vector<16x1xf32>
    %cst_183 = arith.constant dense<0.000000e+00> : vector<1xf32>
    %407 = vector.multi_reduction <add>, %406, %cst_183 [0] : vector<16x1xf32> to vector<1xf32>
    %408 = vector.shape_cast %407 : vector<1xf32> to vector<1x1xf32>
    %c0_184 = arith.constant 0 : index
    %c0_185 = arith.constant 0 : index
    %409 = vector.load %arg20[%c0_184, %c0_185] : memref<1x1xf32, #tpu.memory_space<vmem>>, vector<1x1xf32>
    %cst_186 = arith.constant 9.99999974E-5 : f32
    %410 = vector.broadcast %cst_186 : f32 to vector<1x1xf32>
    %411 = arith.addf %394, %410 : vector<1x1xf32>
    %412 = arith.divf %387, %411 : vector<1x1xf32>
    %cst_187 = arith.constant 1.000000e+00 : f32
    %413 = vector.broadcast %cst_187 : f32 to vector<1x1xf32>
    %414 = arith.subf %413, %412 : vector<1x1xf32>
    %415 = vector.broadcast %364 : f32 to vector<1x1xf32>
    %416 = arith.mulf %415, %414 : vector<1x1xf32>
    %417 = arith.addf %409, %416 : vector<1x1xf32>
    %c0_188 = arith.constant 0 : index
    %c0_189 = arith.constant 0 : index
    %418 = vector.load %arg20[%c0_188, %c0_189] : memref<1x1xf32, #tpu.memory_space<vmem>>, vector<1x1xf32>
    tpu.vector_store %arg20[%c0_188, %c0_189], %417 {strides = array<i32>} : memref<1x1xf32, #tpu.memory_space<vmem>>, vector<1x1xf32>,
    %c0_190 = arith.constant 0 : index
    %c0_191 = arith.constant 0 : index
    %419 = vector.load %arg21[%c0_190, %c0_191] : memref<1x1xf32, #tpu.memory_space<vmem>>, vector<1x1xf32>
    %cst_192 = arith.constant 9.99999974E-5 : f32
    %420 = vector.broadcast %cst_192 : f32 to vector<1x1xf32>
    %421 = arith.addf %408, %420 : vector<1x1xf32>
    %422 = arith.divf %401, %421 : vector<1x1xf32>
    %cst_193 = arith.constant 1.000000e+00 : f32
    %423 = vector.broadcast %cst_193 : f32 to vector<1x1xf32>
    %424 = arith.subf %423, %422 : vector<1x1xf32>
    %425 = vector.broadcast %364 : f32 to vector<1x1xf32>
    %426 = arith.mulf %425, %424 : vector<1x1xf32>
    %427 = arith.addf %419, %426 : vector<1x1xf32>
    %c0_194 = arith.constant 0 : index
    %c0_195 = arith.constant 0 : index
    %428 = vector.load %arg21[%c0_194, %c0_195] : memref<1x1xf32, #tpu.memory_space<vmem>>, vector<1x1xf32>
    tpu.vector_store %arg21[%c0_194, %c0_195], %427 {strides = array<i32>} : memref<1x1xf32, #tpu.memory_space<vmem>>, vector<1x1xf32>,
    %c0_196 = arith.constant 0 : index
    %c0_197 = arith.constant 0 : index
    %429 = vector.load %arg23[%c0_196, %c0_197] : memref<16x16xf32, #tpu.memory_space<vmem>>, vector<16x16xf32>
    %cst_198 = arith.constant 0.000000e+00 : f32
    %430 = vector.broadcast %cst_198 : f32 to vector<16x16xf32>
    %431 = arith.cmpf oge, %367, %430 : vector<16x16xf32>
    %cst_199 = arith.constant 1.000000e+00 : f32
    %432 = vector.broadcast %cst_199 : f32 to vector<16x16xf32>
    %433 = arith.subf %432, %375 : vector<16x16xf32>
    %434 = arith.select %431, %375, %433 : vector<16x16xi1>, vector<16x16xf32>
    %cst_200 = arith.constant 0.000000e+00 : f32
    %435 = vector.broadcast %cst_200 : f32 to vector<16x16xf32>
    %436 = arith.maximumf %367, %435 : vector<16x16xf32>
    %437 = arith.mulf %367, %357 : vector<16x16xf32>
    %438 = arith.subf %436, %437 : vector<16x16xf32>
    %439 = math.log %434 : vector<16x16xf32>
    %440 = arith.subf %438, %439 : vector<16x16xf32>
    %441 = vector.broadcast %364 : f32 to vector<16x16xf32>
    %442 = arith.mulf %441, %440 : vector<16x16xf32>
    %443 = arith.addf %429, %442 : vector<16x16xf32>
    %c0_201 = arith.constant 0 : index
    %c0_202 = arith.constant 0 : index
    %444 = vector.load %arg23[%c0_201, %c0_202] : memref<16x16xf32, #tpu.memory_space<vmem>>, vector<16x16xf32>
    tpu.vector_store %arg23[%c0_201, %c0_202], %443 {strides = array<i32>} : memref<16x16xf32, #tpu.memory_space<vmem>>, vector<16x16xf32>,
    %c0_203 = arith.constant 0 : index
    %c0_204 = arith.constant 0 : index
    %445 = vector.load %arg24[%c0_203, %c0_204] : memref<16x16xf32, #tpu.memory_space<vmem>>, vector<16x16xf32>
    %cst_205 = arith.constant 0.000000e+00 : f32
    %446 = vector.broadcast %cst_205 : f32 to vector<16x16xf32>
    %447 = arith.cmpf oge, %370, %446 : vector<16x16xf32>
    %cst_206 = arith.constant 1.000000e+00 : f32
    %448 = vector.broadcast %cst_206 : f32 to vector<16x16xf32>
    %449 = arith.subf %448, %380 : vector<16x16xf32>
    %450 = arith.select %447, %380, %449 : vector<16x16xi1>, vector<16x16xf32>
    %cst_207 = arith.constant 0.000000e+00 : f32
    %451 = vector.broadcast %cst_207 : f32 to vector<16x16xf32>
    %452 = arith.maximumf %370, %451 : vector<16x16xf32>
    %453 = arith.mulf %370, %359 : vector<16x16xf32>
    %454 = arith.subf %452, %453 : vector<16x16xf32>
    %455 = math.log %450 : vector<16x16xf32>
    %456 = arith.subf %454, %455 : vector<16x16xf32>
    %457 = vector.broadcast %364 : f32 to vector<16x16xf32>
    %458 = arith.mulf %457, %456 : vector<16x16xf32>
    %459 = arith.addf %445, %458 : vector<16x16xf32>
    %c0_208 = arith.constant 0 : index
    %c0_209 = arith.constant 0 : index
    %460 = vector.load %arg24[%c0_208, %c0_209] : memref<16x16xf32, #tpu.memory_space<vmem>>, vector<16x16xf32>
    tpu.vector_store %arg24[%c0_208, %c0_209], %459 {strides = array<i32>} : memref<16x16xf32, #tpu.memory_space<vmem>>, vector<16x16xf32>,
    %461 = vector.extract_strided_slice %144 {offsets = [96, 0], sizes = [32, 16], strides = [1, 1]} : vector<128x16xbf16> to vector<32x16xbf16>
    %cst_210 = arith.constant dense<0.000000e+00> : vector<16x16xf32>
    %462 = tpu.matmul %140, %461, %cst_210 {dimension_numbers = #tpu.dot_dimension_numbers<[1], [0], [0], [1], [0, 0, 1, 1], [], []>} : vector<16x32xbf16>, vector<32x16xbf16>, vector<16x16xf32> -> vector<16x16xf32>
    %463 = vector.extract_strided_slice %145 {offsets = [96, 0], sizes = [32, 16], strides = [1, 1]} : vector<128x16xbf16> to vector<32x16xbf16>
    %cst_211 = arith.constant dense<0.000000e+00> : vector<16x16xf32>
    %464 = tpu.matmul %140, %463, %cst_211 {dimension_numbers = #tpu.dot_dimension_numbers<[1], [0], [0], [1], [0, 0, 1, 1], [], []>} : vector<16x32xbf16>, vector<32x16xbf16>, vector<16x16xf32> -> vector<16x16xf32>
    %c4_i32_212 = arith.constant 4 : i32
    %465 = arith.muli %arg0, %c4_i32_212 : i32
    %c3_i32 = arith.constant 3 : i32
    %466 = arith.addi %465, %c3_i32 : i32
    %c5_i32_213 = arith.constant 5 : i32
    %467 = arith.cmpi slt, %466, %c5_i32_213 : i32
    %468 = arith.extui %467 : i1 to i32
    %469 = arith.sitofp %468 : i32 to f32
    %c0_214 = arith.constant 0 : index
    %c0_215 = arith.constant 0 : index
    %c0_216 = arith.constant 0 : index
    %470 = vector.load %arg6[%c0_214, %c0_215, %c0_216] : memref<1x16x16xbf16, #tpu.memory_space<vmem>>, vector<1x16x16xbf16>
    %471 = vector.shape_cast %470 : vector<1x16x16xbf16> to vector<16x16xbf16>
    %472 = arith.extf %471 : vector<16x16xbf16> to vector<16x16xf32>
    %c0_217 = arith.constant 0 : index
    %c0_218 = arith.constant 0 : index
    %c0_219 = arith.constant 0 : index
    %473 = vector.load %arg10[%c0_217, %c0_218, %c0_219] : memref<1x16x16xbf16, #tpu.memory_space<vmem>>, vector<1x16x16xbf16>
    %474 = vector.shape_cast %473 : vector<1x16x16xbf16> to vector<16x16xbf16>
    %475 = arith.extf %474 : vector<16x16xbf16> to vector<16x16xf32>
    %476 = arith.negf %472 : vector<16x16xf32>
    %477 = math.exp %476 : vector<16x16xf32>
    %cst_220 = arith.constant 1.000000e+00 : f32
    %478 = vector.broadcast %cst_220 : f32 to vector<16x16xf32>
    %479 = arith.addf %478, %477 : vector<16x16xf32>
    %480 = arith.divf %478, %479 : vector<16x16xf32>
    %481 = arith.negf %475 : vector<16x16xf32>
    %482 = math.exp %481 : vector<16x16xf32>
    %cst_221 = arith.constant 1.000000e+00 : f32
    %483 = vector.broadcast %cst_221 : f32 to vector<16x16xf32>
    %484 = arith.addf %483, %482 : vector<16x16xf32>
    %485 = arith.divf %483, %484 : vector<16x16xf32>
    %486 = arith.mulf %480, %462 : vector<16x16xf32>
    %cst_222 = arith.constant dense<0.000000e+00> : vector<16xf32>
    %487 = vector.multi_reduction <add>, %486, %cst_222 [1] : vector<16x16xf32> to vector<16xf32>
    %488 = vector.shape_cast %487 : vector<16xf32> to vector<16x1xf32>
    %cst_223 = arith.constant dense<0.000000e+00> : vector<1xf32>
    %489 = vector.multi_reduction <add>, %488, %cst_223 [0] : vector<16x1xf32> to vector<1xf32>
    %490 = vector.shape_cast %489 : vector<1xf32> to vector<1x1xf32>
    %cst_224 = arith.constant 2.000000e+00 : f32
    %491 = vector.broadcast %cst_224 : f32 to vector<1x1xf32>
    %492 = arith.mulf %491, %490 : vector<1x1xf32>
    %493 = arith.mulf %480, %480 : vector<16x16xf32>
    %494 = arith.mulf %462, %462 : vector<16x16xf32>
    %495 = arith.addf %493, %494 : vector<16x16xf32>
    %cst_225 = arith.constant dense<0.000000e+00> : vector<16xf32>
    %496 = vector.multi_reduction <add>, %495, %cst_225 [1] : vector<16x16xf32> to vector<16xf32>
    %497 = vector.shape_cast %496 : vector<16xf32> to vector<16x1xf32>
    %cst_226 = arith.constant dense<0.000000e+00> : vector<1xf32>
    %498 = vector.multi_reduction <add>, %497, %cst_226 [0] : vector<16x1xf32> to vector<1xf32>
    %499 = vector.shape_cast %498 : vector<1xf32> to vector<1x1xf32>
    %500 = arith.mulf %485, %464 : vector<16x16xf32>
    %cst_227 = arith.constant dense<0.000000e+00> : vector<16xf32>
    %501 = vector.multi_reduction <add>, %500, %cst_227 [1] : vector<16x16xf32> to vector<16xf32>
    %502 = vector.shape_cast %501 : vector<16xf32> to vector<16x1xf32>
    %cst_228 = arith.constant dense<0.000000e+00> : vector<1xf32>
    %503 = vector.multi_reduction <add>, %502, %cst_228 [0] : vector<16x1xf32> to vector<1xf32>
    %504 = vector.shape_cast %503 : vector<1xf32> to vector<1x1xf32>
    %cst_229 = arith.constant 2.000000e+00 : f32
    %505 = vector.broadcast %cst_229 : f32 to vector<1x1xf32>
    %506 = arith.mulf %505, %504 : vector<1x1xf32>
    %507 = arith.mulf %485, %485 : vector<16x16xf32>
    %508 = arith.mulf %464, %464 : vector<16x16xf32>
    %509 = arith.addf %507, %508 : vector<16x16xf32>
    %cst_230 = arith.constant dense<0.000000e+00> : vector<16xf32>
    %510 = vector.multi_reduction <add>, %509, %cst_230 [1] : vector<16x16xf32> to vector<16xf32>
    %511 = vector.shape_cast %510 : vector<16xf32> to vector<16x1xf32>
    %cst_231 = arith.constant dense<0.000000e+00> : vector<1xf32>
    %512 = vector.multi_reduction <add>, %511, %cst_231 [0] : vector<16x1xf32> to vector<1xf32>
    %513 = vector.shape_cast %512 : vector<1xf32> to vector<1x1xf32>
    %c0_232 = arith.constant 0 : index
    %c0_233 = arith.constant 0 : index
    %514 = vector.load %arg20[%c0_232, %c0_233] : memref<1x1xf32, #tpu.memory_space<vmem>>, vector<1x1xf32>
    %cst_234 = arith.constant 9.99999974E-5 : f32
    %515 = vector.broadcast %cst_234 : f32 to vector<1x1xf32>
    %516 = arith.addf %499, %515 : vector<1x1xf32>
    %517 = arith.divf %492, %516 : vector<1x1xf32>
    %cst_235 = arith.constant 1.000000e+00 : f32
    %518 = vector.broadcast %cst_235 : f32 to vector<1x1xf32>
    %519 = arith.subf %518, %517 : vector<1x1xf32>
    %520 = vector.broadcast %469 : f32 to vector<1x1xf32>
    %521 = arith.mulf %520, %519 : vector<1x1xf32>
    %522 = arith.addf %514, %521 : vector<1x1xf32>
    %c0_236 = arith.constant 0 : index
    %c0_237 = arith.constant 0 : index
    %523 = vector.load %arg20[%c0_236, %c0_237] : memref<1x1xf32, #tpu.memory_space<vmem>>, vector<1x1xf32>
    tpu.vector_store %arg20[%c0_236, %c0_237], %522 {strides = array<i32>} : memref<1x1xf32, #tpu.memory_space<vmem>>, vector<1x1xf32>,
    %c0_238 = arith.constant 0 : index
    %c0_239 = arith.constant 0 : index
    %524 = vector.load %arg21[%c0_238, %c0_239] : memref<1x1xf32, #tpu.memory_space<vmem>>, vector<1x1xf32>
    %cst_240 = arith.constant 9.99999974E-5 : f32
    %525 = vector.broadcast %cst_240 : f32 to vector<1x1xf32>
    %526 = arith.addf %513, %525 : vector<1x1xf32>
    %527 = arith.divf %506, %526 : vector<1x1xf32>
    %cst_241 = arith.constant 1.000000e+00 : f32
    %528 = vector.broadcast %cst_241 : f32 to vector<1x1xf32>
    %529 = arith.subf %528, %527 : vector<1x1xf32>
    %530 = vector.broadcast %469 : f32 to vector<1x1xf32>
    %531 = arith.mulf %530, %529 : vector<1x1xf32>
    %532 = arith.addf %524, %531 : vector<1x1xf32>
    %c0_242 = arith.constant 0 : index
    %c0_243 = arith.constant 0 : index
    %533 = vector.load %arg21[%c0_242, %c0_243] : memref<1x1xf32, #tpu.memory_space<vmem>>, vector<1x1xf32>
    tpu.vector_store %arg21[%c0_242, %c0_243], %532 {strides = array<i32>} : memref<1x1xf32, #tpu.memory_space<vmem>>, vector<1x1xf32>,
    %c0_244 = arith.constant 0 : index
    %c0_245 = arith.constant 0 : index
    %534 = vector.load %arg23[%c0_244, %c0_245] : memref<16x16xf32, #tpu.memory_space<vmem>>, vector<16x16xf32>
    %cst_246 = arith.constant 0.000000e+00 : f32
    %535 = vector.broadcast %cst_246 : f32 to vector<16x16xf32>
    %536 = arith.cmpf oge, %472, %535 : vector<16x16xf32>
    %cst_247 = arith.constant 1.000000e+00 : f32
    %537 = vector.broadcast %cst_247 : f32 to vector<16x16xf32>
    %538 = arith.subf %537, %480 : vector<16x16xf32>
    %539 = arith.select %536, %480, %538 : vector<16x16xi1>, vector<16x16xf32>
    %cst_248 = arith.constant 0.000000e+00 : f32
    %540 = vector.broadcast %cst_248 : f32 to vector<16x16xf32>
    %541 = arith.maximumf %472, %540 : vector<16x16xf32>
    %542 = arith.mulf %472, %462 : vector<16x16xf32>
    %543 = arith.subf %541, %542 : vector<16x16xf32>
    %544 = math.log %539 : vector<16x16xf32>
    %545 = arith.subf %543, %544 : vector<16x16xf32>
    %546 = vector.broadcast %469 : f32 to vector<16x16xf32>
    %547 = arith.mulf %546, %545 : vector<16x16xf32>
    %548 = arith.addf %534, %547 : vector<16x16xf32>
    %c0_249 = arith.constant 0 : index
    %c0_250 = arith.constant 0 : index
    %549 = vector.load %arg23[%c0_249, %c0_250] : memref<16x16xf32, #tpu.memory_space<vmem>>, vector<16x16xf32>
    tpu.vector_store %arg23[%c0_249, %c0_250], %548 {strides = array<i32>} : memref<16x16xf32, #tpu.memory_space<vmem>>, vector<16x16xf32>,
    %c0_251 = arith.constant 0 : index
    %c0_252 = arith.constant 0 : index
    %550 = vector.load %arg24[%c0_251, %c0_252] : memref<16x16xf32, #tpu.memory_space<vmem>>, vector<16x16xf32>
    %cst_253 = arith.constant 0.000000e+00 : f32
    %551 = vector.broadcast %cst_253 : f32 to vector<16x16xf32>
    %552 = arith.cmpf oge, %475, %551 : vector<16x16xf32>
    %cst_254 = arith.constant 1.000000e+00 : f32
    %553 = vector.broadcast %cst_254 : f32 to vector<16x16xf32>
    %554 = arith.subf %553, %485 : vector<16x16xf32>
    %555 = arith.select %552, %485, %554 : vector<16x16xi1>, vector<16x16xf32>
    %cst_255 = arith.constant 0.000000e+00 : f32
    %556 = vector.broadcast %cst_255 : f32 to vector<16x16xf32>
    %557 = arith.maximumf %475, %556 : vector<16x16xf32>
    %558 = arith.mulf %475, %464 : vector<16x16xf32>
    %559 = arith.subf %557, %558 : vector<16x16xf32>
    %560 = math.log %555 : vector<16x16xf32>
    %561 = arith.subf %559, %560 : vector<16x16xf32>
    %562 = vector.broadcast %469 : f32 to vector<16x16xf32>
    %563 = arith.mulf %562, %561 : vector<16x16xf32>
    %564 = arith.addf %550, %563 : vector<16x16xf32>
    %c0_256 = arith.constant 0 : index
    %c0_257 = arith.constant 0 : index
    %565 = vector.load %arg24[%c0_256, %c0_257] : memref<16x16xf32, #tpu.memory_space<vmem>>, vector<16x16xf32>
    tpu.vector_store %arg24[%c0_256, %c0_257], %564 {strides = array<i32>} : memref<16x16xf32, #tpu.memory_space<vmem>>, vector<16x16xf32>,
    %c1_i32_258 = arith.constant 1 : i32
    %566 = arith.cmpi eq, %arg0, %c1_i32_258 : i32
    %567 = arith.extui %566 : i1 to i32
    %c0_i32_259 = arith.constant 0 : i32
    %568 = arith.cmpi ne, %567, %c0_i32_259 : i32
    scf.if %568 {
      %c0_260 = arith.constant 0 : index
      %c0_261 = arith.constant 0 : index
      %569 = vector.load %arg20[%c0_260, %c0_261] : memref<1x1xf32, #tpu.memory_space<vmem>>, vector<1x1xf32>
      %570 = vector.extract %569[0, 0] : f32 from vector<1x1xf32>
      %cst_262 = arith.constant 2.000000e-01 : f32
      %571 = arith.mulf %570, %cst_262 : f32
      %c0_263 = arith.constant 0 : index
      %c0_264 = arith.constant 0 : index
      %572 = vector.load %arg21[%c0_263, %c0_264] : memref<1x1xf32, #tpu.memory_space<vmem>>, vector<1x1xf32>
      %573 = vector.extract %572[0, 0] : f32 from vector<1x1xf32>
      %cst_265 = arith.constant 2.000000e-01 : f32
      %574 = arith.mulf %573, %cst_265 : f32
      %c0_266 = arith.constant 0 : index
      %c0_267 = arith.constant 0 : index
      %575 = vector.load %arg23[%c0_266, %c0_267] : memref<16x16xf32, #tpu.memory_space<vmem>>, vector<16x16xf32>
      %cst_268 = arith.constant dense<0.000000e+00> : vector<16xf32>
      %576 = vector.multi_reduction <add>, %575, %cst_268 [1] : vector<16x16xf32> to vector<16xf32>
      %577 = vector.shape_cast %576 : vector<16xf32> to vector<16x1xf32>
      %cst_269 = arith.constant dense<0.000000e+00> : vector<1xf32>
      %578 = vector.multi_reduction <add>, %577, %cst_269 [0] : vector<16x1xf32> to vector<1xf32>
      %579 = vector.shape_cast %578 : vector<1xf32> to vector<1x1xf32>
      %580 = vector.extract %579[0, 0] : f32 from vector<1x1xf32>
      %cst_270 = arith.constant 7.812500e-04 : f32
      %581 = arith.mulf %580, %cst_270 : f32
      %c0_271 = arith.constant 0 : index
      %c0_272 = arith.constant 0 : index
      %582 = vector.load %arg24[%c0_271, %c0_272] : memref<16x16xf32, #tpu.memory_space<vmem>>, vector<16x16xf32>
      %cst_273 = arith.constant dense<0.000000e+00> : vector<16xf32>
      %583 = vector.multi_reduction <add>, %582, %cst_273 [1] : vector<16x16xf32> to vector<16xf32>
      %584 = vector.shape_cast %583 : vector<16xf32> to vector<16x1xf32>
      %cst_274 = arith.constant dense<0.000000e+00> : vector<1xf32>
      %585 = vector.multi_reduction <add>, %584, %cst_274 [0] : vector<16x1xf32> to vector<1xf32>
      %586 = vector.shape_cast %585 : vector<1xf32> to vector<1x1xf32>
      %587 = vector.extract %586[0, 0] : f32 from vector<1x1xf32>
      %cst_275 = arith.constant 7.812500e-04 : f32
      %588 = arith.mulf %587, %cst_275 : f32
      %c0_276 = arith.constant 0 : index
      %c0_277 = arith.constant 0 : index
      %589 = vector.load %arg22[%c0_276, %c0_277] : memref<1x1xf32, #tpu.memory_space<vmem>>, vector<1x1xf32>
      %590 = vector.extract %589[0, 0] : f32 from vector<1x1xf32>
      %591 = tpu.iota {dimensions = array<i32: 0>} : vector<8x128xi32>
      %592 = tpu.iota {dimensions = array<i32: 1>} : vector<8x128xi32>
      %c0_i32_278 = arith.constant 0 : i32
      %593 = vector.broadcast %c0_i32_278 : i32 to vector<8x128xi32>
      %594 = arith.cmpi eq, %591, %593 : vector<8x128xi32>
      %c0_i32_279 = arith.constant 0 : i32
      %595 = vector.broadcast %c0_i32_279 : i32 to vector<8x128xi32>
      %596 = arith.cmpi eq, %592, %595 : vector<8x128xi32>
      %597 = arith.andi %594, %596 : vector<8x128xi1>
      %cst_280 = arith.constant 0.000000e+00 : f32
      %598 = vector.broadcast %571 : f32 to vector<8x128xf32>
      %599 = vector.broadcast %cst_280 : f32 to vector<8x128xf32>
      %600 = arith.select %597, %598, %599 : vector<8x128xi1>, vector<8x128xf32>
      %c1_i32_281 = arith.constant 1 : i32
      %601 = vector.broadcast %c1_i32_281 : i32 to vector<8x128xi32>
      %602 = arith.cmpi eq, %592, %601 : vector<8x128xi32>
      %603 = arith.andi %594, %602 : vector<8x128xi1>
      %cst_282 = arith.constant 0.000000e+00 : f32
      %604 = vector.broadcast %581 : f32 to vector<8x128xf32>
      %605 = vector.broadcast %cst_282 : f32 to vector<8x128xf32>
      %606 = arith.select %603, %604, %605 : vector<8x128xi1>, vector<8x128xf32>
      %607 = arith.addf %600, %606 : vector<8x128xf32>
      %c2_i32_283 = arith.constant 2 : i32
      %608 = vector.broadcast %c2_i32_283 : i32 to vector<8x128xi32>
      %609 = arith.cmpi eq, %592, %608 : vector<8x128xi32>
      %610 = arith.andi %594, %609 : vector<8x128xi1>
      %cst_284 = arith.constant 0.000000e+00 : f32
      %611 = vector.broadcast %574 : f32 to vector<8x128xf32>
      %612 = vector.broadcast %cst_284 : f32 to vector<8x128xf32>
      %613 = arith.select %610, %611, %612 : vector<8x128xi1>, vector<8x128xf32>
      %614 = arith.addf %607, %613 : vector<8x128xf32>
      %c3_i32_285 = arith.constant 3 : i32
      %615 = vector.broadcast %c3_i32_285 : i32 to vector<8x128xi32>
      %616 = arith.cmpi eq, %592, %615 : vector<8x128xi32>
      %617 = arith.andi %594, %616 : vector<8x128xi1>
      %cst_286 = arith.constant 0.000000e+00 : f32
      %618 = vector.broadcast %588 : f32 to vector<8x128xf32>
      %619 = vector.broadcast %cst_286 : f32 to vector<8x128xf32>
      %620 = arith.select %617, %618, %619 : vector<8x128xi1>, vector<8x128xf32>
      %621 = arith.addf %614, %620 : vector<8x128xf32>
      %c4_i32_287 = arith.constant 4 : i32
      %622 = vector.broadcast %c4_i32_287 : i32 to vector<8x128xi32>
      %623 = arith.cmpi eq, %592, %622 : vector<8x128xi32>
      %624 = arith.andi %594, %623 : vector<8x128xi1>
      %cst_288 = arith.constant 0.000000e+00 : f32
      %625 = vector.broadcast %590 : f32 to vector<8x128xf32>
      %626 = vector.broadcast %cst_288 : f32 to vector<8x128xf32>
      %627 = arith.select %624, %625, %626 : vector<8x128xi1>, vector<8x128xf32>
      %628 = arith.addf %621, %627 : vector<8x128xf32>
      %c0_289 = arith.constant 0 : index
      %c0_290 = arith.constant 0 : index
      %629 = vector.load %arg19[%c0_289, %c0_290] : memref<8x128xf32, #tpu.memory_space<vmem>>, vector<8x128xf32>
      tpu.vector_store %arg19[%c0_289, %c0_290], %628 {strides = array<i32>} : memref<8x128xf32, #tpu.memory_space<vmem>>, vector<8x128xf32>,
    } else {
    }
    return
  }
  func.func @transform_0(%arg0: i32, %arg1: memref<8xi32, #tpu.memory_space<smem>>, %arg2: memref<8xi32, #tpu.memory_space<smem>>) -> (i32, i32, i32) {
    %c4_i32 = arith.constant 4 : i32
    %0 = arith.muli %arg0, %c4_i32 : i32
    %c0_i32 = arith.constant 0 : i32
    %1 = arith.addi %0, %c0_i32 : i32
    %2 = arith.index_cast %1 : i32 to index
    %3 = memref.load %arg1[%2] : memref<8xi32, #tpu.memory_space<smem>>
    %c0_i32_0 = arith.constant 0 : i32
    %c0_i32_1 = arith.constant 0 : i32
    %c0_i32_2 = arith.constant 0 : i32
    return %3, %c0_i32_0, %c0_i32_1 : i32, i32, i32
  }
  func.func @transform_1(%arg0: i32, %arg1: memref<8xi32, #tpu.memory_space<smem>>, %arg2: memref<8xi32, #tpu.memory_space<smem>>) -> (i32, i32, i32) {
    %c4_i32 = arith.constant 4 : i32
    %0 = arith.muli %arg0, %c4_i32 : i32
    %c1_i32 = arith.constant 1 : i32
    %1 = arith.addi %0, %c1_i32 : i32
    %2 = arith.index_cast %1 : i32 to index
    %3 = memref.load %arg1[%2] : memref<8xi32, #tpu.memory_space<smem>>
    %c0_i32 = arith.constant 0 : i32
    %c0_i32_0 = arith.constant 0 : i32
    %c0_i32_1 = arith.constant 0 : i32
    return %3, %c0_i32, %c0_i32_0 : i32, i32, i32
  }
  func.func @transform_2(%arg0: i32, %arg1: memref<8xi32, #tpu.memory_space<smem>>, %arg2: memref<8xi32, #tpu.memory_space<smem>>) -> (i32, i32, i32) {
    %c4_i32 = arith.constant 4 : i32
    %0 = arith.muli %arg0, %c4_i32 : i32
    %c2_i32 = arith.constant 2 : i32
    %1 = arith.addi %0, %c2_i32 : i32
    %2 = arith.index_cast %1 : i32 to index
    %3 = memref.load %arg1[%2] : memref<8xi32, #tpu.memory_space<smem>>
    %c0_i32 = arith.constant 0 : i32
    %c0_i32_0 = arith.constant 0 : i32
    %c0_i32_1 = arith.constant 0 : i32
    return %3, %c0_i32, %c0_i32_0 : i32, i32, i32
  }
  func.func @transform_3(%arg0: i32, %arg1: memref<8xi32, #tpu.memory_space<smem>>, %arg2: memref<8xi32, #tpu.memory_space<smem>>) -> (i32, i32, i32) {
    %c4_i32 = arith.constant 4 : i32
    %0 = arith.muli %arg0, %c4_i32 : i32
    %c3_i32 = arith.constant 3 : i32
    %1 = arith.addi %0, %c3_i32 : i32
    %2 = arith.index_cast %1 : i32 to index
    %3 = memref.load %arg1[%2] : memref<8xi32, #tpu.memory_space<smem>>
    %c0_i32 = arith.constant 0 : i32
    %c0_i32_0 = arith.constant 0 : i32
    %c0_i32_1 = arith.constant 0 : i32
    return %3, %c0_i32, %c0_i32_0 : i32, i32, i32
  }
  func.func @transform_4(%arg0: i32, %arg1: memref<8xi32, #tpu.memory_space<smem>>, %arg2: memref<8xi32, #tpu.memory_space<smem>>) -> (i32, i32, i32) {
    %c4_i32 = arith.constant 4 : i32
    %0 = arith.muli %arg0, %c4_i32 : i32
    %c0_i32 = arith.constant 0 : i32
    %1 = arith.addi %0, %c0_i32 : i32
    %2 = arith.index_cast %1 : i32 to index
    %3 = memref.load %arg1[%2] : memref<8xi32, #tpu.memory_space<smem>>
    %c0_i32_0 = arith.constant 0 : i32
    %c0_i32_1 = arith.constant 0 : i32
    %c0_i32_2 = arith.constant 0 : i32
    return %3, %c0_i32_0, %c0_i32_1 : i32, i32, i32
  }
  func.func @transform_5(%arg0: i32, %arg1: memref<8xi32, #tpu.memory_space<smem>>, %arg2: memref<8xi32, #tpu.memory_space<smem>>) -> (i32, i32, i32) {
    %c4_i32 = arith.constant 4 : i32
    %0 = arith.muli %arg0, %c4_i32 : i32
    %c1_i32 = arith.constant 1 : i32
    %1 = arith.addi %0, %c1_i32 : i32
    %2 = arith.index_cast %1 : i32 to index
    %3 = memref.load %arg1[%2] : memref<8xi32, #tpu.memory_space<smem>>
    %c0_i32 = arith.constant 0 : i32
    %c0_i32_0 = arith.constant 0 : i32
    %c0_i32_1 = arith.constant 0 : i32
    return %3, %c0_i32, %c0_i32_0 : i32, i32, i32
  }
  func.func @transform_6(%arg0: i32, %arg1: memref<8xi32, #tpu.memory_space<smem>>, %arg2: memref<8xi32, #tpu.memory_space<smem>>) -> (i32, i32, i32) {
    %c4_i32 = arith.constant 4 : i32
    %0 = arith.muli %arg0, %c4_i32 : i32
    %c2_i32 = arith.constant 2 : i32
    %1 = arith.addi %0, %c2_i32 : i32
    %2 = arith.index_cast %1 : i32 to index
    %3 = memref.load %arg1[%2] : memref<8xi32, #tpu.memory_space<smem>>
    %c0_i32 = arith.constant 0 : i32
    %c0_i32_0 = arith.constant 0 : i32
    %c0_i32_1 = arith.constant 0 : i32
    return %3, %c0_i32, %c0_i32_0 : i32, i32, i32
  }
  func.func @transform_7(%arg0: i32, %arg1: memref<8xi32, #tpu.memory_space<smem>>, %arg2: memref<8xi32, #tpu.memory_space<smem>>) -> (i32, i32, i32) {
    %c4_i32 = arith.constant 4 : i32
    %0 = arith.muli %arg0, %c4_i32 : i32
    %c3_i32 = arith.constant 3 : i32
    %1 = arith.addi %0, %c3_i32 : i32
    %2 = arith.index_cast %1 : i32 to index
    %3 = memref.load %arg1[%2] : memref<8xi32, #tpu.memory_space<smem>>
    %c0_i32 = arith.constant 0 : i32
    %c0_i32_0 = arith.constant 0 : i32
    %c0_i32_1 = arith.constant 0 : i32
    return %3, %c0_i32, %c0_i32_0 : i32, i32, i32
  }
  func.func @transform_8(%arg0: i32, %arg1: memref<8xi32, #tpu.memory_space<smem>>, %arg2: memref<8xi32, #tpu.memory_space<smem>>) -> (i32, i32, i32) {
    %c4_i32 = arith.constant 4 : i32
    %0 = arith.muli %arg0, %c4_i32 : i32
    %c0_i32 = arith.constant 0 : i32
    %1 = arith.addi %0, %c0_i32 : i32
    %2 = arith.index_cast %1 : i32 to index
    %3 = memref.load %arg2[%2] : memref<8xi32, #tpu.memory_space<smem>>
    %c0_i32_0 = arith.constant 0 : i32
    %c0_i32_1 = arith.constant 0 : i32
    %c0_i32_2 = arith.constant 0 : i32
    return %3, %c0_i32_0, %c0_i32_1 : i32, i32, i32
  }
  func.func @transform_9(%arg0: i32, %arg1: memref<8xi32, #tpu.memory_space<smem>>, %arg2: memref<8xi32, #tpu.memory_space<smem>>) -> (i32, i32, i32) {
    %c4_i32 = arith.constant 4 : i32
    %0 = arith.muli %arg0, %c4_i32 : i32
    %c1_i32 = arith.constant 1 : i32
    %1 = arith.addi %0, %c1_i32 : i32
    %2 = arith.index_cast %1 : i32 to index
    %3 = memref.load %arg2[%2] : memref<8xi32, #tpu.memory_space<smem>>
    %c0_i32 = arith.constant 0 : i32
    %c0_i32_0 = arith.constant 0 : i32
    %c0_i32_1 = arith.constant 0 : i32
    return %3, %c0_i32, %c0_i32_0 : i32, i32, i32
  }
  func.func @transform_10(%arg0: i32, %arg1: memref<8xi32, #tpu.memory_space<smem>>, %arg2: memref<8xi32, #tpu.memory_space<smem>>) -> (i32, i32, i32) {
    %c4_i32 = arith.constant 4 : i32
    %0 = arith.muli %arg0, %c4_i32 : i32
    %c2_i32 = arith.constant 2 : i32
    %1 = arith.addi %0, %c2_i32 : i32
    %2 = arith.index_cast %1 : i32 to index
    %3 = memref.load %arg2[%2] : memref<8xi32, #tpu.memory_space<smem>>
    %c0_i32 = arith.constant 0 : i32
    %c0_i32_0 = arith.constant 0 : i32
    %c0_i32_1 = arith.constant 0 : i32
    return %3, %c0_i32, %c0_i32_0 : i32, i32, i32
  }
  func.func @transform_11(%arg0: i32, %arg1: memref<8xi32, #tpu.memory_space<smem>>, %arg2: memref<8xi32, #tpu.memory_space<smem>>) -> (i32, i32, i32) {
    %c4_i32 = arith.constant 4 : i32
    %0 = arith.muli %arg0, %c4_i32 : i32
    %c3_i32 = arith.constant 3 : i32
    %1 = arith.addi %0, %c3_i32 : i32
    %2 = arith.index_cast %1 : i32 to index
    %3 = memref.load %arg2[%2] : memref<8xi32, #tpu.memory_space<smem>>
    %c0_i32 = arith.constant 0 : i32
    %c0_i32_0 = arith.constant 0 : i32
    %c0_i32_1 = arith.constant 0 : i32
    return %3, %c0_i32, %c0_i32_0 : i32, i32, i32
  }
  func.func @transform_12(%arg0: i32, %arg1: memref<8xi32, #tpu.memory_space<smem>>, %arg2: memref<8xi32, #tpu.memory_space<smem>>) -> (i32, i32) {
    %c0_i32 = arith.constant 0 : i32
    %c0_i32_0 = arith.constant 0 : i32
    %c0_i32_1 = arith.constant 0 : i32
    return %c0_i32, %c0_i32_0 : i32, i32
  }
  func.func @transform_13(%arg0: i32, %arg1: memref<8xi32, #tpu.memory_space<smem>>, %arg2: memref<8xi32, #tpu.memory_space<smem>>) -> (i32, i32) {
    %c0_i32 = arith.constant 0 : i32
    %c0_i32_0 = arith.constant 0 : i32
    %c0_i32_1 = arith.constant 0 : i32
    return %c0_i32, %c0_i32_0 : i32, i32
  }
  func.func @transform_14(%arg0: i32, %arg1: memref<8xi32, #tpu.memory_space<smem>>, %arg2: memref<8xi32, #tpu.memory_space<smem>>) -> (i32, i32) {
    %c0_i32 = arith.constant 0 : i32
    %c0_i32_0 = arith.constant 0 : i32
    %c0_i32_1 = arith.constant 0 : i32
    return %c0_i32, %c0_i32_0 : i32, i32
  }
  func.func @transform_15(%arg0: i32, %arg1: memref<8xi32, #tpu.memory_space<smem>>, %arg2: memref<8xi32, #tpu.memory_space<smem>>) -> (i32, i32) {
    %c0_i32 = arith.constant 0 : i32
    %c0_i32_0 = arith.constant 0 : i32
    %c0_i32_1 = arith.constant 0 : i32
    return %c0_i32, %c0_i32_0 : i32, i32
  }
  func.func @transform_16(%arg0: i32, %arg1: memref<8xi32, #tpu.memory_space<smem>>, %arg2: memref<8xi32, #tpu.memory_space<smem>>) -> (i32, i32) {
    %c0_i32 = arith.constant 0 : i32
    %c0_i32_0 = arith.constant 0 : i32
    %c0_i32_1 = arith.constant 0 : i32
    return %c0_i32, %c0_i32_0 : i32, i32
  }
}

</mosaic_0001>

<llo_original>
// kernel: tpu_custom_call.1
$region0: #{tpu_custom_call.1}
  #allocation0 [shape = 'u32[]', space=smem, size = 0x4, offset = 0x4, fixed_abs, tag = 'smem constant byte address 0x4 - core index']
  #allocation1 [shape = 'u32[144,128]{1,0:T(1,128)}', space=vmem, size = 0x12000, scoped, tag = 'internal scratch']
  #allocation2 [shape = 'f32[1,1]{1,0:T(1,128)}', space=vmem, size = 0x200, scoped, tag = 'scratch operand']
  #allocation3 [shape = 'f32[1,1]{1,0:T(1,128)}', space=vmem, size = 0x200, scoped, tag = 'scratch operand']
  #allocation4 [shape = 'f32[1,1]{1,0:T(1,128)}', space=vmem, size = 0x200, scoped, tag = 'scratch operand']
  #allocation5 [shape = 'f32[16,16]{1,0:T(8,128)}', space=vmem, size = 0x2000, scoped, tag = 'scratch operand']
  #allocation6 [shape = 'f32[16,16]{1,0:T(8,128)}', space=vmem, size = 0x2000, scoped, tag = 'scratch operand']
  #allocation7 [shape = 's32[1]{0}', space=sflag, size = 0x4, scoped, tag = 'scoped memory for tpu_custom_call.1']
  #allocation8 [shape = 'u8[512]{0}', space=smem, size = 0x200, scoped, tag = 'prefetched SMEM operand 0']
  #allocation9 [shape = 'u8[512]{0}', space=smem, size = 0x200, scoped, tag = 'prefetched SMEM operand 1']
  %s0 = inlined_call_operand.vmem [shape: s32[8], index: 0, kind: input, shape index: {}]
  %s1 = inlined_call_operand.vmem [shape: s32[8], index: 1, kind: input, shape index: {}]
  %s2 = inlined_call_operand.hbm [shape: bf16[16,16,16], index: 2, kind: input, shape index: {}]
  %s3 = inlined_call_operand.hbm [shape: bf16[16,16,16], index: 3, kind: input, shape index: {}]
  %s4 = inlined_call_operand.hbm [shape: bf16[16,16,16], index: 4, kind: input, shape index: {}]
  %s5 = inlined_call_operand.hbm [shape: bf16[16,16,16], index: 5, kind: input, shape index: {}]
  %s6 = inlined_call_operand.hbm [shape: bf16[16,16,16], index: 6, kind: input, shape index: {}]
  %s7 = inlined_call_operand.hbm [shape: bf16[16,16,16], index: 7, kind: input, shape index: {}]
  %s8 = inlined_call_operand.hbm [shape: bf16[16,16,16], index: 8, kind: input, shape index: {}]
  %s9 = inlined_call_operand.hbm [shape: bf16[16,16,16], index: 9, kind: input, shape index: {}]
  %s10 = inlined_call_operand.hbm [shape: bf16[5,32,32], index: 10, kind: input, shape index: {}]
  %s11 = inlined_call_operand.hbm [shape: bf16[5,32,32], index: 11, kind: input, shape index: {}]
  %s12 = inlined_call_operand.hbm [shape: bf16[5,32,32], index: 12, kind: input, shape index: {}]
  %s13 = inlined_call_operand.hbm [shape: bf16[5,32,32], index: 13, kind: input, shape index: {}]
  %s14 = inlined_call_operand.vmem [shape: bf16[16,32], index: 14, kind: input, shape index: {}]
  %s15 = inlined_call_operand.vmem [shape: bf16[32,16], index: 15, kind: input, shape index: {}]
  %s16 = inlined_call_operand.vmem [shape: f32[2,8], index: 16, kind: input, shape index: {}]
  %s17 = inlined_call_operand.vmem [shape: f32[2,8], index: 17, kind: input, shape index: {}]
  %s18 = inlined_call_operand.hbm [shape: f32[8,128], index: 18, kind: output, shape index: {}]
  %s19 = sld [smem:[#allocation0]]
  $region153: #{tpu_custom_call.1} parent=0
    _
  %s21 = ssub.s32 1, %s19
  %s22 = scalar_select 0, %s21, %s19
  %s23 = sshll.u32 %s0, 4
  %s24 = int_to_ptr.vmem [resolvable:$true] %s23
  %26 = dma.vmem_to_smem %s24, 16, [#allocation8], [#allocation7]
  %s27 = sshll.u32 %s1, 4
  %s28 = int_to_ptr.vmem [resolvable:$true] %s27
  %30 = dma.vmem_to_smem %s28, 16, [#allocation9], [#allocation7]
  %31 = dma.done [#allocation7], 32
  %32 = sfence
  $region1: #{tpu_custom_call.1} parent=0
    #allocation10 [shape = 'u8[8192]{0}', space=vmem, size = 0x2000, scoped, tag = 'input window, operand 2']
    #allocation11 [shape = 's32[2]{0}', space=sflag, size = 0x8, scoped, tag = 'scoped memory for tpu_custom_call.1']
    #allocation12 [shape = 's32[2]{0}', space=sflag, size = 0x8, scoped, tag = 'scoped memory for tpu_custom_call.1']
    #allocation13 [shape = 'u8[8192]{0}', space=vmem, size = 0x2000, scoped, tag = 'input window, operand 3']
    #allocation14 [shape = 's32[2]{0}', space=sflag, size = 0x8, scoped, tag = 'scoped memory for tpu_custom_call.1']
    #allocation15 [shape = 'u8[8192]{0}', space=vmem, size = 0x2000, scoped, tag = 'input window, operand 4']
    #allocation16 [shape = 'u8[8192]{0}', space=vmem, size = 0x2000, scoped, tag = 'input window, operand 5']
    #allocation17 [shape = 's32[2]{0}', space=sflag, size = 0x8, scoped, tag = 'scoped memory for tpu_custom_call.1']
    #allocation18 [shape = 'u8[8192]{0}', space=vmem, size = 0x2000, scoped, tag = 'input window, operand 6']
    #allocation19 [shape = 'u8[8192]{0}', space=vmem, size = 0x2000, scoped, tag = 'input window, operand 7']
    #allocation20 [shape = 's32[2]{0}', space=sflag, size = 0x8, scoped, tag = 'scoped memory for tpu_custom_call.1']
    #allocation21 [shape = 'u8[8192]{0}', space=vmem, size = 0x2000, scoped, tag = 'input window, operand 8']
    #allocation22 [shape = 'u8[8192]{0}', space=vmem, size = 0x2000, scoped, tag = 'input window, operand 9']
    #allocation23 [shape = 's32[2]{0}', space=sflag, size = 0x8, scoped, tag = 'scoped memory for tpu_custom_call.1']
    #allocation24 [shape = 'u8[16384]{0}', space=vmem, size = 0x4000, scoped, tag = 'input window, operand 10']
    #allocation25 [shape = 'u8[16384]{0}', space=vmem, size = 0x4000, scoped, tag = 'input window, operand 11']
    #allocation26 [shape = 's32[2]{0}', space=sflag, size = 0x8, scoped, tag = 'scoped memory for tpu_custom_call.1']
    #allocation27 [shape = 'u8[16384]{0}', space=vmem, size = 0x4000, scoped, tag = 'input window, operand 12']
    #allocation28 [shape = 'u8[16384]{0}', space=vmem, size = 0x4000, scoped, tag = 'input window, operand 13']
    #allocation29 [shape = 's32[2]{0}', space=sflag, size = 0x8, scoped, tag = 'scoped memory for tpu_custom_call.1']
    #allocation30 [shape = 'u8[4096]{0}', space=vmem, size = 0x1000, scoped, tag = 'output window, operand 0, single buffered']
    %33 = vsyncpa [#allocation11], 0
    %s34 = scalar_lea.sflag [#allocation11], 1
    %35 = vsyncpa %s34, 0
    %36 = vsyncpa [#allocation14], 0
    %s37 = scalar_lea.sflag [#allocation14], 1
    %38 = vsyncpa %s37, 0
    %39 = vsyncpa [#allocation17], 0
    %s40 = scalar_lea.sflag [#allocation17], 1
    %41 = vsyncpa %s40, 0
    %42 = vsyncpa [#allocation20], 0
    %s43 = scalar_lea.sflag [#allocation20], 1
    %44 = vsyncpa %s43, 0
    %45 = vsyncpa [#allocation23], 0
    %s46 = scalar_lea.sflag [#allocation23], 1
    %47 = vsyncpa %s46, 0
    %48 = vsyncpa [#allocation26], 0
    %s49 = scalar_lea.sflag [#allocation26], 1
    %50 = vsyncpa %s49, 0
    %51 = vsyncpa [#allocation29], 0
    %s52 = scalar_lea.sflag [#allocation29], 1
    %53 = vsyncpa %s52, 0
    %54 = vsyncpa [#allocation12], 0
    loop: start=0, step=1, limit=4
    $region2: #{tpu_custom_call.1} parent=1 // loop_pre_header
      _
    $region3: #{tpu_custom_call.1} parent=1 // loop_header
      %s56 = sphi 0, %s60
      %p57 = scmp.ge.s32.totalorder %s56, 4
      %s70 = sphi 0, %s72
      %s73 = sphi 0, %s70
      %s74 = sphi 0, %s73
      %s90 = sphi 0, %s74
      %s102 = sphi 0, %s104
      %s105 = sphi 0, %s102
      %s106 = sphi 0, %s105
      %s122 = sphi 0, %s106
      %s134 = sphi 0, %s136
      %s137 = sphi 0, %s134
      %s138 = sphi 0, %s137
      %s154 = sphi 0, %s138
      %s166 = sphi 0, %s168
      %s169 = sphi 0, %s166
      %s170 = sphi 0, %s169
      %s186 = sphi 0, %s170
      %s196 = sphi 0, %s198
      %s199 = sphi 0, %s196
      %s200 = sphi 0, %s199
      %s216 = sphi 0, %s200
      %s228 = sphi 0, %s230
      %s231 = sphi 0, %s228
      %s232 = sphi 0, %s231
      %s248 = sphi 0, %s232
      %s260 = sphi 0, %s262
      %s263 = sphi 0, %s260
      %s264 = sphi 0, %s263
      %s280 = sphi 0, %s264
      %s292 = sphi 0, %s294
      %s295 = sphi 0, %s292
      %s296 = sphi 0, %s295
      %s312 = sphi 0, %s296
      %s322 = sphi 0, %s324
      %s325 = sphi 0, %s322
      %s326 = sphi 0, %s325
      %s342 = sphi 0, %s326
      %s354 = sphi 0, %s356
      %s357 = sphi 0, %s354
      %s358 = sphi 0, %s357
      %s374 = sphi 0, %s358
      %s386 = sphi 0, %s388
      %s389 = sphi 0, %s386
      %s390 = sphi 0, %s389
      %s406 = sphi 0, %s390
      %s418 = sphi 0, %s420
      %s421 = sphi 0, %s418
      %s422 = sphi 0, %s421
      %s438 = sphi 0, %s422
      %s442 = sphi 0, %s442
      %s444 = sphi 0, %s442
      %s445 = sphi 0, %s444
      %s459 = sphi 0, %s445
      %s463 = sphi 0, %s463
      %s465 = sphi 0, %s463
      %s466 = sphi 0, %s465
      %s480 = sphi 0, %s466
      %s484 = sphi 0, %s484
      %s486 = sphi 0, %s484
      %s487 = sphi 0, %s486
      %s501 = sphi 0, %s487
      %s505 = sphi 0, %s505
      %s507 = sphi 0, %s505
      %s508 = sphi 0, %s507
      %s522 = sphi 0, %s508
      %s526 = sphi 0, %s526
      %s528 = sphi 0, %s526
      %s529 = sphi 0, %s528
      %s543 = sphi 0, %s529
    $region4: #{tpu_custom_call.1} parent=1 // loop_header_branch
      %59 = sbr.rel (%p57) target = $region8
    $region5: #{tpu_custom_call.1} parent=1 // loop_body
      %s61 = ssub.s32 %s56, 1
      %s62 = ssub.s32 %s56, 2
      %s63 = sadd.s32 %s56, 1
      %s64 = smul.u32 %s56, 4
      %s65 = sld [smem:[#allocation8 + %s64]]
      %s66 = smul.u32 %s63, 4
      %s67 = sld [smem:[#allocation8 + %s66]]
      %s68 = ssub.s32 %s65, %s67
      %p69 = scmp.eq.s32.totalorder %s68, 0
      %s71 = sadd.s32 %s70, 1
      %s72 = scalar_select %p69, %s70, %s71
      %p75 = pneg %p69
      %p76 = scmp.eq.s32.totalorder %s56, 1
      %p77 = por %p75, %p76
      %p78 = scmp.ne.s32.totalorder %s70, %s73
      %p79 = scmp.eq.s32.totalorder %s56, 0
      %p80 = por %p78, %p79
      %p81 = scmp.ne.s32.totalorder %s70, %s73
      %p82 = scmp.eq.s32.totalorder %s61, 1
      %p83 = por %p81, %p82
      %p84 = scmp.ne.s32.totalorder %s73, %s74
      %p85 = scmp.eq.s32.totalorder %s61, 0
      %p86 = por %p84, %p85
      %p87 = scmp.ne.s32.totalorder %s73, %s74
      %p88 = scmp.eq.s32.totalorder %s62, 1
      %p89 = por %p87, %p88
      %p91 = scmp.ne.s32.totalorder %s74, %s90
      %p92 = scmp.eq.s32.totalorder %s62, 0
      %p93 = por %p91, %p92
      %s94 = smul.u32 %s56, 4
      %s95 = sadd.s32 %s94, 1
      %s96 = sld [smem:[#allocation8 + %s95]]
      %s97 = smul.u32 %s63, 4
      %s98 = sadd.s32 %s97, 1
      %s99 = sld [smem:[#allocation8 + %s98]]
      %s100 = ssub.s32 %s96, %s99
      %p101 = scmp.eq.s32.totalorder %s100, 0
      %s103 = sadd.s32 %s102, 1
      %s104 = scalar_select %p101, %s102, %s103
      %p107 = pneg %p101
      %p108 = scmp.eq.s32.totalorder %s56, 1
      %p109 = por %p107, %p108
      %p110 = scmp.ne.s32.totalorder %s102, %s105
      %p111 = scmp.eq.s32.totalorder %s56, 0
      %p112 = por %p110, %p111
      %p113 = scmp.ne.s32.totalorder %s102, %s105
      %p114 = scmp.eq.s32.totalorder %s61, 1
      %p115 = por %p113, %p114
      %p116 = scmp.ne.s32.totalorder %s105, %s106
      %p117 = scmp.eq.s32.totalorder %s61, 0
      %p118 = por %p116, %p117
      %p119 = scmp.ne.s32.totalorder %s105, %s106
      %p120 = scmp.eq.s32.totalorder %s62, 1
      %p121 = por %p119, %p120
      %p123 = scmp.ne.s32.totalorder %s106, %s122
      %p124 = scmp.eq.s32.totalorder %s62, 0
      %p125 = por %p123, %p124
      %s126 = smul.u32 %s56, 4
      %s127 = sadd.s32 %s126, 2
      %s128 = sld [smem:[#allocation8 + %s127]]
      %s129 = smul.u32 %s63, 4
      %s130 = sadd.s32 %s129, 2
      %s131 = sld [smem:[#allocation8 + %s130]]
      %s132 = ssub.s32 %s128, %s131
      %p133 = scmp.eq.s32.totalorder %s132, 0
      %s135 = sadd.s32 %s134, 1
      %s136 = scalar_select %p133, %s134, %s135
      %p139 = pneg %p133
      %p140 = scmp.eq.s32.totalorder %s56, 1
      %p141 = por %p139, %p140
      %p142 = scmp.ne.s32.totalorder %s134, %s137
      %p143 = scmp.eq.s32.totalorder %s56, 0
      %p144 = por %p142, %p143
      %p145 = scmp.ne.s32.totalorder %s134, %s137
      %p146 = scmp.eq.s32.totalorder %s61, 1
      %p147 = por %p145, %p146
      %p148 = scmp.ne.s32.totalorder %s137, %s138
      %p149 = scmp.eq.s32.totalorder %s61, 0
      %p150 = por %p148, %p149
      %p151 = scmp.ne.s32.totalorder %s137, %s138
      %p152 = scmp.eq.s32.totalorder %s62, 1
      %p153 = por %p151, %p152
      %p155 = scmp.ne.s32.totalorder %s138, %s154
      %p156 = scmp.eq.s32.totalorder %s62, 0
      %p157 = por %p155, %p156
      %s158 = smul.u32 %s56, 4
      %s159 = sadd.s32 %s158, 3
      %s160 = sld [smem:[#allocation8 + %s159]]
      %s161 = smul.u32 %s63, 4
      %s162 = sadd.s32 %s161, 3
      %s163 = sld [smem:[#allocation8 + %s162]]
      %s164 = ssub.s32 %s160, %s163
      %p165 = scmp.eq.s32.totalorder %s164, 0
      %s167 = sadd.s32 %s166, 1
      %s168 = scalar_select %p165, %s166, %s167
      %p171 = pneg %p165
      %p172 = scmp.eq.s32.totalorder %s56, 1
      %p173 = por %p171, %p172
      %p174 = scmp.ne.s32.totalorder %s166, %s169
      %p175 = scmp.eq.s32.totalorder %s56, 0
      %p176 = por %p174, %p175
      %p177 = scmp.ne.s32.totalorder %s166, %s169
      %p178 = scmp.eq.s32.totalorder %s61, 1
      %p179 = por %p177, %p178
      %p180 = scmp.ne.s32.totalorder %s169, %s170
      %p181 = scmp.eq.s32.totalorder %s61, 0
      %p182 = por %p180, %p181
      %p183 = scmp.ne.s32.totalorder %s169, %s170
      %p184 = scmp.eq.s32.totalorder %s62, 1
      %p185 = por %p183, %p184
      %p187 = scmp.ne.s32.totalorder %s170, %s186
      %p188 = scmp.eq.s32.totalorder %s62, 0
      %p189 = por %p187, %p188
      %s190 = smul.u32 %s56, 4
      %s191 = sld [smem:[#allocation8 + %s190]]
      %s192 = smul.u32 %s63, 4
      %s193 = sld [smem:[#allocation8 + %s192]]
      %s194 = ssub.s32 %s191, %s193
      %p195 = scmp.eq.s32.totalorder %s194, 0
      %s197 = sadd.s32 %s196, 1
      %s198 = scalar_select %p195, %s196, %s197
      %p201 = pneg %p195
      %p202 = scmp.eq.s32.totalorder %s56, 1
      %p203 = por %p201, %p202
      %p204 = scmp.ne.s32.totalorder %s196, %s199
      %p205 = scmp.eq.s32.totalorder %s56, 0
      %p206 = por %p204, %p205
      %p207 = scmp.ne.s32.totalorder %s196, %s199
      %p208 = scmp.eq.s32.totalorder %s61, 1
      %p209 = por %p207, %p208
      %p210 = scmp.ne.s32.totalorder %s199, %s200
      %p211 = scmp.eq.s32.totalorder %s61, 0
      %p212 = por %p210, %p211
      %p213 = scmp.ne.s32.totalorder %s199, %s200
      %p214 = scmp.eq.s32.totalorder %s62, 1
      %p215 = por %p213, %p214
      %p217 = scmp.ne.s32.totalorder %s200, %s216
      %p218 = scmp.eq.s32.totalorder %s62, 0
      %p219 = por %p217, %p218
      %s220 = smul.u32 %s56, 4
      %s221 = sadd.s32 %s220, 1
      %s222 = sld [smem:[#allocation8 + %s221]]
      %s223 = smul.u32 %s63, 4
      %s224 = sadd.s32 %s223, 1
      %s225 = sld [smem:[#allocation8 + %s224]]
      %s226 = ssub.s32 %s222, %s225
      %p227 = scmp.eq.s32.totalorder %s226, 0
      %s229 = sadd.s32 %s228, 1
      %s230 = scalar_select %p227, %s228, %s229
      %p233 = pneg %p227
      %p234 = scmp.eq.s32.totalorder %s56, 1
      %p235 = por %p233, %p234
      %p236 = scmp.ne.s32.totalorder %s228, %s231
      %p237 = scmp.eq.s32.totalorder %s56, 0
      %p238 = por %p236, %p237
      %p239 = scmp.ne.s32.totalorder %s228, %s231
      %p240 = scmp.eq.s32.totalorder %s61, 1
      %p241 = por %p239, %p240
      %p242 = scmp.ne.s32.totalorder %s231, %s232
      %p243 = scmp.eq.s32.totalorder %s61, 0
      %p244 = por %p242, %p243
      %p245 = scmp.ne.s32.totalorder %s231, %s232
      %p246 = scmp.eq.s32.totalorder %s62, 1
      %p247 = por %p245, %p246
      %p249 = scmp.ne.s32.totalorder %s232, %s248
      %p250 = scmp.eq.s32.totalorder %s62, 0
      %p251 = por %p249, %p250
      %s252 = smul.u32 %s56, 4
      %s253 = sadd.s32 %s252, 2
      %s254 = sld [smem:[#allocation8 + %s253]]
      %s255 = smul.u32 %s63, 4
      %s256 = sadd.s32 %s255, 2
      %s257 = sld [smem:[#allocation8 + %s256]]
      %s258 = ssub.s32 %s254, %s257
      %p259 = scmp.eq.s32.totalorder %s258, 0
      %s261 = sadd.s32 %s260, 1
      %s262 = scalar_select %p259, %s260, %s261
      %p265 = pneg %p259
      %p266 = scmp.eq.s32.totalorder %s56, 1
      %p267 = por %p265, %p266
      %p268 = scmp.ne.s32.totalorder %s260, %s263
      %p269 = scmp.eq.s32.totalorder %s56, 0
      %p270 = por %p268, %p269
      %p271 = scmp.ne.s32.totalorder %s260, %s263
      %p272 = scmp.eq.s32.totalorder %s61, 1
      %p273 = por %p271, %p272
      %p274 = scmp.ne.s32.totalorder %s263, %s264
      %p275 = scmp.eq.s32.totalorder %s61, 0
      %p276 = por %p274, %p275
      %p277 = scmp.ne.s32.totalorder %s263, %s264
      %p278 = scmp.eq.s32.totalorder %s62, 1
      %p279 = por %p277, %p278
      %p281 = scmp.ne.s32.totalorder %s264, %s280
      %p282 = scmp.eq.s32.totalorder %s62, 0
      %p283 = por %p281, %p282
      %s284 = smul.u32 %s56, 4
      %s285 = sadd.s32 %s284, 3
      %s286 = sld [smem:[#allocation8 + %s285]]
      %s287 = smul.u32 %s63, 4
      %s288 = sadd.s32 %s287, 3
      %s289 = sld [smem:[#allocation8 + %s288]]
      %s290 = ssub.s32 %s286, %s289
      %p291 = scmp.eq.s32.totalorder %s290, 0
      %s293 = sadd.s32 %s292, 1
      %s294 = scalar_select %p291, %s292, %s293
      %p297 = pneg %p291
      %p298 = scmp.eq.s32.totalorder %s56, 1
      %p299 = por %p297, %p298
      %p300 = scmp.ne.s32.totalorder %s292, %s295
      %p301 = scmp.eq.s32.totalorder %s56, 0
      %p302 = por %p300, %p301
      %p303 = scmp.ne.s32.totalorder %s292, %s295
      %p304 = scmp.eq.s32.totalorder %s61, 1
      %p305 = por %p303, %p304
      %p306 = scmp.ne.s32.totalorder %s295, %s296
      %p307 = scmp.eq.s32.totalorder %s61, 0
      %p308 = por %p306, %p307
      %p309 = scmp.ne.s32.totalorder %s295, %s296
      %p310 = scmp.eq.s32.totalorder %s62, 1
      %p311 = por %p309, %p310
      %p313 = scmp.ne.s32.totalorder %s296, %s312
      %p314 = scmp.eq.s32.totalorder %s62, 0
      %p315 = por %p313, %p314
      %s316 = smul.u32 %s56, 4
      %s317 = sld [smem:[#allocation9 + %s316]]
      %s318 = smul.u32 %s63, 4
      %s319 = sld [smem:[#allocation9 + %s318]]
      %s320 = ssub.s32 %s317, %s319
      %p321 = scmp.eq.s32.totalorder %s320, 0
      %s323 = sadd.s32 %s322, 1
      %s324 = scalar_select %p321, %s322, %s323
      %p327 = pneg %p321
      %p328 = scmp.eq.s32.totalorder %s56, 1
      %p329 = por %p327, %p328
      %p330 = scmp.ne.s32.totalorder %s322, %s325
      %p331 = scmp.eq.s32.totalorder %s56, 0
      %p332 = por %p330, %p331
      %p333 = scmp.ne.s32.totalorder %s322, %s325
      %p334 = scmp.eq.s32.totalorder %s61, 1
      %p335 = por %p333, %p334
      %p336 = scmp.ne.s32.totalorder %s325, %s326
      %p337 = scmp.eq.s32.totalorder %s61, 0
      %p338 = por %p336, %p337
      %p339 = scmp.ne.s32.totalorder %s325, %s326
      %p340 = scmp.eq.s32.totalorder %s62, 1
      %p341 = por %p339, %p340
      %p343 = scmp.ne.s32.totalorder %s326, %s342
      %p344 = scmp.eq.s32.totalorder %s62, 0
      %p345 = por %p343, %p344
      %s346 = smul.u32 %s56, 4
      %s347 = sadd.s32 %s346, 1
      %s348 = sld [smem:[#allocation9 + %s347]]
      %s349 = smul.u32 %s63, 4
      %s350 = sadd.s32 %s349, 1
      %s351 = sld [smem:[#allocation9 + %s350]]
      %s352 = ssub.s32 %s348, %s351
      %p353 = scmp.eq.s32.totalorder %s352, 0
      %s355 = sadd.s32 %s354, 1
      %s356 = scalar_select %p353, %s354, %s355
      %p359 = pneg %p353
      %p360 = scmp.eq.s32.totalorder %s56, 1
      %p361 = por %p359, %p360
      %p362 = scmp.ne.s32.totalorder %s354, %s357
      %p363 = scmp.eq.s32.totalorder %s56, 0
      %p364 = por %p362, %p363
      %p365 = scmp.ne.s32.totalorder %s354, %s357
      %p366 = scmp.eq.s32.totalorder %s61, 1
      %p367 = por %p365, %p366
      %p368 = scmp.ne.s32.totalorder %s357, %s358
      %p369 = scmp.eq.s32.totalorder %s61, 0
      %p370 = por %p368, %p369
      %p371 = scmp.ne.s32.totalorder %s357, %s358
      %p372 = scmp.eq.s32.totalorder %s62, 1
      %p373 = por %p371, %p372
      %p375 = scmp.ne.s32.totalorder %s358, %s374
      %p376 = scmp.eq.s32.totalorder %s62, 0
      %p377 = por %p375, %p376
      %s378 = smul.u32 %s56, 4
      %s379 = sadd.s32 %s378, 2
      %s380 = sld [smem:[#allocation9 + %s379]]
      %s381 = smul.u32 %s63, 4
      %s382 = sadd.s32 %s381, 2
      %s383 = sld [smem:[#allocation9 + %s382]]
      %s384 = ssub.s32 %s380, %s383
      %p385 = scmp.eq.s32.totalorder %s384, 0
      %s387 = sadd.s32 %s386, 1
      %s388 = scalar_select %p385, %s386, %s387
      %p391 = pneg %p385
      %p392 = scmp.eq.s32.totalorder %s56, 1
      %p393 = por %p391, %p392
      %p394 = scmp.ne.s32.totalorder %s386, %s389
      %p395 = scmp.eq.s32.totalorder %s56, 0
      %p396 = por %p394, %p395
      %p397 = scmp.ne.s32.totalorder %s386, %s389
      %p398 = scmp.eq.s32.totalorder %s61, 1
      %p399 = por %p397, %p398
      %p400 = scmp.ne.s32.totalorder %s389, %s390
      %p401 = scmp.eq.s32.totalorder %s61, 0
      %p402 = por %p400, %p401
      %p403 = scmp.ne.s32.totalorder %s389, %s390
      %p404 = scmp.eq.s32.totalorder %s62, 1
      %p405 = por %p403, %p404
      %p407 = scmp.ne.s32.totalorder %s390, %s406
      %p408 = scmp.eq.s32.totalorder %s62, 0
      %p409 = por %p407, %p408
      %s410 = smul.u32 %s56, 4
      %s411 = sadd.s32 %s410, 3
      %s412 = sld [smem:[#allocation9 + %s411]]
      %s413 = smul.u32 %s63, 4
      %s414 = sadd.s32 %s413, 3
      %s415 = sld [smem:[#allocation9 + %s414]]
      %s416 = ssub.s32 %s412, %s415
      %p417 = scmp.eq.s32.totalorder %s416, 0
      %s419 = sadd.s32 %s418, 1
      %s420 = scalar_select %p417, %s418, %s419
      %p423 = pneg %p417
      %p424 = scmp.eq.s32.totalorder %s56, 1
      %p425 = por %p423, %p424
      %p426 = scmp.ne.s32.totalorder %s418, %s421
      %p427 = scmp.eq.s32.totalorder %s56, 0
      %p428 = por %p426, %p427
      %p429 = scmp.ne.s32.totalorder %s418, %s421
      %p430 = scmp.eq.s32.totalorder %s61, 1
      %p431 = por %p429, %p430
      %p432 = scmp.ne.s32.totalorder %s421, %s422
      %p433 = scmp.eq.s32.totalorder %s61, 0
      %p434 = por %p432, %p433
      %p435 = scmp.ne.s32.totalorder %s421, %s422
      %p436 = scmp.eq.s32.totalorder %s62, 1
      %p437 = por %p435, %p436
      %p439 = scmp.ne.s32.totalorder %s422, %s438
      %p440 = scmp.eq.s32.totalorder %s62, 0
      %p441 = por %p439, %p440
      %s443 = sadd.s32 %s442, 1
      %p446 = scmp.eq.s32.totalorder %s56, 1
      %p447 = scmp.ne.s32.totalorder %s442, %s444
      %p448 = scmp.eq.s32.totalorder %s56, 0
      %p449 = por %p447, %p448
      %p450 = scmp.ne.s32.totalorder %s442, %s444
      %p451 = scmp.eq.s32.totalorder %s61, 1
      %p452 = por %p450, %p451
      %p453 = scmp.ne.s32.totalorder %s444, %s445
      %p454 = scmp.eq.s32.totalorder %s61, 0
      %p455 = por %p453, %p454
      %p456 = scmp.ne.s32.totalorder %s444, %s445
      %p457 = scmp.eq.s32.totalorder %s62, 1
      %p458 = por %p456, %p457
      %p460 = scmp.ne.s32.totalorder %s445, %s459
      %p461 = scmp.eq.s32.totalorder %s62, 0
      %p462 = por %p460, %p461
      %s464 = sadd.s32 %s463, 1
      %p467 = scmp.eq.s32.totalorder %s56, 1
      %p468 = scmp.ne.s32.totalorder %s463, %s465
      %p469 = scmp.eq.s32.totalorder %s56, 0
      %p470 = por %p468, %p469
      %p471 = scmp.ne.s32.totalorder %s463, %s465
      %p472 = scmp.eq.s32.totalorder %s61, 1
      %p473 = por %p471, %p472
      %p474 = scmp.ne.s32.totalorder %s465, %s466
      %p475 = scmp.eq.s32.totalorder %s61, 0
      %p476 = por %p474, %p475
      %p477 = scmp.ne.s32.totalorder %s465, %s466
      %p478 = scmp.eq.s32.totalorder %s62, 1
      %p479 = por %p477, %p478
      %p481 = scmp.ne.s32.totalorder %s466, %s480
      %p482 = scmp.eq.s32.totalorder %s62, 0
      %p483 = por %p481, %p482
      %s485 = sadd.s32 %s484, 1
      %p488 = scmp.eq.s32.totalorder %s56, 1
      %p489 = scmp.ne.s32.totalorder %s484, %s486
      %p490 = scmp.eq.s32.totalorder %s56, 0
      %p491 = por %p489, %p490
      %p492 = scmp.ne.s32.totalorder %s484, %s486
      %p493 = scmp.eq.s32.totalorder %s61, 1
      %p494 = por %p492, %p493
      %p495 = scmp.ne.s32.totalorder %s486, %s487
      %p496 = scmp.eq.s32.totalorder %s61, 0
      %p497 = por %p495, %p496
      %p498 = scmp.ne.s32.totalorder %s486, %s487
      %p499 = scmp.eq.s32.totalorder %s62, 1
      %p500 = por %p498, %p499
      %p502 = scmp.ne.s32.totalorder %s487, %s501
      %p503 = scmp.eq.s32.totalorder %s62, 0
      %p504 = por %p502, %p503
      %s506 = sadd.s32 %s505, 1
      %p509 = scmp.eq.s32.totalorder %s56, 1
      %p510 = scmp.ne.s32.totalorder %s505, %s507
      %p511 = scmp.eq.s32.totalorder %s56, 0
      %p512 = por %p510, %p511
      %p513 = scmp.ne.s32.totalorder %s505, %s507
      %p514 = scmp.eq.s32.totalorder %s61, 1
      %p515 = por %p513, %p514
      %p516 = scmp.ne.s32.totalorder %s507, %s508
      %p517 = scmp.eq.s32.totalorder %s61, 0
      %p518 = por %p516, %p517
      %p519 = scmp.ne.s32.totalorder %s507, %s508
      %p520 = scmp.eq.s32.totalorder %s62, 1
      %p521 = por %p519, %p520
      %p523 = scmp.ne.s32.totalorder %s508, %s522
      %p524 = scmp.eq.s32.totalorder %s62, 0
      %p525 = por %p523, %p524
      %s527 = sadd.s32 %s526, 1
      %p530 = scmp.eq.s32.totalorder %s56, 1
      %p531 = scmp.ne.s32.totalorder %s526, %s528
      %p532 = scmp.eq.s32.totalorder %s56, 0
      %p533 = por %p531, %p532
      %p534 = scmp.ne.s32.totalorder %s526, %s528
      %p535 = scmp.eq.s32.totalorder %s61, 1
      %p536 = por %p534, %p535
      %p537 = scmp.ne.s32.totalorder %s528, %s529
      %p538 = scmp.eq.s32.totalorder %s61, 0
      %p539 = por %p537, %p538
      %p540 = scmp.ne.s32.totalorder %s528, %s529
      %p541 = scmp.eq.s32.totalorder %s62, 1
      %p542 = por %p540, %p541
      %p544 = scmp.ne.s32.totalorder %s529, %s543
      %p545 = scmp.eq.s32.totalorder %s62, 0
      %p546 = por %p544, %p545
      %p547 = scmp.le.s32.totalorder 1, %s56
      %p548 = scmp.lt.s32.totalorder %s56, 3
      %p549 = pnand %p547, %p548
      %p550 = pneg %p549
      // Predicated region
      $region9: #{tpu_custom_call.1} parent=5 // pred_check
        _
      $region10: #{tpu_custom_call.1} parent=5 // pred_check_branch
        %552 = sbr.rel (%p549) target = $region12
      $region11: #{tpu_custom_call.1} parent=5 // pred_region
        %s553 = ssub.s32 %s56, 1
        // Predicated region
        $region13: #{tpu_custom_call.1} parent=11 // pred_check
          %p554 = pneg %p455
        $region14: #{tpu_custom_call.1} parent=11 // pred_check_branch
          %556 = sbr.rel (%p554) target = $region16
        $region15: #{tpu_custom_call.1} parent=11 // pred_region
          _
        $region16: #{tpu_custom_call.1} parent=11 // pred_fallthru
          _
        // Predicated region
        $region17: #{tpu_custom_call.1} parent=11 // pred_check
          %p557 = pneg %p476
        $region18: #{tpu_custom_call.1} parent=11 // pred_check_branch
          %559 = sbr.rel (%p557) target = $region20
        $region19: #{tpu_custom_call.1} parent=11 // pred_region
          _
        $region20: #{tpu_custom_call.1} parent=11 // pred_fallthru
          _
        // Predicated region
        $region21: #{tpu_custom_call.1} parent=11 // pred_check
          %p560 = pneg %p497
        $region22: #{tpu_custom_call.1} parent=11 // pred_check_branch
          %562 = sbr.rel (%p560) target = $region24
        $region23: #{tpu_custom_call.1} parent=11 // pred_region
          _
        $region24: #{tpu_custom_call.1} parent=11 // pred_fallthru
          _
        // Predicated region
        $region25: #{tpu_custom_call.1} parent=11 // pred_check
          %p563 = pneg %p518
        $region26: #{tpu_custom_call.1} parent=11 // pred_check_branch
          %565 = sbr.rel (%p563) target = $region28
        $region27: #{tpu_custom_call.1} parent=11 // pred_region
          _
        $region28: #{tpu_custom_call.1} parent=11 // pred_fallthru
          _
      $region12: #{tpu_custom_call.1} parent=5 // pred_fallthru
        _
      %p566 = scmp.lt.s32.totalorder %s56, 2
      // Predicated region
      $region29: #{tpu_custom_call.1} parent=5 // pred_check
        %p567 = pneg %p566
      $region30: #{tpu_custom_call.1} parent=5 // pred_check_branch
        %569 = sbr.rel (%p567) target = $region32
      $region31: #{tpu_custom_call.1} parent=5 // pred_region
        // Predicated region
        $region33: #{tpu_custom_call.1} parent=31 // pred_check
          %p570 = pneg %p80
        $region34: #{tpu_custom_call.1} parent=31 // pred_check_branch
          %572 = sbr.rel (%p570) target = $region36
        $region35: #{tpu_custom_call.1} parent=31 // pred_region
          %s573 = sand.u32 %s70, 1
          %s574 = scalar_lea.sflag [#allocation11], %s573
          %s575 = sand.u32 %s70, 1
          %s576 = smul.addr %s575, 8
          %s577 = scalar_lea.vmem [#allocation10], %s576
          %s578 = smul.u32 %s56, 4
          %s579 = sld [smem:[#allocation8 + %s578]]
          %s581 = ssub.s32 128, 128
          %582 = vsyncadd %s574, %s581
          %s583 = smul.addr %s579, 2
          %s584 = smul.addr %s583, 64
          %s585 = scalar_lea.hbm %s2, %s584
          %s586 = sshll.u32 %s577, 4
          %s587 = int_to_ptr.vmem [resolvable:$true] %s586
          %592 = dma.hbm_to_vmem [thread:$0]  %s585, 128, %s587, %s574, 64, 64, 4
        $region36: #{tpu_custom_call.1} parent=31 // pred_fallthru
          _
        // Predicated region
        $region37: #{tpu_custom_call.1} parent=31 // pred_check
          %p593 = pneg %p112
        $region38: #{tpu_custom_call.1} parent=31 // pred_check_branch
          %595 = sbr.rel (%p593) target = $region40
        $region39: #{tpu_custom_call.1} parent=31 // pred_region
          %s596 = sand.u32 %s56, 1
          %s597 = scalar_lea.sflag [#allocation14], %s596
          %s598 = sand.u32 %s102, 1
          %s599 = smul.addr %s598, 8
          %s600 = scalar_lea.vmem [#allocation13], %s599
          %s601 = smul.u32 %s56, 4
          %s602 = sadd.s32 %s601, 1
          %s603 = sld [smem:[#allocation8 + %s602]]
          %s605 = ssub.s32 128, 128
          %606 = vsyncadd %s597, %s605
          %s607 = smul.addr %s603, 2
          %s608 = smul.addr %s607, 64
          %s609 = scalar_lea.hbm %s3, %s608
          %s610 = sshll.u32 %s600, 4
          %s611 = int_to_ptr.vmem [resolvable:$true] %s610
          %616 = dma.hbm_to_vmem [thread:$0]  %s609, 128, %s611, %s597, 64, 64, 4
        $region40: #{tpu_custom_call.1} parent=31 // pred_fallthru
          _
        // Predicated region
        $region41: #{tpu_custom_call.1} parent=31 // pred_check
          %p617 = pneg %p144
        $region42: #{tpu_custom_call.1} parent=31 // pred_check_branch
          %619 = sbr.rel (%p617) target = $region44
        $region43: #{tpu_custom_call.1} parent=31 // pred_region
          %s620 = sand.u32 %s56, 1
          %s621 = scalar_lea.sflag [#allocation14], %s620
          %s622 = sand.u32 %s134, 1
          %s623 = smul.addr %s622, 8
          %s624 = scalar_lea.vmem [#allocation15], %s623
          %s625 = smul.u32 %s56, 4
          %s626 = sadd.s32 %s625, 2
          %s627 = sld [smem:[#allocation8 + %s626]]
          %s629 = ssub.s32 128, 128
          %630 = vsyncadd %s621, %s629
          %s631 = smul.addr %s627, 2
          %s632 = smul.addr %s631, 64
          %s633 = scalar_lea.hbm %s4, %s632
          %s634 = sshll.u32 %s624, 4
          %s635 = int_to_ptr.vmem [resolvable:$true] %s634
          %640 = dma.hbm_to_vmem [thread:$0]  %s633, 128, %s635, %s621, 64, 64, 4
        $region44: #{tpu_custom_call.1} parent=31 // pred_fallthru
          _
        // Predicated region
        $region45: #{tpu_custom_call.1} parent=31 // pred_check
          %p641 = pneg %p176
        $region46: #{tpu_custom_call.1} parent=31 // pred_check_branch
          %643 = sbr.rel (%p641) target = $region48
        $region47: #{tpu_custom_call.1} parent=31 // pred_region
          %s644 = sand.u32 %s56, 1
          %s645 = scalar_lea.sflag [#allocation17], %s644
          %s646 = sand.u32 %s166, 1
          %s647 = smul.addr %s646, 8
          %s648 = scalar_lea.vmem [#allocation16], %s647
          %s649 = smul.u32 %s56, 4
          %s650 = sadd.s32 %s649, 3
          %s651 = sld [smem:[#allocation8 + %s650]]
          %s653 = ssub.s32 128, 128
          %654 = vsyncadd %s645, %s653
          %s655 = smul.addr %s651, 2
          %s656 = smul.addr %s655, 64
          %s657 = scalar_lea.hbm %s5, %s656
          %s658 = sshll.u32 %s648, 4
          %s659 = int_to_ptr.vmem [resolvable:$true] %s658
          %664 = dma.hbm_to_vmem [thread:$0]  %s657, 128, %s659, %s645, 64, 64, 4
        $region48: #{tpu_custom_call.1} parent=31 // pred_fallthru
          _
        // Predicated region
        $region49: #{tpu_custom_call.1} parent=31 // pred_check
          %p665 = pneg %p206
        $region50: #{tpu_custom_call.1} parent=31 // pred_check_branch
          %667 = sbr.rel (%p665) target = $region52
        $region51: #{tpu_custom_call.1} parent=31 // pred_region
          %s668 = sand.u32 %s56, 1
          %s669 = scalar_lea.sflag [#allocation17], %s668
          %s670 = sand.u32 %s196, 1
          %s671 = smul.addr %s670, 8
          %s672 = scalar_lea.vmem [#allocation18], %s671
          %s673 = smul.u32 %s56, 4
          %s674 = sld [smem:[#allocation8 + %s673]]
          %s676 = ssub.s32 128, 128
          %677 = vsyncadd %s669, %s676
          %s678 = smul.addr %s674, 2
          %s679 = smul.addr %s678, 64
          %s680 = scalar_lea.hbm %s6, %s679
          %s681 = sshll.u32 %s672, 4
          %s682 = int_to_ptr.vmem [resolvable:$true] %s681
          %687 = dma.hbm_to_vmem [thread:$0]  %s680, 128, %s682, %s669, 64, 64, 4
        $region52: #{tpu_custom_call.1} parent=31 // pred_fallthru
          _
        // Predicated region
        $region53: #{tpu_custom_call.1} parent=31 // pred_check
          %p688 = pneg %p238
        $region54: #{tpu_custom_call.1} parent=31 // pred_check_branch
          %690 = sbr.rel (%p688) target = $region56
        $region55: #{tpu_custom_call.1} parent=31 // pred_region
          %s691 = sand.u32 %s56, 1
          %s692 = scalar_lea.sflag [#allocation20], %s691
          %s693 = sand.u32 %s228, 1
          %s694 = smul.addr %s693, 8
          %s695 = scalar_lea.vmem [#allocation19], %s694
          %s696 = smul.u32 %s56, 4
          %s697 = sadd.s32 %s696, 1
          %s698 = sld [smem:[#allocation8 + %s697]]
          %s700 = ssub.s32 128, 128
          %701 = vsyncadd %s692, %s700
          %s702 = smul.addr %s698, 2
          %s703 = smul.addr %s702, 64
          %s704 = scalar_lea.hbm %s7, %s703
          %s705 = sshll.u32 %s695, 4
          %s706 = int_to_ptr.vmem [resolvable:$true] %s705
          %711 = dma.hbm_to_vmem [thread:$0]  %s704, 128, %s706, %s692, 64, 64, 4
        $region56: #{tpu_custom_call.1} parent=31 // pred_fallthru
          _
        // Predicated region
        $region57: #{tpu_custom_call.1} parent=31 // pred_check
          %p712 = pneg %p270
        $region58: #{tpu_custom_call.1} parent=31 // pred_check_branch
          %714 = sbr.rel (%p712) target = $region60
        $region59: #{tpu_custom_call.1} parent=31 // pred_region
          %s715 = sand.u32 %s56, 1
          %s716 = scalar_lea.sflag [#allocation20], %s715
          %s717 = sand.u32 %s260, 1
          %s718 = smul.addr %s717, 8
          %s719 = scalar_lea.vmem [#allocation21], %s718
          %s720 = smul.u32 %s56, 4
          %s721 = sadd.s32 %s720, 2
          %s722 = sld [smem:[#allocation8 + %s721]]
          %s724 = ssub.s32 128, 128
          %725 = vsyncadd %s716, %s724
          %s726 = smul.addr %s722, 2
          %s727 = smul.addr %s726, 64
          %s728 = scalar_lea.hbm %s8, %s727
          %s729 = sshll.u32 %s719, 4
          %s730 = int_to_ptr.vmem [resolvable:$true] %s729
          %735 = dma.hbm_to_vmem [thread:$0]  %s728, 128, %s730, %s716, 64, 64, 4
        $region60: #{tpu_custom_call.1} parent=31 // pred_fallthru
          _
        // Predicated region
        $region61: #{tpu_custom_call.1} parent=31 // pred_check
          %p736 = pneg %p302
        $region62: #{tpu_custom_call.1} parent=31 // pred_check_branch
          %738 = sbr.rel (%p736) target = $region64
        $region63: #{tpu_custom_call.1} parent=31 // pred_region
          %s739 = sand.u32 %s56, 1
          %s740 = scalar_lea.sflag [#allocation23], %s739
          %s741 = sand.u32 %s292, 1
          %s742 = smul.addr %s741, 8
          %s743 = scalar_lea.vmem [#allocation22], %s742
          %s744 = smul.u32 %s56, 4
          %s745 = sadd.s32 %s744, 3
          %s746 = sld [smem:[#allocation8 + %s745]]
          %s748 = ssub.s32 128, 128
          %749 = vsyncadd %s740, %s748
          %s750 = smul.addr %s746, 2
          %s751 = smul.addr %s750, 64
          %s752 = scalar_lea.hbm %s9, %s751
          %s753 = sshll.u32 %s743, 4
          %s754 = int_to_ptr.vmem [resolvable:$true] %s753
          %759 = dma.hbm_to_vmem [thread:$0]  %s752, 128, %s754, %s740, 64, 64, 4
        $region64: #{tpu_custom_call.1} parent=31 // pred_fallthru
          _
        // Predicated region
        $region65: #{tpu_custom_call.1} parent=31 // pred_check
          %p760 = pneg %p332
        $region66: #{tpu_custom_call.1} parent=31 // pred_check_branch
          %762 = sbr.rel (%p760) target = $region68
        $region67: #{tpu_custom_call.1} parent=31 // pred_region
          %s763 = sand.u32 %s56, 1
          %s764 = scalar_lea.sflag [#allocation23], %s763
          %s765 = sand.u32 %s322, 1
          %s766 = smul.addr %s765, 16
          %s767 = scalar_lea.vmem [#allocation24], %s766
          %s768 = smul.u32 %s56, 4
          %s769 = sld [smem:[#allocation9 + %s768]]
          %s771 = ssub.s32 256, 256
          %772 = vsyncadd %s764, %s771
          %s773 = smul.addr %s769, 4
          %s774 = smul.addr %s773, 64
          %s775 = scalar_lea.hbm %s10, %s774
          %s776 = sshll.u32 %s767, 4
          %s777 = int_to_ptr.vmem [resolvable:$true] %s776
          %782 = dma.hbm_to_vmem [thread:$0]  %s775, 256, %s777, %s764, 64, 64, 4
        $region68: #{tpu_custom_call.1} parent=31 // pred_fallthru
          _
        // Predicated region
        $region69: #{tpu_custom_call.1} parent=31 // pred_check
          %p783 = pneg %p364
        $region70: #{tpu_custom_call.1} parent=31 // pred_check_branch
          %785 = sbr.rel (%p783) target = $region72
        $region71: #{tpu_custom_call.1} parent=31 // pred_region
          %s786 = sand.u32 %s56, 1
          %s787 = scalar_lea.sflag [#allocation26], %s786
          %s788 = sand.u32 %s354, 1
          %s789 = smul.addr %s788, 16
          %s790 = scalar_lea.vmem [#allocation25], %s789
          %s791 = smul.u32 %s56, 4
          %s792 = sadd.s32 %s791, 1
          %s793 = sld [smem:[#allocation9 + %s792]]
          %s795 = ssub.s32 256, 256
          %796 = vsyncadd %s787, %s795
          %s797 = smul.addr %s793, 4
          %s798 = smul.addr %s797, 64
          %s799 = scalar_lea.hbm %s11, %s798
          %s800 = sshll.u32 %s790, 4
          %s801 = int_to_ptr.vmem [resolvable:$true] %s800
          %806 = dma.hbm_to_vmem [thread:$0]  %s799, 256, %s801, %s787, 64, 64, 4
        $region72: #{tpu_custom_call.1} parent=31 // pred_fallthru
          _
        // Predicated region
        $region73: #{tpu_custom_call.1} parent=31 // pred_check
          %p807 = pneg %p396
        $region74: #{tpu_custom_call.1} parent=31 // pred_check_branch
          %809 = sbr.rel (%p807) target = $region76
        $region75: #{tpu_custom_call.1} parent=31 // pred_region
          %s810 = sand.u32 %s56, 1
          %s811 = scalar_lea.sflag [#allocation26], %s810
          %s812 = sand.u32 %s386, 1
          %s813 = smul.addr %s812, 16
          %s814 = scalar_lea.vmem [#allocation27], %s813
          %s815 = smul.u32 %s56, 4
          %s816 = sadd.s32 %s815, 2
          %s817 = sld [smem:[#allocation9 + %s816]]
          %s819 = ssub.s32 256, 256
          %820 = vsyncadd %s811, %s819
          %s821 = smul.addr %s817, 4
          %s822 = smul.addr %s821, 64
          %s823 = scalar_lea.hbm %s12, %s822
          %s824 = sshll.u32 %s814, 4
          %s825 = int_to_ptr.vmem [resolvable:$true] %s824
          %830 = dma.hbm_to_vmem [thread:$0]  %s823, 256, %s825, %s811, 64, 64, 4
        $region76: #{tpu_custom_call.1} parent=31 // pred_fallthru
          _
        // Predicated region
        $region77: #{tpu_custom_call.1} parent=31 // pred_check
          %p831 = pneg %p428
        $region78: #{tpu_custom_call.1} parent=31 // pred_check_branch
          %833 = sbr.rel (%p831) target = $region80
        $region79: #{tpu_custom_call.1} parent=31 // pred_region
          %s834 = sand.u32 %s418, 1
          %s835 = scalar_lea.sflag [#allocation29], %s834
          %s836 = sand.u32 %s418, 1
          %s837 = smul.addr %s836, 16
          %s838 = scalar_lea.vmem [#allocation28], %s837
          %s839 = smul.u32 %s56, 4
          %s840 = sadd.s32 %s839, 3
          %s841 = sld [smem:[#allocation9 + %s840]]
          %s843 = ssub.s32 256, 256
          %844 = vsyncadd %s835, %s843
          %s845 = smul.addr %s841, 4
          %s846 = smul.addr %s845, 64
          %s847 = scalar_lea.hbm %s13, %s846
          %s848 = sshll.u32 %s838, 4
          %s849 = int_to_ptr.vmem [resolvable:$true] %s848
          %854 = dma.hbm_to_vmem [thread:$0]  %s847, 256, %s849, %s835, 64, 64, 4
        $region80: #{tpu_custom_call.1} parent=31 // pred_fallthru
          _
      $region32: #{tpu_custom_call.1} parent=5 // pred_fallthru
        _
      %p855 = scmp.le.s32.totalorder 1, %s56
      %p856 = scmp.lt.s32.totalorder %s56, 3
      %p857 = pnand %p855, %p856
      %p858 = pneg %p857
      // Predicated region
      $region81: #{tpu_custom_call.1} parent=5 // pred_check
        _
      $region82: #{tpu_custom_call.1} parent=5 // pred_check_branch
        %860 = sbr.rel (%p857) target = $region84
      $region83: #{tpu_custom_call.1} parent=5 // pred_region
        %s861 = ssub.s32 %s56, 1
        %s862 = sand.u32 %s73, 1
        %s863 = scalar_lea.sflag [#allocation11], %s862
        %s864 = sand.u32 %s73, 1
        %s865 = smul.addr %s864, 8
        %s866 = scalar_lea.vmem [#allocation10], %s865
        // Predicated region
        $region85: #{tpu_custom_call.1} parent=83 // pred_check
          %p867 = pneg %p86
        $region86: #{tpu_custom_call.1} parent=83 // pred_check_branch
          %869 = sbr.rel (%p867) target = $region88
        $region87: #{tpu_custom_call.1} parent=83 // pred_region
          %870 = dma.done %s863, 128
        $region88: #{tpu_custom_call.1} parent=83 // pred_fallthru
          _
        %s871 = sand.u32 %s61, 1
        %s872 = scalar_lea.sflag [#allocation14], %s871
        %s873 = sand.u32 %s105, 1
        %s874 = smul.addr %s873, 8
        %s875 = scalar_lea.vmem [#allocation13], %s874
        // Predicated region
        $region89: #{tpu_custom_call.1} parent=83 // pred_check
          %p876 = pneg %p118
        $region90: #{tpu_custom_call.1} parent=83 // pred_check_branch
          %878 = sbr.rel (%p876) target = $region92
        $region91: #{tpu_custom_call.1} parent=83 // pred_region
          %879 = dma.done %s872, 128
        $region92: #{tpu_custom_call.1} parent=83 // pred_fallthru
          _
        %s880 = sand.u32 %s61, 1
        %s881 = scalar_lea.sflag [#allocation14], %s880
        %s882 = sand.u32 %s137, 1
        %s883 = smul.addr %s882, 8
        %s884 = scalar_lea.vmem [#allocation15], %s883
        // Predicated region
        $region93: #{tpu_custom_call.1} parent=83 // pred_check
          %p885 = pneg %p150
        $region94: #{tpu_custom_call.1} parent=83 // pred_check_branch
          %887 = sbr.rel (%p885) target = $region96
        $region95: #{tpu_custom_call.1} parent=83 // pred_region
          %888 = dma.done %s881, 128
        $region96: #{tpu_custom_call.1} parent=83 // pred_fallthru
          _
        %s889 = sand.u32 %s61, 1
        %s890 = scalar_lea.sflag [#allocation17], %s889
        %s891 = sand.u32 %s169, 1
        %s892 = smul.addr %s891, 8
        %s893 = scalar_lea.vmem [#allocation16], %s892
        // Predicated region
        $region97: #{tpu_custom_call.1} parent=83 // pred_check
          %p894 = pneg %p182
        $region98: #{tpu_custom_call.1} parent=83 // pred_check_branch
          %896 = sbr.rel (%p894) target = $region100
        $region99: #{tpu_custom_call.1} parent=83 // pred_region
          %897 = dma.done %s890, 128
        $region100: #{tpu_custom_call.1} parent=83 // pred_fallthru
          _
        %s898 = sand.u32 %s61, 1
        %s899 = scalar_lea.sflag [#allocation17], %s898
        %s900 = sand.u32 %s199, 1
        %s901 = smul.addr %s900, 8
        %s902 = scalar_lea.vmem [#allocation18], %s901
        // Predicated region
        $region101: #{tpu_custom_call.1} parent=83 // pred_check
          %p903 = pneg %p212
        $region102: #{tpu_custom_call.1} parent=83 // pred_check_branch
          %905 = sbr.rel (%p903) target = $region104
        $region103: #{tpu_custom_call.1} parent=83 // pred_region
          %906 = dma.done %s899, 128
        $region104: #{tpu_custom_call.1} parent=83 // pred_fallthru
          _
        %s907 = sand.u32 %s61, 1
        %s908 = scalar_lea.sflag [#allocation20], %s907
        %s909 = sand.u32 %s231, 1
        %s910 = smul.addr %s909, 8
        %s911 = scalar_lea.vmem [#allocation19], %s910
        // Predicated region
        $region105: #{tpu_custom_call.1} parent=83 // pred_check
          %p912 = pneg %p244
        $region106: #{tpu_custom_call.1} parent=83 // pred_check_branch
          %914 = sbr.rel (%p912) target = $region108
        $region107: #{tpu_custom_call.1} parent=83 // pred_region
          %915 = dma.done %s908, 128
        $region108: #{tpu_custom_call.1} parent=83 // pred_fallthru
          _
        %s916 = sand.u32 %s61, 1
        %s917 = scalar_lea.sflag [#allocation20], %s916
        %s918 = sand.u32 %s263, 1
        %s919 = smul.addr %s918, 8
        %s920 = scalar_lea.vmem [#allocation21], %s919
        // Predicated region
        $region109: #{tpu_custom_call.1} parent=83 // pred_check
          %p921 = pneg %p276
        $region110: #{tpu_custom_call.1} parent=83 // pred_check_branch
          %923 = sbr.rel (%p921) target = $region112
        $region111: #{tpu_custom_call.1} parent=83 // pred_region
          %924 = dma.done %s917, 128
        $region112: #{tpu_custom_call.1} parent=83 // pred_fallthru
          _
        %s925 = sand.u32 %s61, 1
        %s926 = scalar_lea.sflag [#allocation23], %s925
        %s927 = sand.u32 %s295, 1
        %s928 = smul.addr %s927, 8
        %s929 = scalar_lea.vmem [#allocation22], %s928
        // Predicated region
        $region113: #{tpu_custom_call.1} parent=83 // pred_check
          %p930 = pneg %p308
        $region114: #{tpu_custom_call.1} parent=83 // pred_check_branch
          %932 = sbr.rel (%p930) target = $region116
        $region115: #{tpu_custom_call.1} parent=83 // pred_region
          %933 = dma.done %s926, 128
        $region116: #{tpu_custom_call.1} parent=83 // pred_fallthru
          _
        %s934 = sand.u32 %s61, 1
        %s935 = scalar_lea.sflag [#allocation23], %s934
        %s936 = sand.u32 %s325, 1
        %s937 = smul.addr %s936, 16
        %s938 = scalar_lea.vmem [#allocation24], %s937
        // Predicated region
        $region117: #{tpu_custom_call.1} parent=83 // pred_check
          %p939 = pneg %p338
        $region118: #{tpu_custom_call.1} parent=83 // pred_check_branch
          %941 = sbr.rel (%p939) target = $region120
        $region119: #{tpu_custom_call.1} parent=83 // pred_region
          %942 = dma.done %s935, 256
        $region120: #{tpu_custom_call.1} parent=83 // pred_fallthru
          _
        %s943 = sand.u32 %s61, 1
        %s944 = scalar_lea.sflag [#allocation26], %s943
        %s945 = sand.u32 %s357, 1
        %s946 = smul.addr %s945, 16
        %s947 = scalar_lea.vmem [#allocation25], %s946
        // Predicated region
        $region121: #{tpu_custom_call.1} parent=83 // pred_check
          %p948 = pneg %p370
        $region122: #{tpu_custom_call.1} parent=83 // pred_check_branch
          %950 = sbr.rel (%p948) target = $region124
        $region123: #{tpu_custom_call.1} parent=83 // pred_region
          %951 = dma.done %s944, 256
        $region124: #{tpu_custom_call.1} parent=83 // pred_fallthru
          _
        %s952 = sand.u32 %s61, 1
        %s953 = scalar_lea.sflag [#allocation26], %s952
        %s954 = sand.u32 %s389, 1
        %s955 = smul.addr %s954, 16
        %s956 = scalar_lea.vmem [#allocation27], %s955
        // Predicated region
        $region125: #{tpu_custom_call.1} parent=83 // pred_check
          %p957 = pneg %p402
        $region126: #{tpu_custom_call.1} parent=83 // pred_check_branch
          %959 = sbr.rel (%p957) target = $region128
        $region127: #{tpu_custom_call.1} parent=83 // pred_region
          %960 = dma.done %s953, 256
        $region128: #{tpu_custom_call.1} parent=83 // pred_fallthru
          _
        %s961 = sand.u32 %s421, 1
        %s962 = scalar_lea.sflag [#allocation29], %s961
        %s963 = sand.u32 %s421, 1
        %s964 = smul.addr %s963, 16
        %s965 = scalar_lea.vmem [#allocation28], %s964
        // Predicated region
        $region129: #{tpu_custom_call.1} parent=83 // pred_check
          %p966 = pneg %p434
        $region130: #{tpu_custom_call.1} parent=83 // pred_check_branch
          %968 = sbr.rel (%p966) target = $region132
        $region131: #{tpu_custom_call.1} parent=83 // pred_region
          %969 = dma.done %s962, 256
        $region132: #{tpu_custom_call.1} parent=83 // pred_fallthru
          _
        %s970 = sand.u32 %s73, 1
        %s971 = scalar_lea.sflag [#allocation11], %s970
        %s972 = sand.u32 %s73, 1
        %s973 = smul.addr %s972, 8
        %s974 = scalar_lea.vmem [#allocation10], %s973
        %p975 = pneg %p86
        %p976 = pneg %p83
        %s977 = sand.u32 %s61, 1
        %s978 = scalar_lea.sflag [#allocation14], %s977
        %s979 = sand.u32 %s105, 1
        %s980 = smul.addr %s979, 8
        %s981 = scalar_lea.vmem [#allocation13], %s980
        %p982 = pneg %p118
        %p983 = pneg %p115
        %s984 = sand.u32 %s61, 1
        %s985 = scalar_lea.sflag [#allocation14], %s984
        %s986 = sand.u32 %s137, 1
        %s987 = smul.addr %s986, 8
        %s988 = scalar_lea.vmem [#allocation15], %s987
        %p989 = pneg %p150
        %p990 = pneg %p147
        %s991 = sand.u32 %s61, 1
        %s992 = scalar_lea.sflag [#allocation17], %s991
        %s993 = sand.u32 %s169, 1
        %s994 = smul.addr %s993, 8
        %s995 = scalar_lea.vmem [#allocation16], %s994
        %p996 = pneg %p182
        %p997 = pneg %p179
        %s998 = sand.u32 %s61, 1
        %s999 = scalar_lea.sflag [#allocation17], %s998
        %s1000 = sand.u32 %s199, 1
        %s1001 = smul.addr %s1000, 8
        %s1002 = scalar_lea.vmem [#allocation18], %s1001
        %p1003 = pneg %p212
        %p1004 = pneg %p209
        %s1005 = sand.u32 %s61, 1
        %s1006 = scalar_lea.sflag [#allocation20], %s1005
        %s1007 = sand.u32 %s231, 1
        %s1008 = smul.addr %s1007, 8
        %s1009 = scalar_lea.vmem [#allocation19], %s1008
        %p1010 = pneg %p244
        %p1011 = pneg %p241
        %s1012 = sand.u32 %s61, 1
        %s1013 = scalar_lea.sflag [#allocation20], %s1012
        %s1014 = sand.u32 %s263, 1
        %s1015 = smul.addr %s1014, 8
        %s1016 = scalar_lea.vmem [#allocation21], %s1015
        %p1017 = pneg %p276
        %p1018 = pneg %p273
        %s1019 = sand.u32 %s61, 1
        %s1020 = scalar_lea.sflag [#allocation23], %s1019
        %s1021 = sand.u32 %s295, 1
        %s1022 = smul.addr %s1021, 8
        %s1023 = scalar_lea.vmem [#allocation22], %s1022
        %p1024 = pneg %p308
        %p1025 = pneg %p305
        %s1026 = sand.u32 %s61, 1
        %s1027 = scalar_lea.sflag [#allocation23], %s1026
        %s1028 = sand.u32 %s325, 1
        %s1029 = smul.addr %s1028, 16
        %s1030 = scalar_lea.vmem [#allocation24], %s1029
        %p1031 = pneg %p338
        %p1032 = pneg %p335
        %s1033 = sand.u32 %s61, 1
        %s1034 = scalar_lea.sflag [#allocation26], %s1033
        %s1035 = sand.u32 %s357, 1
        %s1036 = smul.addr %s1035, 16
        %s1037 = scalar_lea.vmem [#allocation25], %s1036
        %p1038 = pneg %p370
        %p1039 = pneg %p367
        %s1040 = sand.u32 %s61, 1
        %s1041 = scalar_lea.sflag [#allocation26], %s1040
        %s1042 = sand.u32 %s389, 1
        %s1043 = smul.addr %s1042, 16
        %s1044 = scalar_lea.vmem [#allocation27], %s1043
        %p1045 = pneg %p402
        %p1046 = pneg %p399
        %s1047 = sand.u32 %s421, 1
        %s1048 = scalar_lea.sflag [#allocation29], %s1047
        %s1049 = sand.u32 %s421, 1
        %s1050 = smul.addr %s1049, 16
        %s1051 = scalar_lea.vmem [#allocation28], %s1050
        %p1052 = pneg %p434
        %p1053 = pneg %p431
        %p1054 = pneg %p455
        %p1055 = pneg %p452
        %p1056 = pneg %p476
        %p1057 = pneg %p473
        %p1058 = pneg %p497
        %p1059 = pneg %p494
        %p1060 = pneg %p518
        %p1061 = pneg %p515
        %p1062 = pneg %p539
        %p1063 = pneg %p536
        %s1064 = smul.u32 %s61, 4
        %s1065 = sld [smem:[#allocation8 + %s1064]]
        %s1066 = smul.u32 %s61, 4
        %s1067 = sadd.s32 %s1066, 1
        %s1068 = sld [smem:[#allocation8 + %s1067]]
        %s1069 = smul.u32 %s61, 4
        %s1070 = sadd.s32 %s1069, 2
        %s1071 = sld [smem:[#allocation8 + %s1070]]
        %s1072 = smul.u32 %s61, 4
        %s1073 = sadd.s32 %s1072, 3
        %s1074 = sld [smem:[#allocation8 + %s1073]]
        %s1075 = smul.u32 %s61, 4
        %s1076 = sld [smem:[#allocation8 + %s1075]]
        %s1077 = smul.u32 %s61, 4
        %s1078 = sadd.s32 %s1077, 1
        %s1079 = sld [smem:[#allocation8 + %s1078]]
        %s1080 = smul.u32 %s61, 4
        %s1081 = sadd.s32 %s1080, 2
        %s1082 = sld [smem:[#allocation8 + %s1081]]
        %s1083 = smul.u32 %s61, 4
        %s1084 = sadd.s32 %s1083, 3
        %s1085 = sld [smem:[#allocation8 + %s1084]]
        %s1086 = smul.u32 %s61, 4
        %s1087 = sld [smem:[#allocation9 + %s1086]]
        %s1088 = smul.u32 %s61, 4
        %s1089 = sadd.s32 %s1088, 1
        %s1090 = sld [smem:[#allocation9 + %s1089]]
        %s1091 = smul.u32 %s61, 4
        %s1092 = sadd.s32 %s1091, 2
        %s1093 = sld [smem:[#allocation9 + %s1092]]
        %s1094 = smul.u32 %s61, 4
        %s1095 = sadd.s32 %s1094, 3
        %s1096 = sld [smem:[#allocation9 + %s1095]]
        %p1098 = scmp.eq.s32.totalorder %s61, 0
        // Predicated region
        $region133: #{tpu_custom_call.1} parent=83 // pred_check
          %p1099 = pneg %p1098
        $region134: #{tpu_custom_call.1} parent=83 // pred_check_branch
          %1101 = sbr.rel (%p1099) target = $region136
        $region135: #{tpu_custom_call.1} parent=83 // pred_region
          %vm1102 = vcmask 0
          %1103 = vst.msk [vmem:[#allocation2] sm:$0x1] %vm1102, 0.0
          %1104 = vst.msk [vmem:[#allocation3] sm:$0x1] %vm1102, 0.0
          %vm1105 = vcmask 130048
          %1106 = vst.msk [vmem:[#allocation5] sm:$0xff] %vm1105, 0.0
          %1107 = vst.msk [vmem:[#allocation5 + $0x8] sm:$0xff] %vm1105, 0.0
          %1108 = vst.msk [vmem:[#allocation6] sm:$0xff] %vm1105, 0.0
          %1109 = vst.msk [vmem:[#allocation6 + $0x8] sm:$0xff] %vm1105, 0.0
          %1110 = vst [vmem:[#allocation30] sm:$0xff] 0.0
          %v1111 = vld [vmem:[%s16] sm:$0x3]
          %v1112 = vld [vmem:[%s17] sm:$0x3]
          %v1113 = vxor.u32 %v1111, 2147483648
          %v1114 = vmul.f32 %v1113, 1.442695
          %v1115 = vpow.pop %v1114
          %v1116 = vadd.f32 %v1115, 1.0
          %v1117 = vrcp.pop %v1116
          %v1118 = vmul.f32 1.0, %v1117
          %vm1119 = vcmp.ge.f32.partialorder %v1111, 0.0
          %v1120 = vsub.f32 1.0, %v1118
          %v1121 = vsel %vm1119, %v1118, %v1120
          %v1122 = vmax.f32 %v1111, 0.0
          %v1123 = vmul.f32 %v1111, %v1112
          %v1124 = vsub.f32 %v1122, %v1123
          %v1125 = vlog2.pop %v1121
          %v1126 = vmul.f32 %v1125, 0.6931472
          %v1127 = vsub.f32 %v1124, %v1126
          %vm1128 = vcmask 58368
          %v1129 = vsel %vm1128, %v1127, 0.0
          %1130 = vadd.xlane.f32.xlu0 %v1129
          %v1131 = vpop.xlane.xlu0 %1130
          %vm1132 = vcmask 1041408
          %v1133 = vsel %vm1132, %v1131, 0.0
          %v1134 = vrot.slane %v1133, 4
          %v1135 = vadd.f32 %v1133, %v1134
          %v1136 = vrot.slane %v1135, 2
          %v1137 = vadd.f32 %v1135, %v1136
          %v1138 = vrot.slane %v1137, 1
          %v1139 = vadd.f32 %v1137, %v1138
          %v1140 = vmul.f32 %v1139, 0.0625
          %1141 = vst.msk [vmem:[#allocation4] sm:$0x1] %vm1102, %v1140
        $region136: #{tpu_custom_call.1} parent=83 // pred_fallthru
          _
        %v1142 = vld [vmem:[%s938] sm:$0xf]
        %v1143 = vld [vmem:[%s938 + $0x4] sm:$0xf]
        %v1144 = vld [vmem:[%s938 + $0x8] sm:$0xf]
        %v1145 = vld [vmem:[%s938 + $0xc] sm:$0xf]
        %v1146 = vld [vmem:[%s947] sm:$0xf]
        %v1147 = vld [vmem:[%s947 + $0x4] sm:$0xf]
        %v1148 = vld [vmem:[%s947 + $0x8] sm:$0xf]
        %v1149 = vld [vmem:[%s947 + $0xc] sm:$0xf]
        %v1150 = vld [vmem:[%s956] sm:$0xf]
        %v1151 = vld [vmem:[%s956 + $0x4] sm:$0xf]
        %v1152 = vld [vmem:[%s956 + $0x8] sm:$0xf]
        %v1153 = vld [vmem:[%s956 + $0xc] sm:$0xf]
        %v1154 = vld [vmem:[%s965] sm:$0xf]
        %v1155 = vld [vmem:[%s965 + $0x4] sm:$0xf]
        %v1156 = vld [vmem:[%s965 + $0x8] sm:$0xf]
        %v1157 = vld [vmem:[%s965 + $0xc] sm:$0xf]
        %v1162 = vunpack.c.l.b16 %v1142
        %v1163 = vunpack.c.l.b16 %v1143
        %v1164 = vunpack.c.l.b16 %v1144
        %v1165 = vunpack.c.l.b16 %v1145
        %v1166 = vpack.c.b16 %v1163, %v1162
        %v1167 = vpack.c.b16 %v1165, %v1164
        %v1174 = vunpack.c.l.b16 %v1146
        %v1175 = vunpack.c.l.b16 %v1147
        %v1176 = vunpack.c.l.b16 %v1148
        %v1177 = vunpack.c.l.b16 %v1149
        %v1178 = vpack.c.b16 %v1175, %v1174
        %v1179 = vpack.c.b16 %v1177, %v1176
        %v1186 = vunpack.c.l.b16 %v1150
        %v1187 = vunpack.c.l.b16 %v1151
        %v1188 = vunpack.c.l.b16 %v1152
        %v1189 = vunpack.c.l.b16 %v1153
        %v1190 = vpack.c.b16 %v1187, %v1186
        %v1191 = vpack.c.b16 %v1189, %v1188
        %v1198 = vunpack.c.l.b16 %v1154
        %v1199 = vunpack.c.l.b16 %v1155
        %v1200 = vunpack.c.l.b16 %v1156
        %v1201 = vunpack.c.l.b16 %v1157
        %v1202 = vpack.c.b16 %v1199, %v1198
        %v1203 = vpack.c.b16 %v1201, %v1200
        %v1206 = vunpack.c.l.bf16 %v1166
        %v1207 = vunpack.c.h.bf16 %v1166
        %v1208 = vunpack.c.l.bf16 %v1167
        %v1209 = vunpack.c.h.bf16 %v1167
        %v1210 = vunpack.c.l.bf16 %v1178
        %v1211 = vunpack.c.h.bf16 %v1178
        %v1212 = vunpack.c.l.bf16 %v1179
        %v1213 = vunpack.c.h.bf16 %v1179
        %v1214 = vunpack.c.l.bf16 %v1190
        %v1215 = vunpack.c.h.bf16 %v1190
        %v1216 = vunpack.c.l.bf16 %v1191
        %v1217 = vunpack.c.h.bf16 %v1191
        %v1218 = vunpack.c.l.bf16 %v1202
        %v1219 = vunpack.c.h.bf16 %v1202
        %v1220 = vunpack.c.l.bf16 %v1203
        %v1221 = vunpack.c.h.bf16 %v1203
        %vm1222 = vcmask 261120
        %v1223 = vsel %vm1222, %v1206, 10000.0
        %v1224 = vsel %vm1222, %v1207, 10000.0
        %v1225 = vsel %vm1222, %v1208, 10000.0
        %v1226 = vsel %vm1222, %v1209, 10000.0
        %v1227 = vsel %vm1222, %v1210, 10000.0
        %v1228 = vsel %vm1222, %v1211, 10000.0
        %v1229 = vsel %vm1222, %v1212, 10000.0
        %v1230 = vsel %vm1222, %v1213, 10000.0
        %v1231 = vsel %vm1222, %v1214, 10000.0
        %v1232 = vsel %vm1222, %v1215, 10000.0
        %v1233 = vsel %vm1222, %v1216, 10000.0
        %v1234 = vsel %vm1222, %v1217, 10000.0
        %v1235 = vsel %vm1222, %v1218, 10000.0
        %v1236 = vsel %vm1222, %v1219, 10000.0
        %v1237 = vsel %vm1222, %v1220, 10000.0
        %v1238 = vsel %vm1222, %v1221, 10000.0
        %v1239 = vlaneseq
        %v1240 = vshrl.u32 %v1239, 7
        %v1241 = vadd.s32 %v1240, 8
        %v1242 = vadd.s32 %v1240, 16
        %v1243 = vadd.s32 %v1240, 24
        %v1244 = vadd.s32 %v1240, 32
        %v1245 = vadd.s32 %v1240, 40
        %v1246 = vadd.s32 %v1240, 48
        %v1247 = vadd.s32 %v1240, 56
        %v1248 = vadd.s32 %v1240, 64
        %v1249 = vadd.s32 %v1240, 72
        %v1250 = vadd.s32 %v1240, 80
        %v1251 = vadd.s32 %v1240, 88
        %v1252 = vadd.s32 %v1240, 96
        %v1253 = vadd.s32 %v1240, 104
        %v1254 = vadd.s32 %v1240, 112
        %v1255 = vadd.s32 %v1240, 120
        %vm1256 = vcmp.lt.s32.totalorder %v1240, 0
        %v1257 = vsub.s32 0, %v1240
        %v1258 = vsel %vm1256, %v1257, %v1240
        %v1259 = vshrl.u32 %v1258, 5
        %v1260 = vand.u32 %v1258, 31
        %v1261 = vsub.s32 0, %v1260
        %v1262 = vsel %vm1256, %v1261, %v1260
        %vm1263 = vcmp.lt.s32.totalorder %v1241, 0
        %v1264 = vsub.s32 0, %v1241
        %v1265 = vsel %vm1263, %v1264, %v1241
        %v1266 = vshrl.u32 %v1265, 5
        %v1267 = vand.u32 %v1265, 31
        %v1268 = vsub.s32 0, %v1267
        %v1269 = vsel %vm1263, %v1268, %v1267
        %vm1270 = vcmp.lt.s32.totalorder %v1242, 0
        %v1271 = vsub.s32 0, %v1242
        %v1272 = vsel %vm1270, %v1271, %v1242
        %v1273 = vshrl.u32 %v1272, 5
        %v1274 = vand.u32 %v1272, 31
        %v1275 = vsub.s32 0, %v1274
        %v1276 = vsel %vm1270, %v1275, %v1274
        %vm1277 = vcmp.lt.s32.totalorder %v1243, 0
        %v1278 = vsub.s32 0, %v1243
        %v1279 = vsel %vm1277, %v1278, %v1243
        %v1280 = vshrl.u32 %v1279, 5
        %v1281 = vand.u32 %v1279, 31
        %v1282 = vsub.s32 0, %v1281
        %v1283 = vsel %vm1277, %v1282, %v1281
        %vm1284 = vcmp.lt.s32.totalorder %v1244, 0
        %v1285 = vsub.s32 0, %v1244
        %v1286 = vsel %vm1284, %v1285, %v1244
        %v1287 = vshrl.u32 %v1286, 5
        %v1288 = vand.u32 %v1286, 31
        %v1289 = vsub.s32 0, %v1288
        %v1290 = vsel %vm1284, %v1289, %v1288
        %vm1291 = vcmp.lt.s32.totalorder %v1245, 0
        %v1292 = vsub.s32 0, %v1245
        %v1293 = vsel %vm1291, %v1292, %v1245
        %v1294 = vshrl.u32 %v1293, 5
        %v1295 = vand.u32 %v1293, 31
        %v1296 = vsub.s32 0, %v1295
        %v1297 = vsel %vm1291, %v1296, %v1295
        %vm1298 = vcmp.lt.s32.totalorder %v1246, 0
        %v1299 = vsub.s32 0, %v1246
        %v1300 = vsel %vm1298, %v1299, %v1246
        %v1301 = vshrl.u32 %v1300, 5
        %v1302 = vand.u32 %v1300, 31
        %v1303 = vsub.s32 0, %v1302
        %v1304 = vsel %vm1298, %v1303, %v1302
        %vm1305 = vcmp.lt.s32.totalorder %v1247, 0
        %v1306 = vsub.s32 0, %v1247
        %v1307 = vsel %vm1305, %v1306, %v1247
        %v1308 = vshrl.u32 %v1307, 5
        %v1309 = vand.u32 %v1307, 31
        %v1310 = vsub.s32 0, %v1309
        %v1311 = vsel %vm1305, %v1310, %v1309
        %vm1312 = vcmp.lt.s32.totalorder %v1248, 0
        %v1313 = vsub.s32 0, %v1248
        %v1314 = vsel %vm1312, %v1313, %v1248
        %v1315 = vshrl.u32 %v1314, 5
        %v1316 = vand.u32 %v1314, 31
        %v1317 = vsub.s32 0, %v1316
        %v1318 = vsel %vm1312, %v1317, %v1316
        %vm1319 = vcmp.lt.s32.totalorder %v1249, 0
        %v1320 = vsub.s32 0, %v1249
        %v1321 = vsel %vm1319, %v1320, %v1249
        %v1322 = vshrl.u32 %v1321, 5
        %v1323 = vand.u32 %v1321, 31
        %v1324 = vsub.s32 0, %v1323
        %v1325 = vsel %vm1319, %v1324, %v1323
        %vm1326 = vcmp.lt.s32.totalorder %v1250, 0
        %v1327 = vsub.s32 0, %v1250
        %v1328 = vsel %vm1326, %v1327, %v1250
        %v1329 = vshrl.u32 %v1328, 5
        %v1330 = vand.u32 %v1328, 31
        %v1331 = vsub.s32 0, %v1330
        %v1332 = vsel %vm1326, %v1331, %v1330
        %vm1333 = vcmp.lt.s32.totalorder %v1251, 0
        %v1334 = vsub.s32 0, %v1251
        %v1335 = vsel %vm1333, %v1334, %v1251
        %v1336 = vshrl.u32 %v1335, 5
        %v1337 = vand.u32 %v1335, 31
        %v1338 = vsub.s32 0, %v1337
        %v1339 = vsel %vm1333, %v1338, %v1337
        %vm1340 = vcmp.lt.s32.totalorder %v1252, 0
        %v1341 = vsub.s32 0, %v1252
        %v1342 = vsel %vm1340, %v1341, %v1252
        %v1343 = vshrl.u32 %v1342, 5
        %v1344 = vand.u32 %v1342, 31
        %v1345 = vsub.s32 0, %v1344
        %v1346 = vsel %vm1340, %v1345, %v1344
        %vm1347 = vcmp.lt.s32.totalorder %v1253, 0
        %v1348 = vsub.s32 0, %v1253
        %v1349 = vsel %vm1347, %v1348, %v1253
        %v1350 = vshrl.u32 %v1349, 5
        %v1351 = vand.u32 %v1349, 31
        %v1352 = vsub.s32 0, %v1351
        %v1353 = vsel %vm1347, %v1352, %v1351
        %vm1354 = vcmp.lt.s32.totalorder %v1254, 0
        %v1355 = vsub.s32 0, %v1254
        %v1356 = vsel %vm1354, %v1355, %v1254
        %v1357 = vshrl.u32 %v1356, 5
        %v1358 = vand.u32 %v1356, 31
        %v1359 = vsub.s32 0, %v1358
        %v1360 = vsel %vm1354, %v1359, %v1358
        %vm1361 = vcmp.lt.s32.totalorder %v1255, 0
        %v1362 = vsub.s32 0, %v1255
        %v1363 = vsel %vm1361, %v1362, %v1255
        %v1364 = vshrl.u32 %v1363, 5
        %v1365 = vand.u32 %v1363, 31
        %v1366 = vsub.s32 0, %v1365
        %v1367 = vsel %vm1361, %v1366, %v1365
        %vm1368 = vcmp.ne.s32.totalorder %v1262, 0
        %vm1369 = vcmp.ne.s32.totalorder %v1269, 0
        %vm1370 = vcmp.ne.s32.totalorder %v1276, 0
        %vm1371 = vcmp.ne.s32.totalorder %v1283, 0
        %vm1372 = vcmp.ne.s32.totalorder %v1290, 0
        %vm1373 = vcmp.ne.s32.totalorder %v1297, 0
        %vm1374 = vcmp.ne.s32.totalorder %v1304, 0
        %vm1375 = vcmp.ne.s32.totalorder %v1311, 0
        %vm1376 = vcmp.ne.s32.totalorder %v1318, 0
        %vm1377 = vcmp.ne.s32.totalorder %v1325, 0
        %vm1378 = vcmp.ne.s32.totalorder %v1332, 0
        %vm1379 = vcmp.ne.s32.totalorder %v1339, 0
        %vm1380 = vcmp.ne.s32.totalorder %v1346, 0
        %vm1381 = vcmp.ne.s32.totalorder %v1353, 0
        %vm1382 = vcmp.ne.s32.totalorder %v1360, 0
        %vm1383 = vcmp.ne.s32.totalorder %v1367, 0
        %vm1384 = vcmp.lt.s32.totalorder %v1262, 0
        %vm1385 = vcmp.lt.s32.totalorder %v1269, 0
        %vm1386 = vcmp.lt.s32.totalorder %v1276, 0
        %vm1387 = vcmp.lt.s32.totalorder %v1283, 0
        %vm1388 = vcmp.lt.s32.totalorder %v1290, 0
        %vm1389 = vcmp.lt.s32.totalorder %v1297, 0
        %vm1390 = vcmp.lt.s32.totalorder %v1304, 0
        %vm1391 = vcmp.lt.s32.totalorder %v1311, 0
        %vm1392 = vcmp.lt.s32.totalorder %v1318, 0
        %vm1393 = vcmp.lt.s32.totalorder %v1325, 0
        %vm1394 = vcmp.lt.s32.totalorder %v1332, 0
        %vm1395 = vcmp.lt.s32.totalorder %v1339, 0
        %vm1396 = vcmp.lt.s32.totalorder %v1346, 0
        %vm1397 = vcmp.lt.s32.totalorder %v1353, 0
        %vm1398 = vcmp.lt.s32.totalorder %v1360, 0
        %vm1399 = vcmp.lt.s32.totalorder %v1367, 0
        %vm1400 = vmand %vm1384, %vm1368
        %vm1401 = vmand %vm1385, %vm1369
        %vm1402 = vmand %vm1386, %vm1370
        %vm1403 = vmand %vm1387, %vm1371
        %vm1404 = vmand %vm1388, %vm1372
        %vm1405 = vmand %vm1389, %vm1373
        %vm1406 = vmand %vm1390, %vm1374
        %vm1407 = vmand %vm1391, %vm1375
        %vm1408 = vmand %vm1392, %vm1376
        %vm1409 = vmand %vm1393, %vm1377
        %vm1410 = vmand %vm1394, %vm1378
        %vm1411 = vmand %vm1395, %vm1379
        %vm1412 = vmand %vm1396, %vm1380
        %vm1413 = vmand %vm1397, %vm1381
        %vm1414 = vmand %vm1398, %vm1382
        %vm1415 = vmand %vm1399, %vm1383
        %v1416 = vadd.s32 %v1262, 32
        %v1417 = vadd.s32 %v1269, 32
        %v1418 = vadd.s32 %v1276, 32
        %v1419 = vadd.s32 %v1283, 32
        %v1420 = vadd.s32 %v1290, 32
        %v1421 = vadd.s32 %v1297, 32
        %v1422 = vadd.s32 %v1304, 32
        %v1423 = vadd.s32 %v1311, 32
        %v1424 = vadd.s32 %v1318, 32
        %v1425 = vadd.s32 %v1325, 32
        %v1426 = vadd.s32 %v1332, 32
        %v1427 = vadd.s32 %v1339, 32
        %v1428 = vadd.s32 %v1346, 32
        %v1429 = vadd.s32 %v1353, 32
        %v1430 = vadd.s32 %v1360, 32
        %v1431 = vadd.s32 %v1367, 32
        %v1432 = vsel %vm1400, %v1416, %v1262
        %v1433 = vsel %vm1401, %v1417, %v1269
        %v1434 = vsel %vm1402, %v1418, %v1276
        %v1435 = vsel %vm1403, %v1419, %v1283
        %v1436 = vsel %vm1404, %v1420, %v1290
        %v1437 = vsel %vm1405, %v1421, %v1297
        %v1438 = vsel %vm1406, %v1422, %v1304
        %v1439 = vsel %vm1407, %v1423, %v1311
        %v1440 = vsel %vm1408, %v1424, %v1318
        %v1441 = vsel %vm1409, %v1425, %v1325
        %v1442 = vsel %vm1410, %v1426, %v1332
        %v1443 = vsel %vm1411, %v1427, %v1339
        %v1444 = vsel %vm1412, %v1428, %v1346
        %v1445 = vsel %vm1413, %v1429, %v1353
        %v1446 = vsel %vm1414, %v1430, %v1360
        %v1447 = vsel %vm1415, %v1431, %v1367
        %v1448 = vlaneseq
        %v1449 = vand.u32 %v1448, 127
        %v1450 = vrot.slane %v1223, 6
        %v1451 = vrot.slane %v1224, 6
        %v1452 = vrot.slane %v1225, 6
        %v1453 = vrot.slane %v1226, 6
        %v1454 = vrot.slane %v1227, 6
        %v1455 = vrot.slane %v1228, 6
        %v1456 = vrot.slane %v1229, 6
        %v1457 = vrot.slane %v1230, 6
        %v1458 = vrot.slane %v1231, 6
        %v1459 = vrot.slane %v1232, 6
        %v1460 = vrot.slane %v1233, 6
        %v1461 = vrot.slane %v1234, 6
        %v1462 = vrot.slane %v1235, 6
        %v1463 = vrot.slane %v1236, 6
        %v1464 = vrot.slane %v1237, 6
        %v1465 = vrot.slane %v1238, 6
        %vm1466 = vcmp.lt.s32.totalorder %v1240, 2
        %v1467 = vsel %vm1466, %v1464, %v1465
        %v1468 = vsel %vm1466, %v1463, %v1464
        %v1469 = vsel %vm1466, %v1462, %v1463
        %v1470 = vsel %vm1466, %v1461, %v1462
        %v1471 = vsel %vm1466, %v1460, %v1461
        %v1472 = vsel %vm1466, %v1459, %v1460
        %v1473 = vsel %vm1466, %v1458, %v1459
        %v1474 = vsel %vm1466, %v1457, %v1458
        %v1475 = vsel %vm1466, %v1456, %v1457
        %v1476 = vsel %vm1466, %v1455, %v1456
        %v1477 = vsel %vm1466, %v1454, %v1455
        %v1478 = vsel %vm1466, %v1453, %v1454
        %v1479 = vsel %vm1466, %v1452, %v1453
        %v1480 = vsel %vm1466, %v1451, %v1452
        %v1481 = vsel %vm1466, %v1450, %v1451
        %v1482 = vsel %vm1466, %v1465, %v1450
        %v1483 = vadd.s32 %v1432, 4294967294
        %v1484 = vadd.s32 %v1433, 4294967294
        %v1485 = vadd.s32 %v1434, 4294967294
        %v1486 = vadd.s32 %v1435, 4294967294
        %v1487 = vadd.s32 %v1436, 4294967294
        %v1488 = vadd.s32 %v1437, 4294967294
        %v1489 = vadd.s32 %v1438, 4294967294
        %v1490 = vadd.s32 %v1439, 4294967294
        %v1491 = vadd.s32 %v1440, 4294967294
        %v1492 = vadd.s32 %v1441, 4294967294
        %v1493 = vadd.s32 %v1442, 4294967294
        %v1494 = vadd.s32 %v1443, 4294967294
        %v1495 = vadd.s32 %v1444, 4294967294
        %v1496 = vadd.s32 %v1445, 4294967294
        %v1497 = vadd.s32 %v1446, 4294967294
        %v1498 = vadd.s32 %v1447, 4294967294
        %vm1499 = vcmp.ge.s32.totalorder %v1483, 0
        %vm1500 = vcmp.ge.s32.totalorder %v1484, 0
        %vm1501 = vcmp.ge.s32.totalorder %v1485, 0
        %vm1502 = vcmp.ge.s32.totalorder %v1486, 0
        %vm1503 = vcmp.ge.s32.totalorder %v1487, 0
        %vm1504 = vcmp.ge.s32.totalorder %v1488, 0
        %vm1505 = vcmp.ge.s32.totalorder %v1489, 0
        %vm1506 = vcmp.ge.s32.totalorder %v1490, 0
        %vm1507 = vcmp.ge.s32.totalorder %v1491, 0
        %vm1508 = vcmp.ge.s32.totalorder %v1492, 0
        %vm1509 = vcmp.ge.s32.totalorder %v1493, 0
        %vm1510 = vcmp.ge.s32.totalorder %v1494, 0
        %vm1511 = vcmp.ge.s32.totalorder %v1495, 0
        %vm1512 = vcmp.ge.s32.totalorder %v1496, 0
        %vm1513 = vcmp.ge.s32.totalorder %v1497, 0
        %vm1514 = vcmp.ge.s32.totalorder %v1498, 0
        %vm1515 = vcmp.lt.s32.totalorder %v1483, 32
        %vm1516 = vcmp.lt.s32.totalorder %v1484, 32
        %vm1517 = vcmp.lt.s32.totalorder %v1485, 32
        %vm1518 = vcmp.lt.s32.totalorder %v1486, 32
        %vm1519 = vcmp.lt.s32.totalorder %v1487, 32
        %vm1520 = vcmp.lt.s32.totalorder %v1488, 32
        %vm1521 = vcmp.lt.s32.totalorder %v1489, 32
        %vm1522 = vcmp.lt.s32.totalorder %v1490, 32
        %vm1523 = vcmp.lt.s32.totalorder %v1491, 32
        %vm1524 = vcmp.lt.s32.totalorder %v1492, 32
        %vm1525 = vcmp.lt.s32.totalorder %v1493, 32
        %vm1526 = vcmp.lt.s32.totalorder %v1494, 32
        %vm1527 = vcmp.lt.s32.totalorder %v1495, 32
        %vm1528 = vcmp.lt.s32.totalorder %v1496, 32
        %vm1529 = vcmp.lt.s32.totalorder %v1497, 32
        %vm1530 = vcmp.lt.s32.totalorder %v1498, 32
        %vm1531 = vmand %vm1499, %vm1515
        %vm1532 = vmand %vm1500, %vm1516
        %vm1533 = vmand %vm1501, %vm1517
        %vm1534 = vmand %vm1502, %vm1518
        %vm1535 = vmand %vm1503, %vm1519
        %vm1536 = vmand %vm1504, %vm1520
        %vm1537 = vmand %vm1505, %vm1521
        %vm1538 = vmand %vm1506, %vm1522
        %vm1539 = vmand %vm1507, %vm1523
        %vm1540 = vmand %vm1508, %vm1524
        %vm1541 = vmand %vm1509, %vm1525
        %vm1542 = vmand %vm1510, %vm1526
        %vm1543 = vmand %vm1511, %vm1527
        %vm1544 = vmand %vm1512, %vm1528
        %vm1545 = vmand %vm1513, %vm1529
        %vm1546 = vmand %vm1514, %vm1530
        %v1547 = vsel %vm1531, %v1482, 10000.0
        %v1548 = vsel %vm1532, %v1481, 10000.0
        %v1549 = vsel %vm1533, %v1480, 10000.0
        %v1550 = vsel %vm1534, %v1479, 10000.0
        %v1551 = vsel %vm1535, %v1478, 10000.0
        %v1552 = vsel %vm1536, %v1477, 10000.0
        %v1553 = vsel %vm1537, %v1476, 10000.0
        %v1554 = vsel %vm1538, %v1475, 10000.0
        %v1555 = vsel %vm1539, %v1474, 10000.0
        %v1556 = vsel %vm1540, %v1473, 10000.0
        %v1557 = vsel %vm1541, %v1472, 10000.0
        %v1558 = vsel %vm1542, %v1471, 10000.0
        %v1559 = vsel %vm1543, %v1470, 10000.0
        %v1560 = vsel %vm1544, %v1469, 10000.0
        %v1561 = vsel %vm1545, %v1468, 10000.0
        %v1562 = vsel %vm1546, %v1467, 10000.0
        %v1563 = vmin.f32 %v1223, %v1547
        %v1564 = vmin.f32 %v1224, %v1548
        %v1565 = vmin.f32 %v1225, %v1549
        %v1566 = vmin.f32 %v1226, %v1550
        %v1567 = vmin.f32 %v1227, %v1551
        %v1568 = vmin.f32 %v1228, %v1552
        %v1569 = vmin.f32 %v1229, %v1553
        %v1570 = vmin.f32 %v1230, %v1554
        %v1571 = vmin.f32 %v1231, %v1555
        %v1572 = vmin.f32 %v1232, %v1556
        %v1573 = vmin.f32 %v1233, %v1557
        %v1574 = vmin.f32 %v1234, %v1558
        %v1575 = vmin.f32 %v1235, %v1559
        %v1576 = vmin.f32 %v1236, %v1560
        %v1577 = vmin.f32 %v1237, %v1561
        %v1578 = vmin.f32 %v1238, %v1562
        %v1579 = vrot.slane %v1223, 7
        %v1580 = vrot.slane %v1224, 7
        %v1581 = vrot.slane %v1225, 7
        %v1582 = vrot.slane %v1226, 7
        %v1583 = vrot.slane %v1227, 7
        %v1584 = vrot.slane %v1228, 7
        %v1585 = vrot.slane %v1229, 7
        %v1586 = vrot.slane %v1230, 7
        %v1587 = vrot.slane %v1231, 7
        %v1588 = vrot.slane %v1232, 7
        %v1589 = vrot.slane %v1233, 7
        %v1590 = vrot.slane %v1234, 7
        %v1591 = vrot.slane %v1235, 7
        %v1592 = vrot.slane %v1236, 7
        %v1593 = vrot.slane %v1237, 7
        %v1594 = vrot.slane %v1238, 7
        %vm1595 = vcmp.lt.s32.totalorder %v1240, 1
        %v1596 = vsel %vm1595, %v1593, %v1594
        %v1597 = vsel %vm1595, %v1592, %v1593
        %v1598 = vsel %vm1595, %v1591, %v1592
        %v1599 = vsel %vm1595, %v1590, %v1591
        %v1600 = vsel %vm1595, %v1589, %v1590
        %v1601 = vsel %vm1595, %v1588, %v1589
        %v1602 = vsel %vm1595, %v1587, %v1588
        %v1603 = vsel %vm1595, %v1586, %v1587
        %v1604 = vsel %vm1595, %v1585, %v1586
        %v1605 = vsel %vm1595, %v1584, %v1585
        %v1606 = vsel %vm1595, %v1583, %v1584
        %v1607 = vsel %vm1595, %v1582, %v1583
        %v1608 = vsel %vm1595, %v1581, %v1582
        %v1609 = vsel %vm1595, %v1580, %v1581
        %v1610 = vsel %vm1595, %v1579, %v1580
        %v1611 = vsel %vm1595, %v1594, %v1579
        %v1612 = vadd.s32 %v1432, 4294967295
        %v1613 = vadd.s32 %v1433, 4294967295
        %v1614 = vadd.s32 %v1434, 4294967295
        %v1615 = vadd.s32 %v1435, 4294967295
        %v1616 = vadd.s32 %v1436, 4294967295
        %v1617 = vadd.s32 %v1437, 4294967295
        %v1618 = vadd.s32 %v1438, 4294967295
        %v1619 = vadd.s32 %v1439, 4294967295
        %v1620 = vadd.s32 %v1440, 4294967295
        %v1621 = vadd.s32 %v1441, 4294967295
        %v1622 = vadd.s32 %v1442, 4294967295
        %v1623 = vadd.s32 %v1443, 4294967295
        %v1624 = vadd.s32 %v1444, 4294967295
        %v1625 = vadd.s32 %v1445, 4294967295
        %v1626 = vadd.s32 %v1446, 4294967295
        %v1627 = vadd.s32 %v1447, 4294967295
        %vm1628 = vcmp.ge.s32.totalorder %v1612, 0
        %vm1629 = vcmp.ge.s32.totalorder %v1613, 0
        %vm1630 = vcmp.ge.s32.totalorder %v1614, 0
        %vm1631 = vcmp.ge.s32.totalorder %v1615, 0
        %vm1632 = vcmp.ge.s32.totalorder %v1616, 0
        %vm1633 = vcmp.ge.s32.totalorder %v1617, 0
        %vm1634 = vcmp.ge.s32.totalorder %v1618, 0
        %vm1635 = vcmp.ge.s32.totalorder %v1619, 0
        %vm1636 = vcmp.ge.s32.totalorder %v1620, 0
        %vm1637 = vcmp.ge.s32.totalorder %v1621, 0
        %vm1638 = vcmp.ge.s32.totalorder %v1622, 0
        %vm1639 = vcmp.ge.s32.totalorder %v1623, 0
        %vm1640 = vcmp.ge.s32.totalorder %v1624, 0
        %vm1641 = vcmp.ge.s32.totalorder %v1625, 0
        %vm1642 = vcmp.ge.s32.totalorder %v1626, 0
        %vm1643 = vcmp.ge.s32.totalorder %v1627, 0
        %vm1644 = vcmp.lt.s32.totalorder %v1612, 32
        %vm1645 = vcmp.lt.s32.totalorder %v1613, 32
        %vm1646 = vcmp.lt.s32.totalorder %v1614, 32
        %vm1647 = vcmp.lt.s32.totalorder %v1615, 32
        %vm1648 = vcmp.lt.s32.totalorder %v1616, 32
        %vm1649 = vcmp.lt.s32.totalorder %v1617, 32
        %vm1650 = vcmp.lt.s32.totalorder %v1618, 32
        %vm1651 = vcmp.lt.s32.totalorder %v1619, 32
        %vm1652 = vcmp.lt.s32.totalorder %v1620, 32
        %vm1653 = vcmp.lt.s32.totalorder %v1621, 32
        %vm1654 = vcmp.lt.s32.totalorder %v1622, 32
        %vm1655 = vcmp.lt.s32.totalorder %v1623, 32
        %vm1656 = vcmp.lt.s32.totalorder %v1624, 32
        %vm1657 = vcmp.lt.s32.totalorder %v1625, 32
        %vm1658 = vcmp.lt.s32.totalorder %v1626, 32
        %vm1659 = vcmp.lt.s32.totalorder %v1627, 32
        %vm1660 = vmand %vm1628, %vm1644
        %vm1661 = vmand %vm1629, %vm1645
        %vm1662 = vmand %vm1630, %vm1646
        %vm1663 = vmand %vm1631, %vm1647
        %vm1664 = vmand %vm1632, %vm1648
        %vm1665 = vmand %vm1633, %vm1649
        %vm1666 = vmand %vm1634, %vm1650
        %vm1667 = vmand %vm1635, %vm1651
        %vm1668 = vmand %vm1636, %vm1652
        %vm1669 = vmand %vm1637, %vm1653
        %vm1670 = vmand %vm1638, %vm1654
        %vm1671 = vmand %vm1639, %vm1655
        %vm1672 = vmand %vm1640, %vm1656
        %vm1673 = vmand %vm1641, %vm1657
        %vm1674 = vmand %vm1642, %vm1658
        %vm1675 = vmand %vm1643, %vm1659
        %v1676 = vsel %vm1660, %v1611, 10000.0
        %v1677 = vsel %vm1661, %v1610, 10000.0
        %v1678 = vsel %vm1662, %v1609, 10000.0
        %v1679 = vsel %vm1663, %v1608, 10000.0
        %v1680 = vsel %vm1664, %v1607, 10000.0
        %v1681 = vsel %vm1665, %v1606, 10000.0
        %v1682 = vsel %vm1666, %v1605, 10000.0
        %v1683 = vsel %vm1667, %v1604, 10000.0
        %v1684 = vsel %vm1668, %v1603, 10000.0
        %v1685 = vsel %vm1669, %v1602, 10000.0
        %v1686 = vsel %vm1670, %v1601, 10000.0
        %v1687 = vsel %vm1671, %v1600, 10000.0
        %v1688 = vsel %vm1672, %v1599, 10000.0
        %v1689 = vsel %vm1673, %v1598, 10000.0
        %v1690 = vsel %vm1674, %v1597, 10000.0
        %v1691 = vsel %vm1675, %v1596, 10000.0
        %v1692 = vmin.f32 %v1563, %v1676
        %v1693 = vmin.f32 %v1564, %v1677
        %v1694 = vmin.f32 %v1565, %v1678
        %v1695 = vmin.f32 %v1566, %v1679
        %v1696 = vmin.f32 %v1567, %v1680
        %v1697 = vmin.f32 %v1568, %v1681
        %v1698 = vmin.f32 %v1569, %v1682
        %v1699 = vmin.f32 %v1570, %v1683
        %v1700 = vmin.f32 %v1571, %v1684
        %v1701 = vmin.f32 %v1572, %v1685
        %v1702 = vmin.f32 %v1573, %v1686
        %v1703 = vmin.f32 %v1574, %v1687
        %v1704 = vmin.f32 %v1575, %v1688
        %v1705 = vmin.f32 %v1576, %v1689
        %v1706 = vmin.f32 %v1577, %v1690
        %v1707 = vmin.f32 %v1578, %v1691
        %v1708 = vrot.slane %v1223, 1
        %v1709 = vrot.slane %v1224, 1
        %v1710 = vrot.slane %v1225, 1
        %v1711 = vrot.slane %v1226, 1
        %v1712 = vrot.slane %v1227, 1
        %v1713 = vrot.slane %v1228, 1
        %v1714 = vrot.slane %v1229, 1
        %v1715 = vrot.slane %v1230, 1
        %v1716 = vrot.slane %v1231, 1
        %v1717 = vrot.slane %v1232, 1
        %v1718 = vrot.slane %v1233, 1
        %v1719 = vrot.slane %v1234, 1
        %v1720 = vrot.slane %v1235, 1
        %v1721 = vrot.slane %v1236, 1
        %v1722 = vrot.slane %v1237, 1
        %v1723 = vrot.slane %v1238, 1
        %vm1724 = vcmp.lt.s32.totalorder %v1240, 7
        %v1725 = vsel %vm1724, %v1722, %v1723
        %v1726 = vsel %vm1724, %v1721, %v1722
        %v1727 = vsel %vm1724, %v1720, %v1721
        %v1728 = vsel %vm1724, %v1719, %v1720
        %v1729 = vsel %vm1724, %v1718, %v1719
        %v1730 = vsel %vm1724, %v1717, %v1718
        %v1731 = vsel %vm1724, %v1716, %v1717
        %v1732 = vsel %vm1724, %v1715, %v1716
        %v1733 = vsel %vm1724, %v1714, %v1715
        %v1734 = vsel %vm1724, %v1713, %v1714
        %v1735 = vsel %vm1724, %v1712, %v1713
        %v1736 = vsel %vm1724, %v1711, %v1712
        %v1737 = vsel %vm1724, %v1710, %v1711
        %v1738 = vsel %vm1724, %v1709, %v1710
        %v1739 = vsel %vm1724, %v1708, %v1709
        %v1740 = vsel %vm1724, %v1723, %v1708
        %v1741 = vadd.s32 %v1432, 1
        %v1742 = vadd.s32 %v1433, 1
        %v1743 = vadd.s32 %v1434, 1
        %v1744 = vadd.s32 %v1435, 1
        %v1745 = vadd.s32 %v1436, 1
        %v1746 = vadd.s32 %v1437, 1
        %v1747 = vadd.s32 %v1438, 1
        %v1748 = vadd.s32 %v1439, 1
        %v1749 = vadd.s32 %v1440, 1
        %v1750 = vadd.s32 %v1441, 1
        %v1751 = vadd.s32 %v1442, 1
        %v1752 = vadd.s32 %v1443, 1
        %v1753 = vadd.s32 %v1444, 1
        %v1754 = vadd.s32 %v1445, 1
        %v1755 = vadd.s32 %v1446, 1
        %v1756 = vadd.s32 %v1447, 1
        %vm1757 = vcmp.ge.s32.totalorder %v1741, 0
        %vm1758 = vcmp.ge.s32.totalorder %v1742, 0
        %vm1759 = vcmp.ge.s32.totalorder %v1743, 0
        %vm1760 = vcmp.ge.s32.totalorder %v1744, 0
        %vm1761 = vcmp.ge.s32.totalorder %v1745, 0
        %vm1762 = vcmp.ge.s32.totalorder %v1746, 0
        %vm1763 = vcmp.ge.s32.totalorder %v1747, 0
        %vm1764 = vcmp.ge.s32.totalorder %v1748, 0
        %vm1765 = vcmp.ge.s32.totalorder %v1749, 0
        %vm1766 = vcmp.ge.s32.totalorder %v1750, 0
        %vm1767 = vcmp.ge.s32.totalorder %v1751, 0
        %vm1768 = vcmp.ge.s32.totalorder %v1752, 0
        %vm1769 = vcmp.ge.s32.totalorder %v1753, 0
        %vm1770 = vcmp.ge.s32.totalorder %v1754, 0
        %vm1771 = vcmp.ge.s32.totalorder %v1755, 0
        %vm1772 = vcmp.ge.s32.totalorder %v1756, 0
        %vm1773 = vcmp.lt.s32.totalorder %v1741, 32
        %vm1774 = vcmp.lt.s32.totalorder %v1742, 32
        %vm1775 = vcmp.lt.s32.totalorder %v1743, 32
        %vm1776 = vcmp.lt.s32.totalorder %v1744, 32
        %vm1777 = vcmp.lt.s32.totalorder %v1745, 32
        %vm1778 = vcmp.lt.s32.totalorder %v1746, 32
        %vm1779 = vcmp.lt.s32.totalorder %v1747, 32
        %vm1780 = vcmp.lt.s32.totalorder %v1748, 32
        %vm1781 = vcmp.lt.s32.totalorder %v1749, 32
        %vm1782 = vcmp.lt.s32.totalorder %v1750, 32
        %vm1783 = vcmp.lt.s32.totalorder %v1751, 32
        %vm1784 = vcmp.lt.s32.totalorder %v1752, 32
        %vm1785 = vcmp.lt.s32.totalorder %v1753, 32
        %vm1786 = vcmp.lt.s32.totalorder %v1754, 32
        %vm1787 = vcmp.lt.s32.totalorder %v1755, 32
        %vm1788 = vcmp.lt.s32.totalorder %v1756, 32
        %vm1789 = vmand %vm1757, %vm1773
        %vm1790 = vmand %vm1758, %vm1774
        %vm1791 = vmand %vm1759, %vm1775
        %vm1792 = vmand %vm1760, %vm1776
        %vm1793 = vmand %vm1761, %vm1777
        %vm1794 = vmand %vm1762, %vm1778
        %vm1795 = vmand %vm1763, %vm1779
        %vm1796 = vmand %vm1764, %vm1780
        %vm1797 = vmand %vm1765, %vm1781
        %vm1798 = vmand %vm1766, %vm1782
        %vm1799 = vmand %vm1767, %vm1783
        %vm1800 = vmand %vm1768, %vm1784
        %vm1801 = vmand %vm1769, %vm1785
        %vm1802 = vmand %vm1770, %vm1786
        %vm1803 = vmand %vm1771, %vm1787
        %vm1804 = vmand %vm1772, %vm1788
        %v1805 = vsel %vm1789, %v1739, 10000.0
        %v1806 = vsel %vm1790, %v1738, 10000.0
        %v1807 = vsel %vm1791, %v1737, 10000.0
        %v1808 = vsel %vm1792, %v1736, 10000.0
        %v1809 = vsel %vm1793, %v1735, 10000.0
        %v1810 = vsel %vm1794, %v1734, 10000.0
        %v1811 = vsel %vm1795, %v1733, 10000.0
        %v1812 = vsel %vm1796, %v1732, 10000.0
        %v1813 = vsel %vm1797, %v1731, 10000.0
        %v1814 = vsel %vm1798, %v1730, 10000.0
        %v1815 = vsel %vm1799, %v1729, 10000.0
        %v1816 = vsel %vm1800, %v1728, 10000.0
        %v1817 = vsel %vm1801, %v1727, 10000.0
        %v1818 = vsel %vm1802, %v1726, 10000.0
        %v1819 = vsel %vm1803, %v1725, 10000.0
        %v1820 = vsel %vm1804, %v1740, 10000.0
        %v1821 = vmin.f32 %v1692, %v1805
        %v1822 = vmin.f32 %v1693, %v1806
        %v1823 = vmin.f32 %v1694, %v1807
        %v1824 = vmin.f32 %v1695, %v1808
        %v1825 = vmin.f32 %v1696, %v1809
        %v1826 = vmin.f32 %v1697, %v1810
        %v1827 = vmin.f32 %v1698, %v1811
        %v1828 = vmin.f32 %v1699, %v1812
        %v1829 = vmin.f32 %v1700, %v1813
        %v1830 = vmin.f32 %v1701, %v1814
        %v1831 = vmin.f32 %v1702, %v1815
        %v1832 = vmin.f32 %v1703, %v1816
        %v1833 = vmin.f32 %v1704, %v1817
        %v1834 = vmin.f32 %v1705, %v1818
        %v1835 = vmin.f32 %v1706, %v1819
        %v1836 = vmin.f32 %v1707, %v1820
        %v1837 = vrot.slane %v1223, 2
        %v1838 = vrot.slane %v1224, 2
        %v1839 = vrot.slane %v1225, 2
        %v1840 = vrot.slane %v1226, 2
        %v1841 = vrot.slane %v1227, 2
        %v1842 = vrot.slane %v1228, 2
        %v1843 = vrot.slane %v1229, 2
        %v1844 = vrot.slane %v1230, 2
        %v1845 = vrot.slane %v1231, 2
        %v1846 = vrot.slane %v1232, 2
        %v1847 = vrot.slane %v1233, 2
        %v1848 = vrot.slane %v1234, 2
        %v1849 = vrot.slane %v1235, 2
        %v1850 = vrot.slane %v1236, 2
        %v1851 = vrot.slane %v1237, 2
        %v1852 = vrot.slane %v1238, 2
        %vm1853 = vcmp.lt.s32.totalorder %v1240, 6
        %v1854 = vsel %vm1853, %v1851, %v1852
        %v1855 = vsel %vm1853, %v1850, %v1851
        %v1856 = vsel %vm1853, %v1849, %v1850
        %v1857 = vsel %vm1853, %v1848, %v1849
        %v1858 = vsel %vm1853, %v1847, %v1848
        %v1859 = vsel %vm1853, %v1846, %v1847
        %v1860 = vsel %vm1853, %v1845, %v1846
        %v1861 = vsel %vm1853, %v1844, %v1845
        %v1862 = vsel %vm1853, %v1843, %v1844
        %v1863 = vsel %vm1853, %v1842, %v1843
        %v1864 = vsel %vm1853, %v1841, %v1842
        %v1865 = vsel %vm1853, %v1840, %v1841
        %v1866 = vsel %vm1853, %v1839, %v1840
        %v1867 = vsel %vm1853, %v1838, %v1839
        %v1868 = vsel %vm1853, %v1837, %v1838
        %v1869 = vsel %vm1853, %v1852, %v1837
        %v1870 = vadd.s32 %v1432, 2
        %v1871 = vadd.s32 %v1433, 2
        %v1872 = vadd.s32 %v1434, 2
        %v1873 = vadd.s32 %v1435, 2
        %v1874 = vadd.s32 %v1436, 2
        %v1875 = vadd.s32 %v1437, 2
        %v1876 = vadd.s32 %v1438, 2
        %v1877 = vadd.s32 %v1439, 2
        %v1878 = vadd.s32 %v1440, 2
        %v1879 = vadd.s32 %v1441, 2
        %v1880 = vadd.s32 %v1442, 2
        %v1881 = vadd.s32 %v1443, 2
        %v1882 = vadd.s32 %v1444, 2
        %v1883 = vadd.s32 %v1445, 2
        %v1884 = vadd.s32 %v1446, 2
        %v1885 = vadd.s32 %v1447, 2
        %vm1886 = vcmp.ge.s32.totalorder %v1870, 0
        %vm1887 = vcmp.ge.s32.totalorder %v1871, 0
        %vm1888 = vcmp.ge.s32.totalorder %v1872, 0
        %vm1889 = vcmp.ge.s32.totalorder %v1873, 0
        %vm1890 = vcmp.ge.s32.totalorder %v1874, 0
        %vm1891 = vcmp.ge.s32.totalorder %v1875, 0
        %vm1892 = vcmp.ge.s32.totalorder %v1876, 0
        %vm1893 = vcmp.ge.s32.totalorder %v1877, 0
        %vm1894 = vcmp.ge.s32.totalorder %v1878, 0
        %vm1895 = vcmp.ge.s32.totalorder %v1879, 0
        %vm1896 = vcmp.ge.s32.totalorder %v1880, 0
        %vm1897 = vcmp.ge.s32.totalorder %v1881, 0
        %vm1898 = vcmp.ge.s32.totalorder %v1882, 0
        %vm1899 = vcmp.ge.s32.totalorder %v1883, 0
        %vm1900 = vcmp.ge.s32.totalorder %v1884, 0
        %vm1901 = vcmp.ge.s32.totalorder %v1885, 0
        %vm1902 = vcmp.lt.s32.totalorder %v1870, 32
        %vm1903 = vcmp.lt.s32.totalorder %v1871, 32
        %vm1904 = vcmp.lt.s32.totalorder %v1872, 32
        %vm1905 = vcmp.lt.s32.totalorder %v1873, 32
        %vm1906 = vcmp.lt.s32.totalorder %v1874, 32
        %vm1907 = vcmp.lt.s32.totalorder %v1875, 32
        %vm1908 = vcmp.lt.s32.totalorder %v1876, 32
        %vm1909 = vcmp.lt.s32.totalorder %v1877, 32
        %vm1910 = vcmp.lt.s32.totalorder %v1878, 32
        %vm1911 = vcmp.lt.s32.totalorder %v1879, 32
        %vm1912 = vcmp.lt.s32.totalorder %v1880, 32
        %vm1913 = vcmp.lt.s32.totalorder %v1881, 32
        %vm1914 = vcmp.lt.s32.totalorder %v1882, 32
        %vm1915 = vcmp.lt.s32.totalorder %v1883, 32
        %vm1916 = vcmp.lt.s32.totalorder %v1884, 32
        %vm1917 = vcmp.lt.s32.totalorder %v1885, 32
        %vm1918 = vmand %vm1886, %vm1902
        %vm1919 = vmand %vm1887, %vm1903
        %vm1920 = vmand %vm1888, %vm1904
        %vm1921 = vmand %vm1889, %vm1905
        %vm1922 = vmand %vm1890, %vm1906
        %vm1923 = vmand %vm1891, %vm1907
        %vm1924 = vmand %vm1892, %vm1908
        %vm1925 = vmand %vm1893, %vm1909
        %vm1926 = vmand %vm1894, %vm1910
        %vm1927 = vmand %vm1895, %vm1911
        %vm1928 = vmand %vm1896, %vm1912
        %vm1929 = vmand %vm1897, %vm1913
        %vm1930 = vmand %vm1898, %vm1914
        %vm1931 = vmand %vm1899, %vm1915
        %vm1932 = vmand %vm1900, %vm1916
        %vm1933 = vmand %vm1901, %vm1917
        %v1934 = vsel %vm1918, %v1868, 10000.0
        %v1935 = vsel %vm1919, %v1867, 10000.0
        %v1936 = vsel %vm1920, %v1866, 10000.0
        %v1937 = vsel %vm1921, %v1865, 10000.0
        %v1938 = vsel %vm1922, %v1864, 10000.0
        %v1939 = vsel %vm1923, %v1863, 10000.0
        %v1940 = vsel %vm1924, %v1862, 10000.0
        %v1941 = vsel %vm1925, %v1861, 10000.0
        %v1942 = vsel %vm1926, %v1860, 10000.0
        %v1943 = vsel %vm1927, %v1859, 10000.0
        %v1944 = vsel %vm1928, %v1858, 10000.0
        %v1945 = vsel %vm1929, %v1857, 10000.0
        %v1946 = vsel %vm1930, %v1856, 10000.0
        %v1947 = vsel %vm1931, %v1855, 10000.0
        %v1948 = vsel %vm1932, %v1854, 10000.0
        %v1949 = vsel %vm1933, %v1869, 10000.0
        %v1950 = vmin.f32 %v1821, %v1934
        %v1951 = vmin.f32 %v1822, %v1935
        %v1952 = vmin.f32 %v1823, %v1936
        %v1953 = vmin.f32 %v1824, %v1937
        %v1954 = vmin.f32 %v1825, %v1938
        %v1955 = vmin.f32 %v1826, %v1939
        %v1956 = vmin.f32 %v1827, %v1940
        %v1957 = vmin.f32 %v1828, %v1941
        %v1958 = vmin.f32 %v1829, %v1942
        %v1959 = vmin.f32 %v1830, %v1943
        %v1960 = vmin.f32 %v1831, %v1944
        %v1961 = vmin.f32 %v1832, %v1945
        %v1962 = vmin.f32 %v1833, %v1946
        %v1963 = vmin.f32 %v1834, %v1947
        %v1964 = vmin.f32 %v1835, %v1948
        %v1965 = vmin.f32 %v1836, %v1949
        %1966 = vrot.lane.b32.xlu0 %v1950, 2
        %v1967 = vpop.permute.xlu0 %1966
        %1968 = vrot.lane.b32.xlu0 %v1951, 2
        %v1969 = vpop.permute.xlu0 %1968
        %1970 = vrot.lane.b32.xlu0 %v1952, 2
        %v1971 = vpop.permute.xlu0 %1970
        %1972 = vrot.lane.b32.xlu0 %v1953, 2
        %v1973 = vpop.permute.xlu0 %1972
        %1974 = vrot.lane.b32.xlu0 %v1954, 2
        %v1975 = vpop.permute.xlu0 %1974
        %1976 = vrot.lane.b32.xlu0 %v1955, 2
        %v1977 = vpop.permute.xlu0 %1976
        %1978 = vrot.lane.b32.xlu0 %v1956, 2
        %v1979 = vpop.permute.xlu0 %1978
        %1980 = vrot.lane.b32.xlu0 %v1957, 2
        %v1981 = vpop.permute.xlu0 %1980
        %1982 = vrot.lane.b32.xlu0 %v1958, 2
        %v1983 = vpop.permute.xlu0 %1982
        %1984 = vrot.lane.b32.xlu0 %v1959, 2
        %v1985 = vpop.permute.xlu0 %1984
        %1986 = vrot.lane.b32.xlu0 %v1960, 2
        %v1987 = vpop.permute.xlu0 %1986
        %1988 = vrot.lane.b32.xlu0 %v1961, 2
        %v1989 = vpop.permute.xlu0 %1988
        %1990 = vrot.lane.b32.xlu0 %v1962, 2
        %v1991 = vpop.permute.xlu0 %1990
        %1992 = vrot.lane.b32.xlu0 %v1963, 2
        %v1993 = vpop.permute.xlu0 %1992
        %1994 = vrot.lane.b32.xlu0 %v1964, 2
        %v1995 = vpop.permute.xlu0 %1994
        %1996 = vrot.lane.b32.xlu0 %v1965, 2
        %v1997 = vpop.permute.xlu0 %1996
        %v1998 = vadd.s32 %v1449, 4294967294
        %vm1999 = vcmp.ge.s32.totalorder %v1998, 0
        %vm2000 = vcmp.lt.s32.totalorder %v1998, 32
        %vm2001 = vmand %vm1999, %vm2000
        %v2002 = vsel %vm2001, %v1967, 10000.0
        %v2003 = vsel %vm2001, %v1969, 10000.0
        %v2004 = vsel %vm2001, %v1971, 10000.0
        %v2005 = vsel %vm2001, %v1973, 10000.0
        %v2006 = vsel %vm2001, %v1975, 10000.0
        %v2007 = vsel %vm2001, %v1977, 10000.0
        %v2008 = vsel %vm2001, %v1979, 10000.0
        %v2009 = vsel %vm2001, %v1981, 10000.0
        %v2010 = vsel %vm2001, %v1983, 10000.0
        %v2011 = vsel %vm2001, %v1985, 10000.0
        %v2012 = vsel %vm2001, %v1987, 10000.0
        %v2013 = vsel %vm2001, %v1989, 10000.0
        %v2014 = vsel %vm2001, %v1991, 10000.0
        %v2015 = vsel %vm2001, %v1993, 10000.0
        %v2016 = vsel %vm2001, %v1995, 10000.0
        %v2017 = vsel %vm2001, %v1997, 10000.0
        %v2018 = vmin.f32 %v1950, %v2002
        %v2019 = vmin.f32 %v1951, %v2003
        %v2020 = vmin.f32 %v1952, %v2004
        %v2021 = vmin.f32 %v1953, %v2005
        %v2022 = vmin.f32 %v1954, %v2006
        %v2023 = vmin.f32 %v1955, %v2007
        %v2024 = vmin.f32 %v1956, %v2008
        %v2025 = vmin.f32 %v1957, %v2009
        %v2026 = vmin.f32 %v1958, %v2010
        %v2027 = vmin.f32 %v1959, %v2011
        %v2028 = vmin.f32 %v1960, %v2012
        %v2029 = vmin.f32 %v1961, %v2013
        %v2030 = vmin.f32 %v1962, %v2014
        %v2031 = vmin.f32 %v1963, %v2015
        %v2032 = vmin.f32 %v1964, %v2016
        %v2033 = vmin.f32 %v1965, %v2017
        %2034 = vrot.lane.b32.xlu0 %v1950, 1
        %v2035 = vpop.permute.xlu0 %2034
        %2036 = vrot.lane.b32.xlu0 %v1951, 1
        %v2037 = vpop.permute.xlu0 %2036
        %2038 = vrot.lane.b32.xlu0 %v1952, 1
        %v2039 = vpop.permute.xlu0 %2038
        %2040 = vrot.lane.b32.xlu0 %v1953, 1
        %v2041 = vpop.permute.xlu0 %2040
        %2042 = vrot.lane.b32.xlu0 %v1954, 1
        %v2043 = vpop.permute.xlu0 %2042
        %2044 = vrot.lane.b32.xlu0 %v1955, 1
        %v2045 = vpop.permute.xlu0 %2044
        %2046 = vrot.lane.b32.xlu0 %v1956, 1
        %v2047 = vpop.permute.xlu0 %2046
        %2048 = vrot.lane.b32.xlu0 %v1957, 1
        %v2049 = vpop.permute.xlu0 %2048
        %2050 = vrot.lane.b32.xlu0 %v1958, 1
        %v2051 = vpop.permute.xlu0 %2050
        %2052 = vrot.lane.b32.xlu0 %v1959, 1
        %v2053 = vpop.permute.xlu0 %2052
        %2054 = vrot.lane.b32.xlu0 %v1960, 1
        %v2055 = vpop.permute.xlu0 %2054
        %2056 = vrot.lane.b32.xlu0 %v1961, 1
        %v2057 = vpop.permute.xlu0 %2056
        %2058 = vrot.lane.b32.xlu0 %v1962, 1
        %v2059 = vpop.permute.xlu0 %2058
        %2060 = vrot.lane.b32.xlu0 %v1963, 1
        %v2061 = vpop.permute.xlu0 %2060
        %2062 = vrot.lane.b32.xlu0 %v1964, 1
        %v2063 = vpop.permute.xlu0 %2062
        %2064 = vrot.lane.b32.xlu0 %v1965, 1
        %v2065 = vpop.permute.xlu0 %2064
        %v2066 = vadd.s32 %v1449, 4294967295
        %vm2067 = vcmp.ge.s32.totalorder %v2066, 0
        %vm2068 = vcmp.lt.s32.totalorder %v2066, 32
        %vm2069 = vmand %vm2067, %vm2068
        %v2070 = vsel %vm2069, %v2035, 10000.0
        %v2071 = vsel %vm2069, %v2037, 10000.0
        %v2072 = vsel %vm2069, %v2039, 10000.0
        %v2073 = vsel %vm2069, %v2041, 10000.0
        %v2074 = vsel %vm2069, %v2043, 10000.0
        %v2075 = vsel %vm2069, %v2045, 10000.0
        %v2076 = vsel %vm2069, %v2047, 10000.0
        %v2077 = vsel %vm2069, %v2049, 10000.0
        %v2078 = vsel %vm2069, %v2051, 10000.0
        %v2079 = vsel %vm2069, %v2053, 10000.0
        %v2080 = vsel %vm2069, %v2055, 10000.0
        %v2081 = vsel %vm2069, %v2057, 10000.0
        %v2082 = vsel %vm2069, %v2059, 10000.0
        %v2083 = vsel %vm2069, %v2061, 10000.0
        %v2084 = vsel %vm2069, %v2063, 10000.0
        %v2085 = vsel %vm2069, %v2065, 10000.0
        %v2086 = vmin.f32 %v2018, %v2070
        %v2087 = vmin.f32 %v2019, %v2071
        %v2088 = vmin.f32 %v2020, %v2072
        %v2089 = vmin.f32 %v2021, %v2073
        %v2090 = vmin.f32 %v2022, %v2074
        %v2091 = vmin.f32 %v2023, %v2075
        %v2092 = vmin.f32 %v2024, %v2076
        %v2093 = vmin.f32 %v2025, %v2077
        %v2094 = vmin.f32 %v2026, %v2078
        %v2095 = vmin.f32 %v2027, %v2079
        %v2096 = vmin.f32 %v2028, %v2080
        %v2097 = vmin.f32 %v2029, %v2081
        %v2098 = vmin.f32 %v2030, %v2082
        %v2099 = vmin.f32 %v2031, %v2083
        %v2100 = vmin.f32 %v2032, %v2084
        %v2101 = vmin.f32 %v2033, %v2085
        %2102 = vrot.lane.b32.xlu0 %v1950, 127
        %v2103 = vpop.permute.xlu0 %2102
        %2104 = vrot.lane.b32.xlu0 %v1951, 127
        %v2105 = vpop.permute.xlu0 %2104
        %2106 = vrot.lane.b32.xlu0 %v1952, 127
        %v2107 = vpop.permute.xlu0 %2106
        %2108 = vrot.lane.b32.xlu0 %v1953, 127
        %v2109 = vpop.permute.xlu0 %2108
        %2110 = vrot.lane.b32.xlu0 %v1954, 127
        %v2111 = vpop.permute.xlu0 %2110
        %2112 = vrot.lane.b32.xlu0 %v1955, 127
        %v2113 = vpop.permute.xlu0 %2112
        %2114 = vrot.lane.b32.xlu0 %v1956, 127
        %v2115 = vpop.permute.xlu0 %2114
        %2116 = vrot.lane.b32.xlu0 %v1957, 127
        %v2117 = vpop.permute.xlu0 %2116
        %2118 = vrot.lane.b32.xlu0 %v1958, 127
        %v2119 = vpop.permute.xlu0 %2118
        %2120 = vrot.lane.b32.xlu0 %v1959, 127
        %v2121 = vpop.permute.xlu0 %2120
        %2122 = vrot.lane.b32.xlu0 %v1960, 127
        %v2123 = vpop.permute.xlu0 %2122
        %2124 = vrot.lane.b32.xlu0 %v1961, 127
        %v2125 = vpop.permute.xlu0 %2124
        %2126 = vrot.lane.b32.xlu0 %v1962, 127
        %v2127 = vpop.permute.xlu0 %2126
        %2128 = vrot.lane.b32.xlu0 %v1963, 127
        %v2129 = vpop.permute.xlu0 %2128
        %2130 = vrot.lane.b32.xlu0 %v1964, 127
        %v2131 = vpop.permute.xlu0 %2130
        %2132 = vrot.lane.b32.xlu0 %v1965, 127
        %v2133 = vpop.permute.xlu0 %2132
        %v2134 = vadd.s32 %v1449, 1
        %vm2135 = vcmp.ge.s32.totalorder %v2134, 0
        %vm2136 = vcmp.lt.s32.totalorder %v2134, 32
        %vm2137 = vmand %vm2135, %vm2136
        %v2138 = vsel %vm2137, %v2103, 10000.0
        %v2139 = vsel %vm2137, %v2105, 10000.0
        %v2140 = vsel %vm2137, %v2107, 10000.0
        %v2141 = vsel %vm2137, %v2109, 10000.0
        %v2142 = vsel %vm2137, %v2111, 10000.0
        %v2143 = vsel %vm2137, %v2113, 10000.0
        %v2144 = vsel %vm2137, %v2115, 10000.0
        %v2145 = vsel %vm2137, %v2117, 10000.0
        %v2146 = vsel %vm2137, %v2119, 10000.0
        %v2147 = vsel %vm2137, %v2121, 10000.0
        %v2148 = vsel %vm2137, %v2123, 10000.0
        %v2149 = vsel %vm2137, %v2125, 10000.0
        %v2150 = vsel %vm2137, %v2127, 10000.0
        %v2151 = vsel %vm2137, %v2129, 10000.0
        %v2152 = vsel %vm2137, %v2131, 10000.0
        %v2153 = vsel %vm2137, %v2133, 10000.0
        %v2154 = vmin.f32 %v2086, %v2138
        %v2155 = vmin.f32 %v2087, %v2139
        %v2156 = vmin.f32 %v2088, %v2140
        %v2157 = vmin.f32 %v2089, %v2141
        %v2158 = vmin.f32 %v2090, %v2142
        %v2159 = vmin.f32 %v2091, %v2143
        %v2160 = vmin.f32 %v2092, %v2144
        %v2161 = vmin.f32 %v2093, %v2145
        %v2162 = vmin.f32 %v2094, %v2146
        %v2163 = vmin.f32 %v2095, %v2147
        %v2164 = vmin.f32 %v2096, %v2148
        %v2165 = vmin.f32 %v2097, %v2149
        %v2166 = vmin.f32 %v2098, %v2150
        %v2167 = vmin.f32 %v2099, %v2151
        %v2168 = vmin.f32 %v2100, %v2152
        %v2169 = vmin.f32 %v2101, %v2153
        %2170 = vrot.lane.b32.xlu0 %v1950, 126
        %v2171 = vpop.permute.xlu0 %2170
        %2172 = vrot.lane.b32.xlu0 %v1951, 126
        %v2173 = vpop.permute.xlu0 %2172
        %2174 = vrot.lane.b32.xlu0 %v1952, 126
        %v2175 = vpop.permute.xlu0 %2174
        %2176 = vrot.lane.b32.xlu0 %v1953, 126
        %v2177 = vpop.permute.xlu0 %2176
        %2178 = vrot.lane.b32.xlu0 %v1954, 126
        %v2179 = vpop.permute.xlu0 %2178
        %2180 = vrot.lane.b32.xlu0 %v1955, 126
        %v2181 = vpop.permute.xlu0 %2180
        %2182 = vrot.lane.b32.xlu0 %v1956, 126
        %v2183 = vpop.permute.xlu0 %2182
        %2184 = vrot.lane.b32.xlu0 %v1957, 126
        %v2185 = vpop.permute.xlu0 %2184
        %2186 = vrot.lane.b32.xlu0 %v1958, 126
        %v2187 = vpop.permute.xlu0 %2186
        %2188 = vrot.lane.b32.xlu0 %v1959, 126
        %v2189 = vpop.permute.xlu0 %2188
        %2190 = vrot.lane.b32.xlu0 %v1960, 126
        %v2191 = vpop.permute.xlu0 %2190
        %2192 = vrot.lane.b32.xlu0 %v1961, 126
        %v2193 = vpop.permute.xlu0 %2192
        %2194 = vrot.lane.b32.xlu0 %v1962, 126
        %v2195 = vpop.permute.xlu0 %2194
        %2196 = vrot.lane.b32.xlu0 %v1963, 126
        %v2197 = vpop.permute.xlu0 %2196
        %2198 = vrot.lane.b32.xlu0 %v1964, 126
        %v2199 = vpop.permute.xlu0 %2198
        %2200 = vrot.lane.b32.xlu0 %v1965, 126
        %v2201 = vpop.permute.xlu0 %2200
        %v2202 = vadd.s32 %v1449, 2
        %vm2203 = vcmp.ge.s32.totalorder %v2202, 0
        %vm2204 = vcmp.lt.s32.totalorder %v2202, 32
        %vm2205 = vmand %vm2203, %vm2204
        %v2206 = vsel %vm2205, %v2171, 10000.0
        %v2207 = vsel %vm2205, %v2173, 10000.0
        %v2208 = vsel %vm2205, %v2175, 10000.0
        %v2209 = vsel %vm2205, %v2177, 10000.0
        %v2210 = vsel %vm2205, %v2179, 10000.0
        %v2211 = vsel %vm2205, %v2181, 10000.0
        %v2212 = vsel %vm2205, %v2183, 10000.0
        %v2213 = vsel %vm2205, %v2185, 10000.0
        %v2214 = vsel %vm2205, %v2187, 10000.0
        %v2215 = vsel %vm2205, %v2189, 10000.0
        %v2216 = vsel %vm2205, %v2191, 10000.0
        %v2217 = vsel %vm2205, %v2193, 10000.0
        %v2218 = vsel %vm2205, %v2195, 10000.0
        %v2219 = vsel %vm2205, %v2197, 10000.0
        %v2220 = vsel %vm2205, %v2199, 10000.0
        %v2221 = vsel %vm2205, %v2201, 10000.0
        %v2222 = vmin.f32 %v2154, %v2206
        %v2223 = vmin.f32 %v2155, %v2207
        %v2224 = vmin.f32 %v2156, %v2208
        %v2225 = vmin.f32 %v2157, %v2209
        %v2226 = vmin.f32 %v2158, %v2210
        %v2227 = vmin.f32 %v2159, %v2211
        %v2228 = vmin.f32 %v2160, %v2212
        %v2229 = vmin.f32 %v2161, %v2213
        %v2230 = vmin.f32 %v2162, %v2214
        %v2231 = vmin.f32 %v2163, %v2215
        %v2232 = vmin.f32 %v2164, %v2216
        %v2233 = vmin.f32 %v2165, %v2217
        %v2234 = vmin.f32 %v2166, %v2218
        %v2235 = vmin.f32 %v2167, %v2219
        %v2236 = vmin.f32 %v2168, %v2220
        %v2237 = vmin.f32 %v2169, %v2221
        %v2238 = vsub.f32 %v1206, %v2222
        %v2239 = vsub.f32 %v1207, %v2223
        %v2240 = vsub.f32 %v1208, %v2224
        %v2241 = vsub.f32 %v1209, %v2225
        %v2242 = vsub.f32 %v1210, %v2226
        %v2243 = vsub.f32 %v1211, %v2227
        %v2244 = vsub.f32 %v1212, %v2228
        %v2245 = vsub.f32 %v1213, %v2229
        %v2246 = vsub.f32 %v1214, %v2230
        %v2247 = vsub.f32 %v1215, %v2231
        %v2248 = vsub.f32 %v1216, %v2232
        %v2249 = vsub.f32 %v1217, %v2233
        %v2250 = vsub.f32 %v1218, %v2234
        %v2251 = vsub.f32 %v1219, %v2235
        %v2252 = vsub.f32 %v1220, %v2236
        %v2253 = vsub.f32 %v1221, %v2237
        %v2254 = vld [vmem:[%s15] sm:$0xf]
        %v2255 = vld [vmem:[%s15 + $0x4] sm:$0xf]
        %v2256 = vld [vmem:[%s15 + $0x8] sm:$0xf]
        %v2257 = vld [vmem:[%s15 + $0xc] sm:$0xf]
        %v2258 = vld [vmem:[%s14] sm:$0xf]
        %v2259 = vld [vmem:[%s14 + $0x4] sm:$0xf]
        %v2264 = vunpack.c.l.b16 %v2254
        %v2265 = vunpack.c.l.b16 %v2255
        %v2266 = vunpack.c.l.b16 %v2256
        %v2267 = vunpack.c.l.b16 %v2257
        %v2268 = vpack.c.b16 %v2265, %v2264
        %v2269 = vpack.c.b16 %v2267, %v2266
        %v2273 = vsel %vm1222, %v1166, 0
        %v2276 = vsel %vm1222, %v1167, 0
        %v2279 = vsel %vm1222, %v1178, 0
        %v2282 = vsel %vm1222, %v1179, 0
        %v2285 = vsel %vm1222, %v1190, 0
        %v2288 = vsel %vm1222, %v1191, 0
        %v2291 = vsel %vm1222, %v1202, 0
        %v2294 = vsel %vm1222, %v1203, 0
        %2296 = vmatprep.subr.bf16.mxu0 0
        %2297 = vmatpush1.bf16.msra.mxu0 %v2268
        %2298 = vmatprep.subr.bf16.mxu0 0
        %2299 = vmatpush1.bf16.msra.mxu0 %v2269
        %2300 = vmatprep.subr.bf16.mxu0 0
        %2301 = vmatpush1.bf16.msra.mxu0 0
        %2302 = vmatprep.subr.bf16.mxu0 0
        %2303 = vmatpush1.bf16.msra.mxu0 0
        %2304 = vmatprep.subr.bf16.mxu0 0
        %2305 = vmatpush1.bf16.msra.mxu0 0
        %2306 = vmatprep.subr.bf16.mxu0 0
        %2307 = vmatpush1.bf16.msra.mxu0 0
        %2308 = vmatprep.subr.bf16.mxu0 0
        %2309 = vmatpush1.bf16.msra.mxu0 0
        %2310 = vmatprep.subr.bf16.mxu0 0
        %2311 = vmatpush1.bf16.msra.mxu0 0
        %2312 = vmatprep.subr.bf16.mxu0 0
        %2313 = vmatpush1.bf16.msra.mxu0 0
        %2314 = vmatprep.subr.bf16.mxu0 0
        %2315 = vmatpush1.bf16.msra.mxu0 0
        %2316 = vmatprep.subr.bf16.mxu0 0
        %2317 = vmatpush1.bf16.msra.mxu0 0
        %2318 = vmatprep.subr.bf16.mxu0 0
        %2319 = vmatpush1.bf16.msra.mxu0 0
        %2320 = vmatprep.subr.bf16.mxu0 0
        %2321 = vmatpush1.bf16.msra.mxu0 0
        %2322 = vmatprep.subr.bf16.mxu0 0
        %2323 = vmatpush1.bf16.msra.mxu0 0
        %2324 = vmatprep.subr.bf16.mxu0 0
        %2325 = vmatpush1.bf16.msra.mxu0 0
        %2326 = vmatprep.subr.bf16.mxu0 0
        %2327 = vmatpush1.bf16.msra.mxu0 0
        %2328 = vmatprep.mubr.bf16.mxu0 0
        %2329 = vmatmul.mubr.bf16.gmra.mrb[0].mxu0 %v2273
        %v2330 = vpop.f32.mrb[0].mxu0
        %v2331 = vadd.f32 0.0, %v2330
        %v2332 = vpop.f32.mrb[0].mxu0
        %v2333 = vpop.f32.mrb[0].mxu0
        %v2334 = vadd.f32 0.0, %v2333
        %v2335 = vpop.f32.mrb[0].mxu0
        %2336 = vmatprep.mubr.bf16.mxu0 0
        %2337 = vmatmul.mubr.bf16.gmra.mrb[0].mxu0 %v2276
        %v2338 = vpop.f32.mrb[0].mxu0
        %v2339 = vadd.f32 0.0, %v2338
        %v2340 = vpop.f32.mrb[0].mxu0
        %v2341 = vpop.f32.mrb[0].mxu0
        %v2342 = vadd.f32 0.0, %v2341
        %v2343 = vpop.f32.mrb[0].mxu0
        %2344 = vmatprep.mubr.bf16.mxu0 0
        %2345 = vmatmul.mubr.bf16.gmra.mrb[0].mxu0 %v2279
        %v2346 = vpop.f32.mrb[0].mxu0
        %v2347 = vadd.f32 0.0, %v2346
        %v2348 = vpop.f32.mrb[0].mxu0
        %v2349 = vpop.f32.mrb[0].mxu0
        %v2350 = vadd.f32 0.0, %v2349
        %v2351 = vpop.f32.mrb[0].mxu0
        %2352 = vmatprep.mubr.bf16.mxu0 0
        %2353 = vmatmul.mubr.bf16.gmra.mrb[0].mxu0 %v2282
        %v2354 = vpop.f32.mrb[0].mxu0
        %v2355 = vadd.f32 0.0, %v2354
        %v2356 = vpop.f32.mrb[0].mxu0
        %v2357 = vpop.f32.mrb[0].mxu0
        %v2358 = vadd.f32 0.0, %v2357
        %v2359 = vpop.f32.mrb[0].mxu0
        %2360 = vmatprep.mubr.bf16.mxu0 0
        %2361 = vmatmul.mubr.bf16.gmra.mrb[0].mxu0 %v2285
        %v2362 = vpop.f32.mrb[0].mxu0
        %v2363 = vadd.f32 0.0, %v2362
        %v2364 = vpop.f32.mrb[0].mxu0
        %v2365 = vpop.f32.mrb[0].mxu0
        %v2366 = vadd.f32 0.0, %v2365
        %v2367 = vpop.f32.mrb[0].mxu0
        %2368 = vmatprep.mubr.bf16.mxu0 0
        %2369 = vmatmul.mubr.bf16.gmra.mrb[0].mxu0 %v2288
        %v2370 = vpop.f32.mrb[0].mxu0
        %v2371 = vadd.f32 0.0, %v2370
        %v2372 = vpop.f32.mrb[0].mxu0
        %v2373 = vpop.f32.mrb[0].mxu0
        %v2374 = vadd.f32 0.0, %v2373
        %v2375 = vpop.f32.mrb[0].mxu0
        %2376 = vmatprep.mubr.bf16.mxu0 0
        %2377 = vmatmul.mubr.bf16.gmra.mrb[0].mxu0 %v2291
        %v2378 = vpop.f32.mrb[0].mxu0
        %v2379 = vadd.f32 0.0, %v2378
        %v2380 = vpop.f32.mrb[0].mxu0
        %v2381 = vpop.f32.mrb[0].mxu0
        %v2382 = vadd.f32 0.0, %v2381
        %v2383 = vpop.f32.mrb[0].mxu0
        %2384 = vmatprep.mubr.bf16.mxu0 0
        %2385 = vmatmul.mubr.bf16.gmra.mrb[0].mxu0 %v2294
        %v2386 = vpop.f32.mrb[0].mxu0
        %v2387 = vadd.f32 0.0, %v2386
        %v2388 = vpop.f32.mrb[0].mxu0
        %v2389 = vpop.f32.mrb[0].mxu0
        %v2390 = vadd.f32 0.0, %v2389
        %v2391 = vpop.f32.mrb[0].mxu0
        %2392 = vdwg.mxu0
        %v2393 = vpack.c.bf16 %v2239, %v2238
        %v2394 = vpack.c.bf16 %v2241, %v2240
        %v2395 = vpack.c.bf16 %v2243, %v2242
        %v2396 = vpack.c.bf16 %v2245, %v2244
        %v2397 = vpack.c.bf16 %v2247, %v2246
        %v2398 = vpack.c.bf16 %v2249, %v2248
        %v2399 = vpack.c.bf16 %v2251, %v2250
        %v2400 = vpack.c.bf16 %v2253, %v2252
        %v2402 = vsel %vm1222, %v2393, 0
        %v2405 = vsel %vm1222, %v2394, 0
        %v2408 = vsel %vm1222, %v2395, 0
        %v2411 = vsel %vm1222, %v2396, 0
        %v2414 = vsel %vm1222, %v2397, 0
        %v2417 = vsel %vm1222, %v2398, 0
        %v2420 = vsel %vm1222, %v2399, 0
        %v2423 = vsel %vm1222, %v2400, 0
        %2425 = vmatprep.subr.bf16.mxu0 0
        %2426 = vmatpush1.bf16.msra.mxu0 %v2268
        %2427 = vmatprep.subr.bf16.mxu0 0
        %2428 = vmatpush1.bf16.msra.mxu0 %v2269
        %2429 = vmatprep.subr.bf16.mxu0 0
        %2430 = vmatpush1.bf16.msra.mxu0 0
        %2431 = vmatprep.subr.bf16.mxu0 0
        %2432 = vmatpush1.bf16.msra.mxu0 0
        %2433 = vmatprep.subr.bf16.mxu0 0
        %2434 = vmatpush1.bf16.msra.mxu0 0
        %2435 = vmatprep.subr.bf16.mxu0 0
        %2436 = vmatpush1.bf16.msra.mxu0 0
        %2437 = vmatprep.subr.bf16.mxu0 0
        %2438 = vmatpush1.bf16.msra.mxu0 0
        %2439 = vmatprep.subr.bf16.mxu0 0
        %2440 = vmatpush1.bf16.msra.mxu0 0
        %2441 = vmatprep.subr.bf16.mxu0 0
        %2442 = vmatpush1.bf16.msra.mxu0 0
        %2443 = vmatprep.subr.bf16.mxu0 0
        %2444 = vmatpush1.bf16.msra.mxu0 0
        %2445 = vmatprep.subr.bf16.mxu0 0
        %2446 = vmatpush1.bf16.msra.mxu0 0
        %2447 = vmatprep.subr.bf16.mxu0 0
        %2448 = vmatpush1.bf16.msra.mxu0 0
        %2449 = vmatprep.subr.bf16.mxu0 0
        %2450 = vmatpush1.bf16.msra.mxu0 0
        %2451 = vmatprep.subr.bf16.mxu0 0
        %2452 = vmatpush1.bf16.msra.mxu0 0
        %2453 = vmatprep.subr.bf16.mxu0 0
        %2454 = vmatpush1.bf16.msra.mxu0 0
        %2455 = vmatprep.subr.bf16.mxu0 0
        %2456 = vmatpush1.bf16.msra.mxu0 0
        %2457 = vmatprep.mubr.bf16.mxu0 0
        %2458 = vmatmul.mubr.bf16.gmra.mrb[0].mxu0 %v2402
        %v2459 = vpop.f32.mrb[0].mxu0
        %v2460 = vadd.f32 0.0, %v2459
        %v2461 = vpop.f32.mrb[0].mxu0
        %v2462 = vpop.f32.mrb[0].mxu0
        %v2463 = vadd.f32 0.0, %v2462
        %v2464 = vpop.f32.mrb[0].mxu0
        %2465 = vmatprep.mubr.bf16.mxu0 0
        %2466 = vmatmul.mubr.bf16.gmra.mrb[0].mxu0 %v2405
        %v2467 = vpop.f32.mrb[0].mxu0
        %v2468 = vadd.f32 0.0, %v2467
        %v2469 = vpop.f32.mrb[0].mxu0
        %v2470 = vpop.f32.mrb[0].mxu0
        %v2471 = vadd.f32 0.0, %v2470
        %v2472 = vpop.f32.mrb[0].mxu0
        %2473 = vmatprep.mubr.bf16.mxu0 0
        %2474 = vmatmul.mubr.bf16.gmra.mrb[0].mxu0 %v2408
        %v2475 = vpop.f32.mrb[0].mxu0
        %v2476 = vadd.f32 0.0, %v2475
        %v2477 = vpop.f32.mrb[0].mxu0
        %v2478 = vpop.f32.mrb[0].mxu0
        %v2479 = vadd.f32 0.0, %v2478
        %v2480 = vpop.f32.mrb[0].mxu0
        %2481 = vmatprep.mubr.bf16.mxu0 0
        %2482 = vmatmul.mubr.bf16.gmra.mrb[0].mxu0 %v2411
        %v2483 = vpop.f32.mrb[0].mxu0
        %v2484 = vadd.f32 0.0, %v2483
        %v2485 = vpop.f32.mrb[0].mxu0
        %v2486 = vpop.f32.mrb[0].mxu0
        %v2487 = vadd.f32 0.0, %v2486
        %v2488 = vpop.f32.mrb[0].mxu0
        %2489 = vmatprep.mubr.bf16.mxu0 0
        %2490 = vmatmul.mubr.bf16.gmra.mrb[0].mxu0 %v2414
        %v2491 = vpop.f32.mrb[0].mxu0
        %v2492 = vadd.f32 0.0, %v2491
        %v2493 = vpop.f32.mrb[0].mxu0
        %v2494 = vpop.f32.mrb[0].mxu0
        %v2495 = vadd.f32 0.0, %v2494
        %v2496 = vpop.f32.mrb[0].mxu0
        %2497 = vmatprep.mubr.bf16.mxu0 0
        %2498 = vmatmul.mubr.bf16.gmra.mrb[0].mxu0 %v2417
        %v2499 = vpop.f32.mrb[0].mxu0
        %v2500 = vadd.f32 0.0, %v2499
        %v2501 = vpop.f32.mrb[0].mxu0
        %v2502 = vpop.f32.mrb[0].mxu0
        %v2503 = vadd.f32 0.0, %v2502
        %v2504 = vpop.f32.mrb[0].mxu0
        %2505 = vmatprep.mubr.bf16.mxu0 0
        %2506 = vmatmul.mubr.bf16.gmra.mrb[0].mxu0 %v2420
        %v2507 = vpop.f32.mrb[0].mxu0
        %v2508 = vadd.f32 0.0, %v2507
        %v2509 = vpop.f32.mrb[0].mxu0
        %v2510 = vpop.f32.mrb[0].mxu0
        %v2511 = vadd.f32 0.0, %v2510
        %v2512 = vpop.f32.mrb[0].mxu0
        %2513 = vmatprep.mubr.bf16.mxu0 0
        %2514 = vmatmul.mubr.bf16.gmra.mrb[0].mxu0 %v2423
        %v2515 = vpop.f32.mrb[0].mxu0
        %v2516 = vadd.f32 0.0, %v2515
        %v2517 = vpop.f32.mrb[0].mxu0
        %v2518 = vpop.f32.mrb[0].mxu0
        %v2519 = vadd.f32 0.0, %v2518
        %v2520 = vpop.f32.mrb[0].mxu0
        %2521 = vdwg.mxu0
        %v2522 = vpack.c.bf16 %v2334, %v2331
        %v2523 = vpack.c.bf16 %v2342, %v2339
        %v2524 = vpack.c.bf16 %v2350, %v2347
        %v2525 = vpack.c.bf16 %v2358, %v2355
        %v2526 = vpack.c.bf16 %v2366, %v2363
        %v2527 = vpack.c.bf16 %v2374, %v2371
        %v2528 = vpack.c.bf16 %v2382, %v2379
        %v2529 = vpack.c.bf16 %v2390, %v2387
        %v2530 = vpack.c.bf16 %v2463, %v2460
        %v2531 = vpack.c.bf16 %v2471, %v2468
        %v2532 = vpack.c.bf16 %v2479, %v2476
        %v2533 = vpack.c.bf16 %v2487, %v2484
        %v2534 = vpack.c.bf16 %v2495, %v2492
        %v2535 = vpack.c.bf16 %v2503, %v2500
        %v2536 = vpack.c.bf16 %v2511, %v2508
        %v2537 = vpack.c.bf16 %v2519, %v2516
        %v2540 = vunpack.c.l.b16 %v2258
        %v2541 = vunpack.c.l.b16 %v2259
        %v2542 = vpack.c.b16 %v2541, %v2540
        %v2544 = vsel %vm1222, %v2542, 0
        %2546 = vmatprep.subr.bf16.mxu0 0
        %2547 = vmatpush1.bf16.msra.mxu0 %v2522
        %2548 = vmatprep.subr.bf16.mxu0 0
        %2549 = vmatpush1.bf16.msra.mxu0 %v2523
        %2550 = vmatprep.subr.bf16.mxu0 0
        %2551 = vmatpush1.bf16.msra.mxu0 0
        %2552 = vmatprep.subr.bf16.mxu0 0
        %2553 = vmatpush1.bf16.msra.mxu0 0
        %2554 = vmatprep.subr.bf16.mxu0 0
        %2555 = vmatpush1.bf16.msra.mxu0 0
        %2556 = vmatprep.subr.bf16.mxu0 0
        %2557 = vmatpush1.bf16.msra.mxu0 0
        %2558 = vmatprep.subr.bf16.mxu0 0
        %2559 = vmatpush1.bf16.msra.mxu0 0
        %2560 = vmatprep.subr.bf16.mxu0 0
        %2561 = vmatpush1.bf16.msra.mxu0 0
        %2562 = vmatprep.subr.bf16.mxu0 0
        %2563 = vmatpush1.bf16.msra.mxu0 0
        %2564 = vmatprep.subr.bf16.mxu0 0
        %2565 = vmatpush1.bf16.msra.mxu0 0
        %2566 = vmatprep.subr.bf16.mxu0 0
        %2567 = vmatpush1.bf16.msra.mxu0 0
        %2568 = vmatprep.subr.bf16.mxu0 0
        %2569 = vmatpush1.bf16.msra.mxu0 0
        %2570 = vmatprep.subr.bf16.mxu0 0
        %2571 = vmatpush1.bf16.msra.mxu0 0
        %2572 = vmatprep.subr.bf16.mxu0 0
        %2573 = vmatpush1.bf16.msra.mxu0 0
        %2574 = vmatprep.subr.bf16.mxu0 0
        %2575 = vmatpush1.bf16.msra.mxu0 0
        %2576 = vmatprep.subr.bf16.mxu0 0
        %2577 = vmatpush1.bf16.msra.mxu0 0
        %2578 = vmatprep.mubr.bf16.mxu0 0
        %2579 = vmatmul.mubr.bf16.gmra.mrb[0].mxu0 %v2544
        %v2580 = vpop.f32.mrb[0].mxu0
        %v2581 = vadd.f32 0.0, %v2580
        %v2582 = vpop.f32.mrb[0].mxu0
        %v2583 = vpop.f32.mrb[0].mxu0
        %v2584 = vadd.f32 0.0, %v2583
        %v2585 = vpop.f32.mrb[0].mxu0
        %2586 = vdwg.mxu0
        %2587 = vmatprep.subr.bf16.mxu0 0
        %2588 = vmatpush1.bf16.msra.mxu0 %v2530
        %2589 = vmatprep.subr.bf16.mxu0 0
        %2590 = vmatpush1.bf16.msra.mxu0 %v2531
        %2591 = vmatprep.subr.bf16.mxu0 0
        %2592 = vmatpush1.bf16.msra.mxu0 0
        %2593 = vmatprep.subr.bf16.mxu0 0
        %2594 = vmatpush1.bf16.msra.mxu0 0
        %2595 = vmatprep.subr.bf16.mxu0 0
        %2596 = vmatpush1.bf16.msra.mxu0 0
        %2597 = vmatprep.subr.bf16.mxu0 0
        %2598 = vmatpush1.bf16.msra.mxu0 0
        %2599 = vmatprep.subr.bf16.mxu0 0
        %2600 = vmatpush1.bf16.msra.mxu0 0
        %2601 = vmatprep.subr.bf16.mxu0 0
        %2602 = vmatpush1.bf16.msra.mxu0 0
        %2603 = vmatprep.subr.bf16.mxu0 0
        %2604 = vmatpush1.bf16.msra.mxu0 0
        %2605 = vmatprep.subr.bf16.mxu0 0
        %2606 = vmatpush1.bf16.msra.mxu0 0
        %2607 = vmatprep.subr.bf16.mxu0 0
        %2608 = vmatpush1.bf16.msra.mxu0 0
        %2609 = vmatprep.subr.bf16.mxu0 0
        %2610 = vmatpush1.bf16.msra.mxu0 0
        %2611 = vmatprep.subr.bf16.mxu0 0
        %2612 = vmatpush1.bf16.msra.mxu0 0
        %2613 = vmatprep.subr.bf16.mxu0 0
        %2614 = vmatpush1.bf16.msra.mxu0 0
        %2615 = vmatprep.subr.bf16.mxu0 0
        %2616 = vmatpush1.bf16.msra.mxu0 0
        %2617 = vmatprep.subr.bf16.mxu0 0
        %2618 = vmatpush1.bf16.msra.mxu0 0
        %2619 = vmatprep.mubr.bf16.mxu0 0
        %2620 = vmatmul.mubr.bf16.gmra.mrb[0].mxu0 %v2544
        %v2621 = vpop.f32.mrb[0].mxu0
        %v2622 = vadd.f32 0.0, %v2621
        %v2623 = vpop.f32.mrb[0].mxu0
        %v2624 = vpop.f32.mrb[0].mxu0
        %v2625 = vadd.f32 0.0, %v2624
        %v2626 = vpop.f32.mrb[0].mxu0
        %2627 = vdwg.mxu0
        %s2628 = smul.u32 %s61, 4
        %p2629 = scmp.lt.s32.totalorder %s2628, 5
        %s2630 = scalar_select %p2629, 1, 0
        %s2631 = scvt.s32.f32 %s2630
        %v2632 = vld [vmem:[%s866] sm:$0xf]
        %v2633 = vld [vmem:[%s866 + $0x4] sm:$0xf]
        %v2634 = vunpack.c.l.bf16 %v2632
        %v2635 = vunpack.c.l.bf16 %v2633
        %v2636 = vld [vmem:[%s902] sm:$0xf]
        %v2637 = vld [vmem:[%s902 + $0x4] sm:$0xf]
        %v2638 = vunpack.c.l.bf16 %v2636
        %v2639 = vunpack.c.l.bf16 %v2637
        %v2640 = vxor.u32 %v2634, 2147483648
        %v2641 = vxor.u32 %v2635, 2147483648
        %v2642 = vmul.f32 %v2640, 1.442695
        %v2643 = vpow.pop %v2642
        %v2644 = vmul.f32 %v2641, 1.442695
        %v2645 = vpow.pop %v2644
        %v2646 = vadd.f32 %v2643, 1.0
        %v2647 = vadd.f32 %v2645, 1.0
        %v2648 = vrcp.pop %v2646
        %v2649 = vmul.f32 1.0, %v2648
        %v2650 = vrcp.pop %v2647
        %v2651 = vmul.f32 1.0, %v2650
        %v2652 = vxor.u32 %v2638, 2147483648
        %v2653 = vxor.u32 %v2639, 2147483648
        %v2654 = vmul.f32 %v2652, 1.442695
        %v2655 = vpow.pop %v2654
        %v2656 = vmul.f32 %v2653, 1.442695
        %v2657 = vpow.pop %v2656
        %v2658 = vadd.f32 %v2655, 1.0
        %v2659 = vadd.f32 %v2657, 1.0
        %v2660 = vrcp.pop %v2658
        %v2661 = vmul.f32 1.0, %v2660
        %v2662 = vrcp.pop %v2659
        %v2663 = vmul.f32 1.0, %v2662
        %v2664 = vmul.f32 %v2649, %v2581
        %v2665 = vmul.f32 %v2651, %v2584
        %vm2666 = vcmask 130048
        %v2667 = vsel %vm2666, %v2664, 0.0
        %2668 = vadd.xlane.f32.xlu0 %v2667
        %v2669 = vpop.xlane.xlu0 %2668
        %v2670 = vsel %vm2666, %v2665, 0.0
        %2671 = vadd.xlane.f32.xlu0 %v2670
        %v2672 = vpop.xlane.xlu0 %2671
        %v2673 = vadd.f32 %v2669, %v2672
        %v2674 = vrot.slane %v2673, 4
        %v2675 = vadd.f32 %v2673, %v2674
        %v2676 = vrot.slane %v2675, 2
        %v2677 = vadd.f32 %v2675, %v2676
        %v2678 = vrot.slane %v2677, 1
        %v2679 = vadd.f32 %v2677, %v2678
        %v2680 = vmul.f32 %v2679, 2.0
        %v2681 = vmul.f32 %v2649, %v2649
        %v2682 = vmul.f32 %v2651, %v2651
        %v2683 = vmul.f32 %v2581, %v2581
        %v2684 = vmul.f32 %v2584, %v2584
        %v2685 = vadd.f32 %v2681, %v2683
        %v2686 = vadd.f32 %v2682, %v2684
        %v2687 = vsel %vm2666, %v2685, 0.0
        %2688 = vadd.xlane.f32.xlu0 %v2687
        %v2689 = vpop.xlane.xlu0 %2688
        %v2690 = vsel %vm2666, %v2686, 0.0
        %2691 = vadd.xlane.f32.xlu0 %v2690
        %v2692 = vpop.xlane.xlu0 %2691
        %v2693 = vadd.f32 %v2689, %v2692
        %v2694 = vrot.slane %v2693, 4
        %v2695 = vadd.f32 %v2693, %v2694
        %v2696 = vrot.slane %v2695, 2
        %v2697 = vadd.f32 %v2695, %v2696
        %v2698 = vrot.slane %v2697, 1
        %v2699 = vadd.f32 %v2697, %v2698
        %v2700 = vmul.f32 %v2661, %v2622
        %v2701 = vmul.f32 %v2663, %v2625
        %v2702 = vsel %vm2666, %v2700, 0.0
        %2703 = vadd.xlane.f32.xlu0 %v2702
        %v2704 = vpop.xlane.xlu0 %2703
        %v2705 = vsel %vm2666, %v2701, 0.0
        %2706 = vadd.xlane.f32.xlu0 %v2705
        %v2707 = vpop.xlane.xlu0 %2706
        %v2708 = vadd.f32 %v2704, %v2707
        %v2709 = vrot.slane %v2708, 4
        %v2710 = vadd.f32 %v2708, %v2709
        %v2711 = vrot.slane %v2710, 2
        %v2712 = vadd.f32 %v2710, %v2711
        %v2713 = vrot.slane %v2712, 1
        %v2714 = vadd.f32 %v2712, %v2713
        %v2715 = vmul.f32 %v2714, 2.0
        %v2716 = vmul.f32 %v2661, %v2661
        %v2717 = vmul.f32 %v2663, %v2663
        %v2718 = vmul.f32 %v2622, %v2622
        %v2719 = vmul.f32 %v2625, %v2625
        %v2720 = vadd.f32 %v2716, %v2718
        %v2721 = vadd.f32 %v2717, %v2719
        %v2722 = vsel %vm2666, %v2720, 0.0
        %2723 = vadd.xlane.f32.xlu0 %v2722
        %v2724 = vpop.xlane.xlu0 %2723
        %v2725 = vsel %vm2666, %v2721, 0.0
        %2726 = vadd.xlane.f32.xlu0 %v2725
        %v2727 = vpop.xlane.xlu0 %2726
        %v2728 = vadd.f32 %v2724, %v2727
        %v2729 = vrot.slane %v2728, 4
        %v2730 = vadd.f32 %v2728, %v2729
        %v2731 = vrot.slane %v2730, 2
        %v2732 = vadd.f32 %v2730, %v2731
        %v2733 = vrot.slane %v2732, 1
        %v2734 = vadd.f32 %v2732, %v2733
        %v2735 = vld [vmem:[#allocation2] sm:$0x1]
        %v2736 = vadd.f32 %v2699, 0.0001
        %v2737 = vrcp.pop %v2736
        %v2738 = vmul.f32 %v2680, %v2737
        %v2739 = vsub.f32 1.0, %v2738
        %v2740 = vstv %s2631
        %v2741 = vmul.f32 %v2740, %v2739
        %v2742 = vadd.f32 %v2735, %v2741
        %vm2743 = vcmask 0
        %2744 = vst.msk [vmem:[#allocation2] sm:$0x1] %vm2743, %v2742
        %v2745 = vld [vmem:[#allocation3] sm:$0x1]
        %v2746 = vadd.f32 %v2734, 0.0001
        %v2747 = vrcp.pop %v2746
        %v2748 = vmul.f32 %v2715, %v2747
        %v2749 = vsub.f32 1.0, %v2748
        %v2750 = vmul.f32 %v2740, %v2749
        %v2751 = vadd.f32 %v2745, %v2750
        %2752 = vst.msk [vmem:[#allocation3] sm:$0x1] %vm2743, %v2751
        %v2753 = vld [vmem:[#allocation5] sm:$0xff]
        %v2754 = vld [vmem:[#allocation5 + $0x8] sm:$0xff]
        %vm2755 = vcmp.ge.f32.partialorder %v2634, 0.0
        %vm2756 = vcmp.ge.f32.partialorder %v2635, 0.0
        %v2757 = vsub.f32 1.0, %v2649
        %v2758 = vsub.f32 1.0, %v2651
        %v2759 = vsel %vm2755, %v2649, %v2757
        %v2760 = vsel %vm2756, %v2651, %v2758
        %v2761 = vmax.f32 %v2634, 0.0
        %v2762 = vmax.f32 %v2635, 0.0
        %v2763 = vmul.f32 %v2634, %v2581
        %v2764 = vmul.f32 %v2635, %v2584
        %v2765 = vsub.f32 %v2761, %v2763
        %v2766 = vsub.f32 %v2762, %v2764
        %v2767 = vlog2.pop %v2759
        %v2768 = vmul.f32 %v2767, 0.6931472
        %v2769 = vlog2.pop %v2760
        %v2770 = vmul.f32 %v2769, 0.6931472
        %v2771 = vsub.f32 %v2765, %v2768
        %v2772 = vsub.f32 %v2766, %v2770
        %v2773 = vmul.f32 %v2740, %v2771
        %v2774 = vmul.f32 %v2740, %v2772
        %v2775 = vadd.f32 %v2753, %v2773
        %v2776 = vadd.f32 %v2754, %v2774
        %2777 = vst.msk [vmem:[#allocation5] sm:$0xff] %vm2666, %v2775
        %2778 = vst.msk [vmem:[#allocation5 + $0x8] sm:$0xff] %vm2666, %v2776
        %v2779 = vld [vmem:[#allocation6] sm:$0xff]
        %v2780 = vld [vmem:[#allocation6 + $0x8] sm:$0xff]
        %vm2781 = vcmp.ge.f32.partialorder %v2638, 0.0
        %vm2782 = vcmp.ge.f32.partialorder %v2639, 0.0
        %v2783 = vsub.f32 1.0, %v2661
        %v2784 = vsub.f32 1.0, %v2663
        %v2785 = vsel %vm2781, %v2661, %v2783
        %v2786 = vsel %vm2782, %v2663, %v2784
        %v2787 = vmax.f32 %v2638, 0.0
        %v2788 = vmax.f32 %v2639, 0.0
        %v2789 = vmul.f32 %v2638, %v2622
        %v2790 = vmul.f32 %v2639, %v2625
        %v2791 = vsub.f32 %v2787, %v2789
        %v2792 = vsub.f32 %v2788, %v2790
        %v2793 = vlog2.pop %v2785
        %v2794 = vmul.f32 %v2793, 0.6931472
        %v2795 = vlog2.pop %v2786
        %v2796 = vmul.f32 %v2795, 0.6931472
        %v2797 = vsub.f32 %v2791, %v2794
        %v2798 = vsub.f32 %v2792, %v2796
        %v2799 = vmul.f32 %v2740, %v2797
        %v2800 = vmul.f32 %v2740, %v2798
        %v2801 = vadd.f32 %v2779, %v2799
        %v2802 = vadd.f32 %v2780, %v2800
        %2803 = vst.msk [vmem:[#allocation6] sm:$0xff] %vm2666, %v2801
        %2804 = vst.msk [vmem:[#allocation6 + $0x8] sm:$0xff] %vm2666, %v2802
        %2805 = vmatprep.subr.bf16.mxu0 0
        %2806 = vmatpush1.bf16.msra.mxu0 %v2524
        %2807 = vmatprep.subr.bf16.mxu0 0
        %2808 = vmatpush1.bf16.msra.mxu0 %v2525
        %2809 = vmatprep.subr.bf16.mxu0 0
        %2810 = vmatpush1.bf16.msra.mxu0 0
        %2811 = vmatprep.subr.bf16.mxu0 0
        %2812 = vmatpush1.bf16.msra.mxu0 0
        %2813 = vmatprep.subr.bf16.mxu0 0
        %2814 = vmatpush1.bf16.msra.mxu0 0
        %2815 = vmatprep.subr.bf16.mxu0 0
        %2816 = vmatpush1.bf16.msra.mxu0 0
        %2817 = vmatprep.subr.bf16.mxu0 0
        %2818 = vmatpush1.bf16.msra.mxu0 0
        %2819 = vmatprep.subr.bf16.mxu0 0
        %2820 = vmatpush1.bf16.msra.mxu0 0
        %2821 = vmatprep.subr.bf16.mxu0 0
        %2822 = vmatpush1.bf16.msra.mxu0 0
        %2823 = vmatprep.subr.bf16.mxu0 0
        %2824 = vmatpush1.bf16.msra.mxu0 0
        %2825 = vmatprep.subr.bf16.mxu0 0
        %2826 = vmatpush1.bf16.msra.mxu0 0
        %2827 = vmatprep.subr.bf16.mxu0 0
        %2828 = vmatpush1.bf16.msra.mxu0 0
        %2829 = vmatprep.subr.bf16.mxu0 0
        %2830 = vmatpush1.bf16.msra.mxu0 0
        %2831 = vmatprep.subr.bf16.mxu0 0
        %2832 = vmatpush1.bf16.msra.mxu0 0
        %2833 = vmatprep.subr.bf16.mxu0 0
        %2834 = vmatpush1.bf16.msra.mxu0 0
        %2835 = vmatprep.subr.bf16.mxu0 0
        %2836 = vmatpush1.bf16.msra.mxu0 0
        %2837 = vmatprep.mubr.bf16.mxu0 0
        %2838 = vmatmul.mubr.bf16.gmra.mrb[0].mxu0 %v2544
        %v2839 = vpop.f32.mrb[0].mxu0
        %v2840 = vadd.f32 0.0, %v2839
        %v2841 = vpop.f32.mrb[0].mxu0
        %v2842 = vpop.f32.mrb[0].mxu0
        %v2843 = vadd.f32 0.0, %v2842
        %v2844 = vpop.f32.mrb[0].mxu0
        %2845 = vdwg.mxu0
        %2846 = vmatprep.subr.bf16.mxu0 0
        %2847 = vmatpush1.bf16.msra.mxu0 %v2532
        %2848 = vmatprep.subr.bf16.mxu0 0
        %2849 = vmatpush1.bf16.msra.mxu0 %v2533
        %2850 = vmatprep.subr.bf16.mxu0 0
        %2851 = vmatpush1.bf16.msra.mxu0 0
        %2852 = vmatprep.subr.bf16.mxu0 0
        %2853 = vmatpush1.bf16.msra.mxu0 0
        %2854 = vmatprep.subr.bf16.mxu0 0
        %2855 = vmatpush1.bf16.msra.mxu0 0
        %2856 = vmatprep.subr.bf16.mxu0 0
        %2857 = vmatpush1.bf16.msra.mxu0 0
        %2858 = vmatprep.subr.bf16.mxu0 0
        %2859 = vmatpush1.bf16.msra.mxu0 0
        %2860 = vmatprep.subr.bf16.mxu0 0
        %2861 = vmatpush1.bf16.msra.mxu0 0
        %2862 = vmatprep.subr.bf16.mxu0 0
        %2863 = vmatpush1.bf16.msra.mxu0 0
        %2864 = vmatprep.subr.bf16.mxu0 0
        %2865 = vmatpush1.bf16.msra.mxu0 0
        %2866 = vmatprep.subr.bf16.mxu0 0
        %2867 = vmatpush1.bf16.msra.mxu0 0
        %2868 = vmatprep.subr.bf16.mxu0 0
        %2869 = vmatpush1.bf16.msra.mxu0 0
        %2870 = vmatprep.subr.bf16.mxu0 0
        %2871 = vmatpush1.bf16.msra.mxu0 0
        %2872 = vmatprep.subr.bf16.mxu0 0
        %2873 = vmatpush1.bf16.msra.mxu0 0
        %2874 = vmatprep.subr.bf16.mxu0 0
        %2875 = vmatpush1.bf16.msra.mxu0 0
        %2876 = vmatprep.subr.bf16.mxu0 0
        %2877 = vmatpush1.bf16.msra.mxu0 0
        %2878 = vmatprep.mubr.bf16.mxu0 0
        %2879 = vmatmul.mubr.bf16.gmra.mrb[0].mxu0 %v2544
        %v2880 = vpop.f32.mrb[0].mxu0
        %v2881 = vadd.f32 0.0, %v2880
        %v2882 = vpop.f32.mrb[0].mxu0
        %v2883 = vpop.f32.mrb[0].mxu0
        %v2884 = vadd.f32 0.0, %v2883
        %v2885 = vpop.f32.mrb[0].mxu0
        %2886 = vdwg.mxu0
        %s2887 = sadd.s32 %s2628, 1
        %p2888 = scmp.lt.s32.totalorder %s2887, 5
        %s2889 = scalar_select %p2888, 1, 0
        %s2890 = scvt.s32.f32 %s2889
        %v2891 = vld [vmem:[%s875] sm:$0xf]
        %v2892 = vld [vmem:[%s875 + $0x4] sm:$0xf]
        %v2893 = vunpack.c.l.bf16 %v2891
        %v2894 = vunpack.c.l.bf16 %v2892
        %v2895 = vld [vmem:[%s911] sm:$0xf]
        %v2896 = vld [vmem:[%s911 + $0x4] sm:$0xf]
        %v2897 = vunpack.c.l.bf16 %v2895
        %v2898 = vunpack.c.l.bf16 %v2896
        %v2899 = vxor.u32 %v2893, 2147483648
        %v2900 = vxor.u32 %v2894, 2147483648
        %v2901 = vmul.f32 %v2899, 1.442695
        %v2902 = vpow.pop %v2901
        %v2903 = vmul.f32 %v2900, 1.442695
        %v2904 = vpow.pop %v2903
        %v2905 = vadd.f32 %v2902, 1.0
        %v2906 = vadd.f32 %v2904, 1.0
        %v2907 = vrcp.pop %v2905
        %v2908 = vmul.f32 1.0, %v2907
        %v2909 = vrcp.pop %v2906
        %v2910 = vmul.f32 1.0, %v2909
        %v2911 = vxor.u32 %v2897, 2147483648
        %v2912 = vxor.u32 %v2898, 2147483648
        %v2913 = vmul.f32 %v2911, 1.442695
        %v2914 = vpow.pop %v2913
        %v2915 = vmul.f32 %v2912, 1.442695
        %v2916 = vpow.pop %v2915
        %v2917 = vadd.f32 %v2914, 1.0
        %v2918 = vadd.f32 %v2916, 1.0
        %v2919 = vrcp.pop %v2917
        %v2920 = vmul.f32 1.0, %v2919
        %v2921 = vrcp.pop %v2918
        %v2922 = vmul.f32 1.0, %v2921
        %v2923 = vmul.f32 %v2908, %v2840
        %v2924 = vmul.f32 %v2910, %v2843
        %v2925 = vsel %vm2666, %v2923, 0.0
        %2926 = vadd.xlane.f32.xlu0 %v2925
        %v2927 = vpop.xlane.xlu0 %2926
        %v2928 = vsel %vm2666, %v2924, 0.0
        %2929 = vadd.xlane.f32.xlu0 %v2928
        %v2930 = vpop.xlane.xlu0 %2929
        %v2931 = vadd.f32 %v2927, %v2930
        %v2932 = vrot.slane %v2931, 4
        %v2933 = vadd.f32 %v2931, %v2932
        %v2934 = vrot.slane %v2933, 2
        %v2935 = vadd.f32 %v2933, %v2934
        %v2936 = vrot.slane %v2935, 1
        %v2937 = vadd.f32 %v2935, %v2936
        %v2938 = vmul.f32 %v2937, 2.0
        %v2939 = vmul.f32 %v2908, %v2908
        %v2940 = vmul.f32 %v2910, %v2910
        %v2941 = vmul.f32 %v2840, %v2840
        %v2942 = vmul.f32 %v2843, %v2843
        %v2943 = vadd.f32 %v2939, %v2941
        %v2944 = vadd.f32 %v2940, %v2942
        %v2945 = vsel %vm2666, %v2943, 0.0
        %2946 = vadd.xlane.f32.xlu0 %v2945
        %v2947 = vpop.xlane.xlu0 %2946
        %v2948 = vsel %vm2666, %v2944, 0.0
        %2949 = vadd.xlane.f32.xlu0 %v2948
        %v2950 = vpop.xlane.xlu0 %2949
        %v2951 = vadd.f32 %v2947, %v2950
        %v2952 = vrot.slane %v2951, 4
        %v2953 = vadd.f32 %v2951, %v2952
        %v2954 = vrot.slane %v2953, 2
        %v2955 = vadd.f32 %v2953, %v2954
        %v2956 = vrot.slane %v2955, 1
        %v2957 = vadd.f32 %v2955, %v2956
        %v2958 = vmul.f32 %v2920, %v2881
        %v2959 = vmul.f32 %v2922, %v2884
        %v2960 = vsel %vm2666, %v2958, 0.0
        %2961 = vadd.xlane.f32.xlu0 %v2960
        %v2962 = vpop.xlane.xlu0 %2961
        %v2963 = vsel %vm2666, %v2959, 0.0
        %2964 = vadd.xlane.f32.xlu0 %v2963
        %v2965 = vpop.xlane.xlu0 %2964
        %v2966 = vadd.f32 %v2962, %v2965
        %v2967 = vrot.slane %v2966, 4
        %v2968 = vadd.f32 %v2966, %v2967
        %v2969 = vrot.slane %v2968, 2
        %v2970 = vadd.f32 %v2968, %v2969
        %v2971 = vrot.slane %v2970, 1
        %v2972 = vadd.f32 %v2970, %v2971
        %v2973 = vmul.f32 %v2972, 2.0
        %v2974 = vmul.f32 %v2920, %v2920
        %v2975 = vmul.f32 %v2922, %v2922
        %v2976 = vmul.f32 %v2881, %v2881
        %v2977 = vmul.f32 %v2884, %v2884
        %v2978 = vadd.f32 %v2974, %v2976
        %v2979 = vadd.f32 %v2975, %v2977
        %v2980 = vsel %vm2666, %v2978, 0.0
        %2981 = vadd.xlane.f32.xlu0 %v2980
        %v2982 = vpop.xlane.xlu0 %2981
        %v2983 = vsel %vm2666, %v2979, 0.0
        %2984 = vadd.xlane.f32.xlu0 %v2983
        %v2985 = vpop.xlane.xlu0 %2984
        %v2986 = vadd.f32 %v2982, %v2985
        %v2987 = vrot.slane %v2986, 4
        %v2988 = vadd.f32 %v2986, %v2987
        %v2989 = vrot.slane %v2988, 2
        %v2990 = vadd.f32 %v2988, %v2989
        %v2991 = vrot.slane %v2990, 1
        %v2992 = vadd.f32 %v2990, %v2991
        %v2993 = vld [vmem:[#allocation2] sm:$0x1]
        %v2994 = vadd.f32 %v2957, 0.0001
        %v2995 = vrcp.pop %v2994
        %v2996 = vmul.f32 %v2938, %v2995
        %v2997 = vsub.f32 1.0, %v2996
        %v2998 = vstv %s2890
        %v2999 = vmul.f32 %v2998, %v2997
        %v3000 = vadd.f32 %v2993, %v2999
        %3001 = vst.msk [vmem:[#allocation2] sm:$0x1] %vm2743, %v3000
        %v3002 = vld [vmem:[#allocation3] sm:$0x1]
        %v3003 = vadd.f32 %v2992, 0.0001
        %v3004 = vrcp.pop %v3003
        %v3005 = vmul.f32 %v2973, %v3004
        %v3006 = vsub.f32 1.0, %v3005
        %v3007 = vmul.f32 %v2998, %v3006
        %v3008 = vadd.f32 %v3002, %v3007
        %3009 = vst.msk [vmem:[#allocation3] sm:$0x1] %vm2743, %v3008
        %v3010 = vld [vmem:[#allocation5] sm:$0xff]
        %v3011 = vld [vmem:[#allocation5 + $0x8] sm:$0xff]
        %vm3012 = vcmp.ge.f32.partialorder %v2893, 0.0
        %vm3013 = vcmp.ge.f32.partialorder %v2894, 0.0
        %v3014 = vsub.f32 1.0, %v2908
        %v3015 = vsub.f32 1.0, %v2910
        %v3016 = vsel %vm3012, %v2908, %v3014
        %v3017 = vsel %vm3013, %v2910, %v3015
        %v3018 = vmax.f32 %v2893, 0.0
        %v3019 = vmax.f32 %v2894, 0.0
        %v3020 = vmul.f32 %v2893, %v2840
        %v3021 = vmul.f32 %v2894, %v2843
        %v3022 = vsub.f32 %v3018, %v3020
        %v3023 = vsub.f32 %v3019, %v3021
        %v3024 = vlog2.pop %v3016
        %v3025 = vmul.f32 %v3024, 0.6931472
        %v3026 = vlog2.pop %v3017
        %v3027 = vmul.f32 %v3026, 0.6931472
        %v3028 = vsub.f32 %v3022, %v3025
        %v3029 = vsub.f32 %v3023, %v3027
        %v3030 = vmul.f32 %v2998, %v3028
        %v3031 = vmul.f32 %v2998, %v3029
        %v3032 = vadd.f32 %v3010, %v3030
        %v3033 = vadd.f32 %v3011, %v3031
        %3034 = vst.msk [vmem:[#allocation5] sm:$0xff] %vm2666, %v3032
        %3035 = vst.msk [vmem:[#allocation5 + $0x8] sm:$0xff] %vm2666, %v3033
        %v3036 = vld [vmem:[#allocation6] sm:$0xff]
        %v3037 = vld [vmem:[#allocation6 + $0x8] sm:$0xff]
        %vm3038 = vcmp.ge.f32.partialorder %v2897, 0.0
        %vm3039 = vcmp.ge.f32.partialorder %v2898, 0.0
        %v3040 = vsub.f32 1.0, %v2920
        %v3041 = vsub.f32 1.0, %v2922
        %v3042 = vsel %vm3038, %v2920, %v3040
        %v3043 = vsel %vm3039, %v2922, %v3041
        %v3044 = vmax.f32 %v2897, 0.0
        %v3045 = vmax.f32 %v2898, 0.0
        %v3046 = vmul.f32 %v2897, %v2881
        %v3047 = vmul.f32 %v2898, %v2884
        %v3048 = vsub.f32 %v3044, %v3046
        %v3049 = vsub.f32 %v3045, %v3047
        %v3050 = vlog2.pop %v3042
        %v3051 = vmul.f32 %v3050, 0.6931472
        %v3052 = vlog2.pop %v3043
        %v3053 = vmul.f32 %v3052, 0.6931472
        %v3054 = vsub.f32 %v3048, %v3051
        %v3055 = vsub.f32 %v3049, %v3053
        %v3056 = vmul.f32 %v2998, %v3054
        %v3057 = vmul.f32 %v2998, %v3055
        %v3058 = vadd.f32 %v3036, %v3056
        %v3059 = vadd.f32 %v3037, %v3057
        %3060 = vst.msk [vmem:[#allocation6] sm:$0xff] %vm2666, %v3058
        %3061 = vst.msk [vmem:[#allocation6 + $0x8] sm:$0xff] %vm2666, %v3059
        %3062 = vmatprep.subr.bf16.mxu0 0
        %3063 = vmatpush1.bf16.msra.mxu0 %v2526
        %3064 = vmatprep.subr.bf16.mxu0 0
        %3065 = vmatpush1.bf16.msra.mxu0 %v2527
        %3066 = vmatprep.subr.bf16.mxu0 0
        %3067 = vmatpush1.bf16.msra.mxu0 0
        %3068 = vmatprep.subr.bf16.mxu0 0
        %3069 = vmatpush1.bf16.msra.mxu0 0
        %3070 = vmatprep.subr.bf16.mxu0 0
        %3071 = vmatpush1.bf16.msra.mxu0 0
        %3072 = vmatprep.subr.bf16.mxu0 0
        %3073 = vmatpush1.bf16.msra.mxu0 0
        %3074 = vmatprep.subr.bf16.mxu0 0
        %3075 = vmatpush1.bf16.msra.mxu0 0
        %3076 = vmatprep.subr.bf16.mxu0 0
        %3077 = vmatpush1.bf16.msra.mxu0 0
        %3078 = vmatprep.subr.bf16.mxu0 0
        %3079 = vmatpush1.bf16.msra.mxu0 0
        %3080 = vmatprep.subr.bf16.mxu0 0
        %3081 = vmatpush1.bf16.msra.mxu0 0
        %3082 = vmatprep.subr.bf16.mxu0 0
        %3083 = vmatpush1.bf16.msra.mxu0 0
        %3084 = vmatprep.subr.bf16.mxu0 0
        %3085 = vmatpush1.bf16.msra.mxu0 0
        %3086 = vmatprep.subr.bf16.mxu0 0
        %3087 = vmatpush1.bf16.msra.mxu0 0
        %3088 = vmatprep.subr.bf16.mxu0 0
        %3089 = vmatpush1.bf16.msra.mxu0 0
        %3090 = vmatprep.subr.bf16.mxu0 0
        %3091 = vmatpush1.bf16.msra.mxu0 0
        %3092 = vmatprep.subr.bf16.mxu0 0
        %3093 = vmatpush1.bf16.msra.mxu0 0
        %3094 = vmatprep.mubr.bf16.mxu0 0
        %3095 = vmatmul.mubr.bf16.gmra.mrb[0].mxu0 %v2544
        %v3096 = vpop.f32.mrb[0].mxu0
        %v3097 = vadd.f32 0.0, %v3096
        %v3098 = vpop.f32.mrb[0].mxu0
        %v3099 = vpop.f32.mrb[0].mxu0
        %v3100 = vadd.f32 0.0, %v3099
        %v3101 = vpop.f32.mrb[0].mxu0
        %3102 = vdwg.mxu0
        %3103 = vmatprep.subr.bf16.mxu0 0
        %3104 = vmatpush1.bf16.msra.mxu0 %v2534
        %3105 = vmatprep.subr.bf16.mxu0 0
        %3106 = vmatpush1.bf16.msra.mxu0 %v2535
        %3107 = vmatprep.subr.bf16.mxu0 0
        %3108 = vmatpush1.bf16.msra.mxu0 0
        %3109 = vmatprep.subr.bf16.mxu0 0
        %3110 = vmatpush1.bf16.msra.mxu0 0
        %3111 = vmatprep.subr.bf16.mxu0 0
        %3112 = vmatpush1.bf16.msra.mxu0 0
        %3113 = vmatprep.subr.bf16.mxu0 0
        %3114 = vmatpush1.bf16.msra.mxu0 0
        %3115 = vmatprep.subr.bf16.mxu0 0
        %3116 = vmatpush1.bf16.msra.mxu0 0
        %3117 = vmatprep.subr.bf16.mxu0 0
        %3118 = vmatpush1.bf16.msra.mxu0 0
        %3119 = vmatprep.subr.bf16.mxu0 0
        %3120 = vmatpush1.bf16.msra.mxu0 0
        %3121 = vmatprep.subr.bf16.mxu0 0
        %3122 = vmatpush1.bf16.msra.mxu0 0
        %3123 = vmatprep.subr.bf16.mxu0 0
        %3124 = vmatpush1.bf16.msra.mxu0 0
        %3125 = vmatprep.subr.bf16.mxu0 0
        %3126 = vmatpush1.bf16.msra.mxu0 0
        %3127 = vmatprep.subr.bf16.mxu0 0
        %3128 = vmatpush1.bf16.msra.mxu0 0
        %3129 = vmatprep.subr.bf16.mxu0 0
        %3130 = vmatpush1.bf16.msra.mxu0 0
        %3131 = vmatprep.subr.bf16.mxu0 0
        %3132 = vmatpush1.bf16.msra.mxu0 0
        %3133 = vmatprep.subr.bf16.mxu0 0
        %3134 = vmatpush1.bf16.msra.mxu0 0
        %3135 = vmatprep.mubr.bf16.mxu0 0
        %3136 = vmatmul.mubr.bf16.gmra.mrb[0].mxu0 %v2544
        %v3137 = vpop.f32.mrb[0].mxu0
        %v3138 = vadd.f32 0.0, %v3137
        %v3139 = vpop.f32.mrb[0].mxu0
        %v3140 = vpop.f32.mrb[0].mxu0
        %v3141 = vadd.f32 0.0, %v3140
        %v3142 = vpop.f32.mrb[0].mxu0
        %3143 = vdwg.mxu0
        %s3144 = sadd.s32 %s2628, 2
        %p3145 = scmp.lt.s32.totalorder %s3144, 5
        %s3146 = scalar_select %p3145, 1, 0
        %s3147 = scvt.s32.f32 %s3146
        %v3148 = vld [vmem:[%s884] sm:$0xf]
        %v3149 = vld [vmem:[%s884 + $0x4] sm:$0xf]
        %v3150 = vunpack.c.l.bf16 %v3148
        %v3151 = vunpack.c.l.bf16 %v3149
        %v3152 = vld [vmem:[%s920] sm:$0xf]
        %v3153 = vld [vmem:[%s920 + $0x4] sm:$0xf]
        %v3154 = vunpack.c.l.bf16 %v3152
        %v3155 = vunpack.c.l.bf16 %v3153
        %v3156 = vxor.u32 %v3150, 2147483648
        %v3157 = vxor.u32 %v3151, 2147483648
        %v3158 = vmul.f32 %v3156, 1.442695
        %v3159 = vpow.pop %v3158
        %v3160 = vmul.f32 %v3157, 1.442695
        %v3161 = vpow.pop %v3160
        %v3162 = vadd.f32 %v3159, 1.0
        %v3163 = vadd.f32 %v3161, 1.0
        %v3164 = vrcp.pop %v3162
        %v3165 = vmul.f32 1.0, %v3164
        %v3166 = vrcp.pop %v3163
        %v3167 = vmul.f32 1.0, %v3166
        %v3168 = vxor.u32 %v3154, 2147483648
        %v3169 = vxor.u32 %v3155, 2147483648
        %v3170 = vmul.f32 %v3168, 1.442695
        %v3171 = vpow.pop %v3170
        %v3172 = vmul.f32 %v3169, 1.442695
        %v3173 = vpow.pop %v3172
        %v3174 = vadd.f32 %v3171, 1.0
        %v3175 = vadd.f32 %v3173, 1.0
        %v3176 = vrcp.pop %v3174
        %v3177 = vmul.f32 1.0, %v3176
        %v3178 = vrcp.pop %v3175
        %v3179 = vmul.f32 1.0, %v3178
        %v3180 = vmul.f32 %v3165, %v3097
        %v3181 = vmul.f32 %v3167, %v3100
        %v3182 = vsel %vm2666, %v3180, 0.0
        %3183 = vadd.xlane.f32.xlu0 %v3182
        %v3184 = vpop.xlane.xlu0 %3183
        %v3185 = vsel %vm2666, %v3181, 0.0
        %3186 = vadd.xlane.f32.xlu0 %v3185
        %v3187 = vpop.xlane.xlu0 %3186
        %v3188 = vadd.f32 %v3184, %v3187
        %v3189 = vrot.slane %v3188, 4
        %v3190 = vadd.f32 %v3188, %v3189
        %v3191 = vrot.slane %v3190, 2
        %v3192 = vadd.f32 %v3190, %v3191
        %v3193 = vrot.slane %v3192, 1
        %v3194 = vadd.f32 %v3192, %v3193
        %v3195 = vmul.f32 %v3194, 2.0
        %v3196 = vmul.f32 %v3165, %v3165
        %v3197 = vmul.f32 %v3167, %v3167
        %v3198 = vmul.f32 %v3097, %v3097
        %v3199 = vmul.f32 %v3100, %v3100
        %v3200 = vadd.f32 %v3196, %v3198
        %v3201 = vadd.f32 %v3197, %v3199
        %v3202 = vsel %vm2666, %v3200, 0.0
        %3203 = vadd.xlane.f32.xlu0 %v3202
        %v3204 = vpop.xlane.xlu0 %3203
        %v3205 = vsel %vm2666, %v3201, 0.0
        %3206 = vadd.xlane.f32.xlu0 %v3205
        %v3207 = vpop.xlane.xlu0 %3206
        %v3208 = vadd.f32 %v3204, %v3207
        %v3209 = vrot.slane %v3208, 4
        %v3210 = vadd.f32 %v3208, %v3209
        %v3211 = vrot.slane %v3210, 2
        %v3212 = vadd.f32 %v3210, %v3211
        %v3213 = vrot.slane %v3212, 1
        %v3214 = vadd.f32 %v3212, %v3213
        %v3215 = vmul.f32 %v3177, %v3138
        %v3216 = vmul.f32 %v3179, %v3141
        %v3217 = vsel %vm2666, %v3215, 0.0
        %3218 = vadd.xlane.f32.xlu0 %v3217
        %v3219 = vpop.xlane.xlu0 %3218
        %v3220 = vsel %vm2666, %v3216, 0.0
        %3221 = vadd.xlane.f32.xlu0 %v3220
        %v3222 = vpop.xlane.xlu0 %3221
        %v3223 = vadd.f32 %v3219, %v3222
        %v3224 = vrot.slane %v3223, 4
        %v3225 = vadd.f32 %v3223, %v3224
        %v3226 = vrot.slane %v3225, 2
        %v3227 = vadd.f32 %v3225, %v3226
        %v3228 = vrot.slane %v3227, 1
        %v3229 = vadd.f32 %v3227, %v3228
        %v3230 = vmul.f32 %v3229, 2.0
        %v3231 = vmul.f32 %v3177, %v3177
        %v3232 = vmul.f32 %v3179, %v3179
        %v3233 = vmul.f32 %v3138, %v3138
        %v3234 = vmul.f32 %v3141, %v3141
        %v3235 = vadd.f32 %v3231, %v3233
        %v3236 = vadd.f32 %v3232, %v3234
        %v3237 = vsel %vm2666, %v3235, 0.0
        %3238 = vadd.xlane.f32.xlu0 %v3237
        %v3239 = vpop.xlane.xlu0 %3238
        %v3240 = vsel %vm2666, %v3236, 0.0
        %3241 = vadd.xlane.f32.xlu0 %v3240
        %v3242 = vpop.xlane.xlu0 %3241
        %v3243 = vadd.f32 %v3239, %v3242
        %v3244 = vrot.slane %v3243, 4
        %v3245 = vadd.f32 %v3243, %v3244
        %v3246 = vrot.slane %v3245, 2
        %v3247 = vadd.f32 %v3245, %v3246
        %v3248 = vrot.slane %v3247, 1
        %v3249 = vadd.f32 %v3247, %v3248
        %v3250 = vld [vmem:[#allocation2] sm:$0x1]
        %v3251 = vadd.f32 %v3214, 0.0001
        %v3252 = vrcp.pop %v3251
        %v3253 = vmul.f32 %v3195, %v3252
        %v3254 = vsub.f32 1.0, %v3253
        %v3255 = vstv %s3147
        %v3256 = vmul.f32 %v3255, %v3254
        %v3257 = vadd.f32 %v3250, %v3256
        %3258 = vst.msk [vmem:[#allocation2] sm:$0x1] %vm2743, %v3257
        %v3259 = vld [vmem:[#allocation3] sm:$0x1]
        %v3260 = vadd.f32 %v3249, 0.0001
        %v3261 = vrcp.pop %v3260
        %v3262 = vmul.f32 %v3230, %v3261
        %v3263 = vsub.f32 1.0, %v3262
        %v3264 = vmul.f32 %v3255, %v3263
        %v3265 = vadd.f32 %v3259, %v3264
        %3266 = vst.msk [vmem:[#allocation3] sm:$0x1] %vm2743, %v3265
        %v3267 = vld [vmem:[#allocation5] sm:$0xff]
        %v3268 = vld [vmem:[#allocation5 + $0x8] sm:$0xff]
        %vm3269 = vcmp.ge.f32.partialorder %v3150, 0.0
        %vm3270 = vcmp.ge.f32.partialorder %v3151, 0.0
        %v3271 = vsub.f32 1.0, %v3165
        %v3272 = vsub.f32 1.0, %v3167
        %v3273 = vsel %vm3269, %v3165, %v3271
        %v3274 = vsel %vm3270, %v3167, %v3272
        %v3275 = vmax.f32 %v3150, 0.0
        %v3276 = vmax.f32 %v3151, 0.0
        %v3277 = vmul.f32 %v3150, %v3097
        %v3278 = vmul.f32 %v3151, %v3100
        %v3279 = vsub.f32 %v3275, %v3277
        %v3280 = vsub.f32 %v3276, %v3278
        %v3281 = vlog2.pop %v3273
        %v3282 = vmul.f32 %v3281, 0.6931472
        %v3283 = vlog2.pop %v3274
        %v3284 = vmul.f32 %v3283, 0.6931472
        %v3285 = vsub.f32 %v3279, %v3282
        %v3286 = vsub.f32 %v3280, %v3284
        %v3287 = vmul.f32 %v3255, %v3285
        %v3288 = vmul.f32 %v3255, %v3286
        %v3289 = vadd.f32 %v3267, %v3287
        %v3290 = vadd.f32 %v3268, %v3288
        %3291 = vst.msk [vmem:[#allocation5] sm:$0xff] %vm2666, %v3289
        %3292 = vst.msk [vmem:[#allocation5 + $0x8] sm:$0xff] %vm2666, %v3290
        %v3293 = vld [vmem:[#allocation6] sm:$0xff]
        %v3294 = vld [vmem:[#allocation6 + $0x8] sm:$0xff]
        %vm3295 = vcmp.ge.f32.partialorder %v3154, 0.0
        %vm3296 = vcmp.ge.f32.partialorder %v3155, 0.0
        %v3297 = vsub.f32 1.0, %v3177
        %v3298 = vsub.f32 1.0, %v3179
        %v3299 = vsel %vm3295, %v3177, %v3297
        %v3300 = vsel %vm3296, %v3179, %v3298
        %v3301 = vmax.f32 %v3154, 0.0
        %v3302 = vmax.f32 %v3155, 0.0
        %v3303 = vmul.f32 %v3154, %v3138
        %v3304 = vmul.f32 %v3155, %v3141
        %v3305 = vsub.f32 %v3301, %v3303
        %v3306 = vsub.f32 %v3302, %v3304
        %v3307 = vlog2.pop %v3299
        %v3308 = vmul.f32 %v3307, 0.6931472
        %v3309 = vlog2.pop %v3300
        %v3310 = vmul.f32 %v3309, 0.6931472
        %v3311 = vsub.f32 %v3305, %v3308
        %v3312 = vsub.f32 %v3306, %v3310
        %v3313 = vmul.f32 %v3255, %v3311
        %v3314 = vmul.f32 %v3255, %v3312
        %v3315 = vadd.f32 %v3293, %v3313
        %v3316 = vadd.f32 %v3294, %v3314
        %3317 = vst.msk [vmem:[#allocation6] sm:$0xff] %vm2666, %v3315
        %3318 = vst.msk [vmem:[#allocation6 + $0x8] sm:$0xff] %vm2666, %v3316
        %3319 = vmatprep.subr.bf16.mxu0 0
        %3320 = vmatpush1.bf16.msra.mxu0 %v2528
        %3321 = vmatprep.subr.bf16.mxu0 0
        %3322 = vmatpush1.bf16.msra.mxu0 %v2529
        %3323 = vmatprep.subr.bf16.mxu0 0
        %3324 = vmatpush1.bf16.msra.mxu0 0
        %3325 = vmatprep.subr.bf16.mxu0 0
        %3326 = vmatpush1.bf16.msra.mxu0 0
        %3327 = vmatprep.subr.bf16.mxu0 0
        %3328 = vmatpush1.bf16.msra.mxu0 0
        %3329 = vmatprep.subr.bf16.mxu0 0
        %3330 = vmatpush1.bf16.msra.mxu0 0
        %3331 = vmatprep.subr.bf16.mxu0 0
        %3332 = vmatpush1.bf16.msra.mxu0 0
        %3333 = vmatprep.subr.bf16.mxu0 0
        %3334 = vmatpush1.bf16.msra.mxu0 0
        %3335 = vmatprep.subr.bf16.mxu0 0
        %3336 = vmatpush1.bf16.msra.mxu0 0
        %3337 = vmatprep.subr.bf16.mxu0 0
        %3338 = vmatpush1.bf16.msra.mxu0 0
        %3339 = vmatprep.subr.bf16.mxu0 0
        %3340 = vmatpush1.bf16.msra.mxu0 0
        %3341 = vmatprep.subr.bf16.mxu0 0
        %3342 = vmatpush1.bf16.msra.mxu0 0
        %3343 = vmatprep.subr.bf16.mxu0 0
        %3344 = vmatpush1.bf16.msra.mxu0 0
        %3345 = vmatprep.subr.bf16.mxu0 0
        %3346 = vmatpush1.bf16.msra.mxu0 0
        %3347 = vmatprep.subr.bf16.mxu0 0
        %3348 = vmatpush1.bf16.msra.mxu0 0
        %3349 = vmatprep.subr.bf16.mxu0 0
        %3350 = vmatpush1.bf16.msra.mxu0 0
        %3351 = vmatprep.mubr.bf16.mxu0 0
        %3352 = vmatmul.mubr.bf16.gmra.mrb[0].mxu0 %v2544
        %v3353 = vpop.f32.mrb[0].mxu0
        %v3354 = vadd.f32 0.0, %v3353
        %v3355 = vpop.f32.mrb[0].mxu0
        %v3356 = vpop.f32.mrb[0].mxu0
        %v3357 = vadd.f32 0.0, %v3356
        %v3358 = vpop.f32.mrb[0].mxu0
        %3359 = vdwg.mxu0
        %3360 = vmatprep.subr.bf16.mxu0 0
        %3361 = vmatpush1.bf16.msra.mxu0 %v2536
        %3362 = vmatprep.subr.bf16.mxu0 0
        %3363 = vmatpush1.bf16.msra.mxu0 %v2537
        %3364 = vmatprep.subr.bf16.mxu0 0
        %3365 = vmatpush1.bf16.msra.mxu0 0
        %3366 = vmatprep.subr.bf16.mxu0 0
        %3367 = vmatpush1.bf16.msra.mxu0 0
        %3368 = vmatprep.subr.bf16.mxu0 0
        %3369 = vmatpush1.bf16.msra.mxu0 0
        %3370 = vmatprep.subr.bf16.mxu0 0
        %3371 = vmatpush1.bf16.msra.mxu0 0
        %3372 = vmatprep.subr.bf16.mxu0 0
        %3373 = vmatpush1.bf16.msra.mxu0 0
        %3374 = vmatprep.subr.bf16.mxu0 0
        %3375 = vmatpush1.bf16.msra.mxu0 0
        %3376 = vmatprep.subr.bf16.mxu0 0
        %3377 = vmatpush1.bf16.msra.mxu0 0
        %3378 = vmatprep.subr.bf16.mxu0 0
        %3379 = vmatpush1.bf16.msra.mxu0 0
        %3380 = vmatprep.subr.bf16.mxu0 0
        %3381 = vmatpush1.bf16.msra.mxu0 0
        %3382 = vmatprep.subr.bf16.mxu0 0
        %3383 = vmatpush1.bf16.msra.mxu0 0
        %3384 = vmatprep.subr.bf16.mxu0 0
        %3385 = vmatpush1.bf16.msra.mxu0 0
        %3386 = vmatprep.subr.bf16.mxu0 0
        %3387 = vmatpush1.bf16.msra.mxu0 0
        %3388 = vmatprep.subr.bf16.mxu0 0
        %3389 = vmatpush1.bf16.msra.mxu0 0
        %3390 = vmatprep.subr.bf16.mxu0 0
        %3391 = vmatpush1.bf16.msra.mxu0 0
        %3392 = vmatprep.mubr.bf16.mxu0 0
        %3393 = vmatmul.mubr.bf16.gmra.mrb[0].mxu0 %v2544
        %v3394 = vpop.f32.mrb[0].mxu0
        %v3395 = vadd.f32 0.0, %v3394
        %v3396 = vpop.f32.mrb[0].mxu0
        %v3397 = vpop.f32.mrb[0].mxu0
        %v3398 = vadd.f32 0.0, %v3397
        %v3399 = vpop.f32.mrb[0].mxu0
        %3400 = vdwg.mxu0
        %s3401 = sadd.s32 %s2628, 3
        %p3402 = scmp.lt.s32.totalorder %s3401, 5
        %s3403 = scalar_select %p3402, 1, 0
        %s3404 = scvt.s32.f32 %s3403
        %v3405 = vld [vmem:[%s893] sm:$0xf]
        %v3406 = vld [vmem:[%s893 + $0x4] sm:$0xf]
        %v3407 = vunpack.c.l.bf16 %v3405
        %v3408 = vunpack.c.l.bf16 %v3406
        %v3409 = vld [vmem:[%s929] sm:$0xf]
        %v3410 = vld [vmem:[%s929 + $0x4] sm:$0xf]
        %v3411 = vunpack.c.l.bf16 %v3409
        %v3412 = vunpack.c.l.bf16 %v3410
        %v3413 = vxor.u32 %v3407, 2147483648
        %v3414 = vxor.u32 %v3408, 2147483648
        %v3415 = vmul.f32 %v3413, 1.442695
        %v3416 = vpow.pop %v3415
        %v3417 = vmul.f32 %v3414, 1.442695
        %v3418 = vpow.pop %v3417
        %v3419 = vadd.f32 %v3416, 1.0
        %v3420 = vadd.f32 %v3418, 1.0
        %v3421 = vrcp.pop %v3419
        %v3422 = vmul.f32 1.0, %v3421
        %v3423 = vrcp.pop %v3420
        %v3424 = vmul.f32 1.0, %v3423
        %v3425 = vxor.u32 %v3411, 2147483648
        %v3426 = vxor.u32 %v3412, 2147483648
        %v3427 = vmul.f32 %v3425, 1.442695
        %v3428 = vpow.pop %v3427
        %v3429 = vmul.f32 %v3426, 1.442695
        %v3430 = vpow.pop %v3429
        %v3431 = vadd.f32 %v3428, 1.0
        %v3432 = vadd.f32 %v3430, 1.0
        %v3433 = vrcp.pop %v3431
        %v3434 = vmul.f32 1.0, %v3433
        %v3435 = vrcp.pop %v3432
        %v3436 = vmul.f32 1.0, %v3435
        %v3437 = vmul.f32 %v3422, %v3354
        %v3438 = vmul.f32 %v3424, %v3357
        %v3439 = vsel %vm2666, %v3437, 0.0
        %3440 = vadd.xlane.f32.xlu0 %v3439
        %v3441 = vpop.xlane.xlu0 %3440
        %v3442 = vsel %vm2666, %v3438, 0.0
        %3443 = vadd.xlane.f32.xlu0 %v3442
        %v3444 = vpop.xlane.xlu0 %3443
        %v3445 = vadd.f32 %v3441, %v3444
        %v3446 = vrot.slane %v3445, 4
        %v3447 = vadd.f32 %v3445, %v3446
        %v3448 = vrot.slane %v3447, 2
        %v3449 = vadd.f32 %v3447, %v3448
        %v3450 = vrot.slane %v3449, 1
        %v3451 = vadd.f32 %v3449, %v3450
        %v3452 = vmul.f32 %v3451, 2.0
        %v3453 = vmul.f32 %v3422, %v3422
        %v3454 = vmul.f32 %v3424, %v3424
        %v3455 = vmul.f32 %v3354, %v3354
        %v3456 = vmul.f32 %v3357, %v3357
        %v3457 = vadd.f32 %v3453, %v3455
        %v3458 = vadd.f32 %v3454, %v3456
        %v3459 = vsel %vm2666, %v3457, 0.0
        %3460 = vadd.xlane.f32.xlu0 %v3459
        %v3461 = vpop.xlane.xlu0 %3460
        %v3462 = vsel %vm2666, %v3458, 0.0
        %3463 = vadd.xlane.f32.xlu0 %v3462
        %v3464 = vpop.xlane.xlu0 %3463
        %v3465 = vadd.f32 %v3461, %v3464
        %v3466 = vrot.slane %v3465, 4
        %v3467 = vadd.f32 %v3465, %v3466
        %v3468 = vrot.slane %v3467, 2
        %v3469 = vadd.f32 %v3467, %v3468
        %v3470 = vrot.slane %v3469, 1
        %v3471 = vadd.f32 %v3469, %v3470
        %v3472 = vmul.f32 %v3434, %v3395
        %v3473 = vmul.f32 %v3436, %v3398
        %v3474 = vsel %vm2666, %v3472, 0.0
        %3475 = vadd.xlane.f32.xlu0 %v3474
        %v3476 = vpop.xlane.xlu0 %3475
        %v3477 = vsel %vm2666, %v3473, 0.0
        %3478 = vadd.xlane.f32.xlu0 %v3477
        %v3479 = vpop.xlane.xlu0 %3478
        %v3480 = vadd.f32 %v3476, %v3479
        %v3481 = vrot.slane %v3480, 4
        %v3482 = vadd.f32 %v3480, %v3481
        %v3483 = vrot.slane %v3482, 2
        %v3484 = vadd.f32 %v3482, %v3483
        %v3485 = vrot.slane %v3484, 1
        %v3486 = vadd.f32 %v3484, %v3485
        %v3487 = vmul.f32 %v3486, 2.0
        %v3488 = vmul.f32 %v3434, %v3434
        %v3489 = vmul.f32 %v3436, %v3436
        %v3490 = vmul.f32 %v3395, %v3395
        %v3491 = vmul.f32 %v3398, %v3398
        %v3492 = vadd.f32 %v3488, %v3490
        %v3493 = vadd.f32 %v3489, %v3491
        %v3494 = vsel %vm2666, %v3492, 0.0
        %3495 = vadd.xlane.f32.xlu0 %v3494
        %v3496 = vpop.xlane.xlu0 %3495
        %v3497 = vsel %vm2666, %v3493, 0.0
        %3498 = vadd.xlane.f32.xlu0 %v3497
        %v3499 = vpop.xlane.xlu0 %3498
        %v3500 = vadd.f32 %v3496, %v3499
        %v3501 = vrot.slane %v3500, 4
        %v3502 = vadd.f32 %v3500, %v3501
        %v3503 = vrot.slane %v3502, 2
        %v3504 = vadd.f32 %v3502, %v3503
        %v3505 = vrot.slane %v3504, 1
        %v3506 = vadd.f32 %v3504, %v3505
        %v3507 = vld [vmem:[#allocation2] sm:$0x1]
        %v3508 = vadd.f32 %v3471, 0.0001
        %v3509 = vrcp.pop %v3508
        %v3510 = vmul.f32 %v3452, %v3509
        %v3511 = vsub.f32 1.0, %v3510
        %v3512 = vstv %s3404
        %v3513 = vmul.f32 %v3512, %v3511
        %v3514 = vadd.f32 %v3507, %v3513
        %3515 = vst.msk [vmem:[#allocation2] sm:$0x1] %vm2743, %v3514
        %v3516 = vld [vmem:[#allocation3] sm:$0x1]
        %v3517 = vadd.f32 %v3506, 0.0001
        %v3518 = vrcp.pop %v3517
        %v3519 = vmul.f32 %v3487, %v3518
        %v3520 = vsub.f32 1.0, %v3519
        %v3521 = vmul.f32 %v3512, %v3520
        %v3522 = vadd.f32 %v3516, %v3521
        %3523 = vst.msk [vmem:[#allocation3] sm:$0x1] %vm2743, %v3522
        %v3524 = vld [vmem:[#allocation5] sm:$0xff]
        %v3525 = vld [vmem:[#allocation5 + $0x8] sm:$0xff]
        %vm3526 = vcmp.ge.f32.partialorder %v3407, 0.0
        %vm3527 = vcmp.ge.f32.partialorder %v3408, 0.0
        %v3528 = vsub.f32 1.0, %v3422
        %v3529 = vsub.f32 1.0, %v3424
        %v3530 = vsel %vm3526, %v3422, %v3528
        %v3531 = vsel %vm3527, %v3424, %v3529
        %v3532 = vmax.f32 %v3407, 0.0
        %v3533 = vmax.f32 %v3408, 0.0
        %v3534 = vmul.f32 %v3407, %v3354
        %v3535 = vmul.f32 %v3408, %v3357
        %v3536 = vsub.f32 %v3532, %v3534
        %v3537 = vsub.f32 %v3533, %v3535
        %v3538 = vlog2.pop %v3530
        %v3539 = vmul.f32 %v3538, 0.6931472
        %v3540 = vlog2.pop %v3531
        %v3541 = vmul.f32 %v3540, 0.6931472
        %v3542 = vsub.f32 %v3536, %v3539
        %v3543 = vsub.f32 %v3537, %v3541
        %v3544 = vmul.f32 %v3512, %v3542
        %v3545 = vmul.f32 %v3512, %v3543
        %v3546 = vadd.f32 %v3524, %v3544
        %v3547 = vadd.f32 %v3525, %v3545
        %3548 = vst.msk [vmem:[#allocation5] sm:$0xff] %vm2666, %v3546
        %3549 = vst.msk [vmem:[#allocation5 + $0x8] sm:$0xff] %vm2666, %v3547
        %v3550 = vld [vmem:[#allocation6] sm:$0xff]
        %v3551 = vld [vmem:[#allocation6 + $0x8] sm:$0xff]
        %vm3552 = vcmp.ge.f32.partialorder %v3411, 0.0
        %vm3553 = vcmp.ge.f32.partialorder %v3412, 0.0
        %v3554 = vsub.f32 1.0, %v3434
        %v3555 = vsub.f32 1.0, %v3436
        %v3556 = vsel %vm3552, %v3434, %v3554
        %v3557 = vsel %vm3553, %v3436, %v3555
        %v3558 = vmax.f32 %v3411, 0.0
        %v3559 = vmax.f32 %v3412, 0.0
        %v3560 = vmul.f32 %v3411, %v3395
        %v3561 = vmul.f32 %v3412, %v3398
        %v3562 = vsub.f32 %v3558, %v3560
        %v3563 = vsub.f32 %v3559, %v3561
        %v3564 = vlog2.pop %v3556
        %v3565 = vmul.f32 %v3564, 0.6931472
        %v3566 = vlog2.pop %v3557
        %v3567 = vmul.f32 %v3566, 0.6931472
        %v3568 = vsub.f32 %v3562, %v3565
        %v3569 = vsub.f32 %v3563, %v3567
        %v3570 = vmul.f32 %v3512, %v3568
        %v3571 = vmul.f32 %v3512, %v3569
        %v3572 = vadd.f32 %v3550, %v3570
        %v3573 = vadd.f32 %v3551, %v3571
        %3574 = vst.msk [vmem:[#allocation6] sm:$0xff] %vm2666, %v3572
        %3575 = vst.msk [vmem:[#allocation6 + $0x8] sm:$0xff] %vm2666, %v3573
        %p3576 = scmp.eq.s32.totalorder %s61, 1
        // Predicated region
        $region137: #{tpu_custom_call.1} parent=83 // pred_check
          %p3577 = pneg %p3576
        $region138: #{tpu_custom_call.1} parent=83 // pred_check_branch
          %3579 = sbr.rel (%p3577) target = $region140
        $region139: #{tpu_custom_call.1} parent=83 // pred_region
          %v3580 = vld [vmem:[#allocation2] sm:$0x1]
          %s3581 = vtos %v3580
          %s3582 = smul.f32 %s3581, 0.2
          %v3583 = vld [vmem:[#allocation3] sm:$0x1]
          %s3584 = vtos %v3583
          %s3585 = smul.f32 %s3584, 0.2
          %v3586 = vld [vmem:[#allocation5] sm:$0xff]
          %v3587 = vld [vmem:[#allocation5 + $0x8] sm:$0xff]
          %v3588 = vsel %vm2666, %v3586, 0.0
          %3589 = vadd.xlane.f32.xlu0 %v3588
          %v3590 = vpop.xlane.xlu0 %3589
          %v3591 = vsel %vm2666, %v3587, 0.0
          %3592 = vadd.xlane.f32.xlu0 %v3591
          %v3593 = vpop.xlane.xlu0 %3592
          %v3594 = vadd.f32 %v3590, %v3593
          %v3595 = vrot.slane %v3594, 4
          %v3596 = vadd.f32 %v3594, %v3595
          %v3597 = vrot.slane %v3596, 2
          %v3598 = vadd.f32 %v3596, %v3597
          %v3599 = vrot.slane %v3598, 1
          %v3600 = vadd.f32 %v3598, %v3599
          %s3601 = vtos %v3600
          %s3602 = smul.f32 %s3601, 0.00078125
          %v3603 = vld [vmem:[#allocation6] sm:$0xff]
          %v3604 = vld [vmem:[#allocation6 + $0x8] sm:$0xff]
          %v3605 = vsel %vm2666, %v3603, 0.0
          %3606 = vadd.xlane.f32.xlu0 %v3605
          %v3607 = vpop.xlane.xlu0 %3606
          %v3608 = vsel %vm2666, %v3604, 0.0
          %3609 = vadd.xlane.f32.xlu0 %v3608
          %v3610 = vpop.xlane.xlu0 %3609
          %v3611 = vadd.f32 %v3607, %v3610
          %v3612 = vrot.slane %v3611, 4
          %v3613 = vadd.f32 %v3611, %v3612
          %v3614 = vrot.slane %v3613, 2
          %v3615 = vadd.f32 %v3613, %v3614
          %v3616 = vrot.slane %v3615, 1
          %v3617 = vadd.f32 %v3615, %v3616
          %s3618 = vtos %v3617
          %s3619 = smul.f32 %s3618, 0.00078125
          %v3620 = vld [vmem:[#allocation4] sm:$0x1]
          %s3621 = vtos %v3620
          %vm3622 = vcmp.eq.s32.totalorder %v1240, 0
          %vm3623 = vcmp.eq.s32.totalorder %v1449, 0
          %vm3624 = vmand %vm3622, %vm3623
          %v3625 = vstv %s3582
          %v3626 = vsel %vm3624, %v3625, 0.0
          %vm3627 = vcmp.eq.s32.totalorder %v1449, 1
          %vm3628 = vmand %vm3622, %vm3627
          %v3629 = vstv %s3602
          %v3630 = vsel %vm3628, %v3629, 0.0
          %v3631 = vadd.f32 %v3626, %v3630
          %vm3632 = vcmp.eq.s32.totalorder %v1449, 2
          %vm3633 = vmand %vm3622, %vm3632
          %v3634 = vstv %s3585
          %v3635 = vsel %vm3633, %v3634, 0.0
          %v3636 = vadd.f32 %v3631, %v3635
          %vm3637 = vcmp.eq.s32.totalorder %v1449, 3
          %vm3638 = vmand %vm3622, %vm3637
          %v3639 = vstv %s3619
          %v3640 = vsel %vm3638, %v3639, 0.0
          %v3641 = vadd.f32 %v3636, %v3640
          %vm3642 = vcmp.eq.s32.totalorder %v1449, 4
          %vm3643 = vmand %vm3622, %vm3642
          %v3644 = vstv %s3621
          %v3645 = vsel %vm3643, %v3644, 0.0
          %v3646 = vadd.f32 %v3641, %v3645
          %3647 = vst [vmem:[#allocation30] sm:$0xff] %v3646
        $region140: #{tpu_custom_call.1} parent=83 // pred_fallthru
          _
        // Predicated region
        $region141: #{tpu_custom_call.1} parent=83 // pred_check
          %p3648 = pneg %p536
        $region142: #{tpu_custom_call.1} parent=83 // pred_check_branch
          %3650 = sbr.rel (%p3648) target = $region144
        $region143: #{tpu_custom_call.1} parent=83 // pred_region
          %s3652 = ssub.s32 128, 128
          %3653 = vsyncadd [#allocation12], %s3652
          %s3655 = sshll.u32 [#allocation30], 4
          %s3656 = int_to_ptr.vmem [resolvable:$true] %s3655
          %3658 = dma.vmem_to_hbm [thread:$0]  %s3656, 128, %s18, [#allocation12]
        $region144: #{tpu_custom_call.1} parent=83 // pred_fallthru
          _
        // Predicated region
        $region145: #{tpu_custom_call.1} parent=83 // pred_check
          %p3659 = pneg %p536
        $region146: #{tpu_custom_call.1} parent=83 // pred_check_branch
          %3661 = sbr.rel (%p3659) target = $region148
        $region147: #{tpu_custom_call.1} parent=83 // pred_region
          %3662 = dma.done [#allocation12], 128
        $region148: #{tpu_custom_call.1} parent=83 // pred_fallthru
          _
      $region84: #{tpu_custom_call.1} parent=5 // pred_fallthru
        _
      %p3663 = scmp.le.s32.totalorder 2, %s56
      // Predicated region
      $region149: #{tpu_custom_call.1} parent=5 // pred_check
        %p3664 = pneg %p3663
      $region150: #{tpu_custom_call.1} parent=5 // pred_check_branch
        %3666 = sbr.rel (%p3664) target = $region152
      $region151: #{tpu_custom_call.1} parent=5 // pred_region
        %s3667 = ssub.s32 %s56, 2
      $region152: #{tpu_custom_call.1} parent=5 // pred_fallthru
        _
    $region6: #{tpu_custom_call.1} parent=1 // loop_footer
      %s60 = sadd.s32 1, %s56
    $region7: #{tpu_custom_call.1} parent=1 // loop_footer_branch
      %55 = sbr.rel target = $region3
    $region8: #{tpu_custom_call.1} parent=1 // loop_exit
      _
    %3668 = vsyncpa [#allocation11], 1
    %s3669 = scalar_lea.sflag [#allocation11], 1
    %3670 = vsyncpa %s3669, 1
    %3671 = vsyncpa [#allocation14], 1
    %s3672 = scalar_lea.sflag [#allocation14], 1
    %3673 = vsyncpa %s3672, 1
    %3674 = vsyncpa [#allocation17], 1
    %s3675 = scalar_lea.sflag [#allocation17], 1
    %3676 = vsyncpa %s3675, 1
    %3677 = vsyncpa [#allocation20], 1
    %s3678 = scalar_lea.sflag [#allocation20], 1
    %3679 = vsyncpa %s3678, 1
    %3680 = vsyncpa [#allocation23], 1
    %s3681 = scalar_lea.sflag [#allocation23], 1
    %3682 = vsyncpa %s3681, 1
    %3683 = vsyncpa [#allocation26], 1
    %s3684 = scalar_lea.sflag [#allocation26], 1
    %3685 = vsyncpa %s3684, 1
    %3686 = vsyncpa [#allocation29], 1
    %s3687 = scalar_lea.sflag [#allocation29], 1
    %3688 = vsyncpa %s3687, 1
    %3689 = vsyncpa [#allocation12], 1
    %s3690 = scalar_lea.sflag [#allocation12], 1
    %3691 = vsyncpa %s3690, 1

</llo_original>
